<compile_context>
chip_gen: v5e
topology: v5e:2x2
jax: 0.10.0
libtpu: 0.0.40
codegen_flags: <defaults>
</compile_context>

<pallas_src>
import functools

import jax
import jax.numpy as jnp
from jax.experimental import pallas as pl
from jax.experimental.pallas import tpu as pltpu


def _downblock_kernel(x_ref, t_ref, mask_ref,
                      gm1_ref, g1w_ref, g1b_ref, w1_ref, b1_ref,
                      wt_ref, bt_ref,
                      gm2_ref, g2w_ref, g2b_ref, w2_ref, b2_ref,
                      *rest,
                      H, W, n_heads, d_k, has_attn, shortcut_conv, mxu_dtype):
    """One grid step == one batch element; everything channel-major (C, S=H*W)."""
    f32 = jnp.float32
    cdt = mxu_dtype
    S = H * W

    rest = list(rest)
    o_ref = rest.pop()
    pos = 0
    if shortcut_conv:
        ws_ref, bs_ref = rest[0], rest[1]
        pos = 2
    if has_attn:
        wp_ref, bp_ref, wo_ref, bo_ref = rest[pos:pos + 4]

    x = x_ref[0]                                            # (C_in, S) f32

    def group_norm(v, gm_ref, w_ref, b_ref):
        # PyTorch GroupNorm (biased variance, eps=1e-5).  gm is a (C, C) matrix with
        # 1/(C_per_group * S) in same-group blocks, so gm @ [row-sums] broadcasts the
        # per-group mean / E[x^2] back to every channel without awkward reshapes.
        s1 = jnp.sum(v, axis=1, keepdims=True)              # (C, 1)
        s2 = jnp.sum(v * v, axis=1, keepdims=True)          # (C, 1)
        g = jnp.dot(gm_ref[...], jnp.concatenate([s1, s2], axis=1),
                    preferred_element_type=f32)             # (C, 2)
        mean = g[:, 0:1]
        var = g[:, 1:2] - mean * mean
        return (v - mean) * jax.lax.rsqrt(var + 1e-5) * w_ref[...] + b_ref[...]

    def silu(v):
        return v * (1.0 / (1.0 + jnp.exp(-v)))

    def conv3x3(v, w_ref_):
        # 3x3 "same" conv: 9 shifted+masked copies of the (C, S) activation stacked
        # along channels -> a single (C_out, 9C) x (9C, S) MXU matmul.
        C = v.shape[0]
        taps = []
        ti = 0
        for dy in (-1, 0, 1):
            for dx in (-1, 0, 1):
                k = dy * W + dx
                if k == 0:
                    sh = v
                elif k > 0:
                    sh = jnp.concatenate(
                        [v[:, k:], jnp.zeros((C, k), v.dtype)], axis=1)
                else:
                    sh = jnp.concatenate(
                        [jnp.zeros((C, -k), v.dtype), v[:, :S + k]], axis=1)
                taps.append(sh * mask_ref[ti].reshape(1, S))
                ti += 1
        stack = jnp.concatenate(taps, axis=0).astype(cdt)   # (9C, S)
        return jnp.dot(w_ref_[...], stack, preferred_element_type=f32)

    # ------------------------------ ResidualBlock ------------------------------
    h1 = silu(group_norm(x, gm1_ref, g1w_ref, g1b_ref))                       # (C_in, S)
    temb = jnp.sum(wt_ref[...] * t_ref[0], axis=1, keepdims=True) + bt_ref[...]  # (C_out, 1)
    h = conv3x3(h1, w1_ref) + b1_ref[...] + temb                              # (C_out, S)
    h2 = silu(group_norm(h, gm2_ref, g2w_ref, g2b_ref))
    h = conv3x3(h2, w2_ref) + b2_ref[...]
    if shortcut_conv:
        h = h + jnp.dot(ws_ref[...], x.astype(cdt),
                        preferred_element_type=f32) + bs_ref[...]
    else:
        h = h + x

    if not has_attn:
        o_ref[0] = h
        return

    # ------------------------------ AttentionBlock -----------------------------
    # NOTE: self.norm exists in the PyTorch module but forward() never applies it,
    # so it is intentionally not applied here.
    HD = n_heads * d_k
    hc = h.astype(cdt)
    # [Q | K | V] contiguous slabs; 1/sqrt(d_k) already folded into the Q rows/bias.
    qkv = jnp.dot(wp_ref[...], hc, preferred_element_type=f32) + bp_ref[...]  # (3HD, S)

    sT = []   # per-head scores in (j, i) orientation -- the softmax is over HEADS, so
              # the (i, j) orientation is irrelevant for the softmax itself.
    vh = []   # per-head V, (Dk, S_j)
    for a in range(n_heads):
        q_a = qkv[a * d_k:(a + 1) * d_k, :]                       # (Dk, S_i)
        k_a = qkv[HD + a * d_k:HD + (a + 1) * d_k, :]             # (Dk, S_j)
        v_a = qkv[2 * HD + a * d_k:2 * HD + (a + 1) * d_k, :]     # (Dk, S_j)
        sT.append(jnp.dot(k_a.T.astype(cdt), q_a.astype(cdt),
                          preferred_element_type=f32))            # (S_j, S_i)
        vh.append(v_a.astype(cdt))

    # softmax over the HEADS axis (dim=-1 of attn[b, i, j, h]) -- exact semantics.
    m = sT[0]
    for a in range(1, n_heads):
        m = jnp.maximum(m, sT[a])
    ex = [jnp.exp(s - m) for s in sT]
    den = ex[0]
    for a in range(1, n_heads):
        den = den + ex[a]
    inv = pl.reciprocal(den, approx=True)

    # Per-head PV, accumulated directly into the output projection (no concatenate).
    attn_out = jnp.zeros_like(h)
    for a in range(n_heads):
        pT = (ex[a] * inv).astype(cdt)                                # (S_j, S_i)
        r = jnp.dot(vh[a], pT, preferred_element_type=f32)            # (Dk, S_i)
        attn_out = attn_out + jnp.dot(wo_ref[:, a * d_k:(a + 1) * d_k],
                                      r.astype(cdt),
                                      preferred_element_type=f32)     # (C_out, S_i)

    o_ref[0] = attn_out + bo_ref[...] + h


def downblock_pallas(x, t, params, *, n_groups, n_heads=1, d_k=None,
                     has_attn=True, mxu_dtype=jnp.float32):
    """DownBlock forward.  x: (B, C_in, H, W) f32, t: (B, time_channels) f32.
    params follow PyTorch tensor conventions (see __main__)."""
    f32 = jnp.float32
    B, C_in, H, W = x.shape
    S = H * W
    C_out = params["conv1_w"].shape[0]
    Tc = t.shape[1]
    if d_k is None:
        d_k = C_out                 # AttentionBlock default: d_k = n_channels
    HD = n_heads * d_k
    shortcut_conv = (C_in != C_out)

    # NCHW -> (B, C, S): free reshape, no HBM transpose (the kernel writes the same
    # channel-major layout back, so only a free reshape is needed on the output too).
    x_cs = x.reshape(B, C_in, S).astype(f32)
    t3 = t.reshape(B, 1, Tc).astype(f32)

    # 3x3 conv validity masks (9, 1, S), one per tap, shared by both convs.
    ys = jnp.arange(S, dtype=jnp.int32) // W
    xs = jnp.arange(S, dtype=jnp.int32) % W
    masks = []
    for dy in (-1, 0, 1):
        for dx in (-1, 0, 1):
            masks.append((ys + dy >= 0) & (ys + dy < H) &
                         (xs + dx >= 0) & (xs + dx < W))
    mask_arr = jnp.stack(masks).astype(f32).reshape(9, 1, S)

    def gmat(C):
        Cg = C // n_groups
        return (jnp.kron(jnp.eye(n_groups, dtype=f32), jnp.ones((Cg, Cg), f32))
                / float(Cg * S))

    def col(v):
        return jnp.asarray(v, f32).reshape(-1, 1)

    def conv_stack(w):              # (Co, Ci, 3, 3) -> (Co, 9*Ci), tap-major columns
        Co, Ci = w.shape[0], w.shape[1]
        return jnp.transpose(w, (0, 2, 3, 1)).reshape(Co, 9 * Ci).astype(mxu_dtype)

    inputs = [
        x_cs, t3, mask_arr,
        gmat(C_in), col(params["gn1_w"]), col(params["gn1_b"]),
        conv_stack(params["conv1_w"]), col(params["conv1_b"]),
        jnp.asarray(params["time_w"], f32), col(params["time_b"]),
        gmat(C_out), col(params["gn2_w"]), col(params["gn2_b"]),
        conv_stack(params["conv2_w"]), col(params["conv2_b"]),
    ]
    in_specs = [
        pl.BlockSpec((1, C_in, S), lambda b: (b, 0, 0)),
        pl.BlockSpec((1, 1, Tc), lambda b: (b, 0, 0)),
        pl.BlockSpec((9, 1, S), lambda b: (0, 0, 0)),
        pl.BlockSpec((C_in, C_in), lambda b: (0, 0)),
        pl.BlockSpec((C_in, 1), lambda b: (0, 0)),
        pl.BlockSpec((C_in, 1), lambda b: (0, 0)),
        pl.BlockSpec((C_out, 9 * C_in), lambda b: (0, 0)),
        pl.BlockSpec((C_out, 1), lambda b: (0, 0)),
        pl.BlockSpec((C_out, Tc), lambda b: (0, 0)),
        pl.BlockSpec((C_out, 1), lambda b: (0, 0)),
        pl.BlockSpec((C_out, C_out), lambda b: (0, 0)),
        pl.BlockSpec((C_out, 1), lambda b: (0, 0)),
        pl.BlockSpec((C_out, 1), lambda b: (0, 0)),
        pl.BlockSpec((C_out, 9 * C_out), lambda b: (0, 0)),
        pl.BlockSpec((C_out, 1), lambda b: (0, 0)),
    ]

    if shortcut_conv:
        ws = jnp.asarray(params["shortcut_w"], f32).reshape(C_out, C_in)
        inputs += [ws.astype(mxu_dtype), col(params["shortcut_b"])]
        in_specs += [pl.BlockSpec((C_out, C_in), lambda b: (0, 0)),
                     pl.BlockSpec((C_out, 1), lambda b: (0, 0))]

    if has_attn:
        scale = float(d_k) ** -0.5
        wp = jnp.asarray(params["attn_proj_w"], f32).reshape(n_heads, 3 * d_k, C_out)
        bp = jnp.asarray(params["attn_proj_b"], f32).reshape(n_heads, 3 * d_k)
        # Reorder to contiguous [Q | K | V] slabs and fold the scale into Q.
        wp_all = jnp.concatenate([(wp[:, :d_k, :] * scale).reshape(HD, C_out),
                                  wp[:, d_k:2 * d_k, :].reshape(HD, C_out),
                                  wp[:, 2 * d_k:, :].reshape(HD, C_out)], axis=0)
        bp_all = jnp.concatenate([(bp[:, :d_k] * scale).reshape(HD),
                                  bp[:, d_k:2 * d_k].reshape(HD),
                                  bp[:, 2 * d_k:].reshape(HD)],
                                 axis=0).reshape(3 * HD, 1)
        inputs += [wp_all.astype(mxu_dtype), bp_all.astype(f32),
                   jnp.asarray(params["attn_out_w"]).astype(mxu_dtype),
                   col(params["attn_out_b"])]
        in_specs += [pl.BlockSpec((3 * HD, C_out), lambda b: (0, 0)),
                     pl.BlockSpec((3 * HD, 1), lambda b: (0, 0)),
                     pl.BlockSpec((C_out, HD), lambda b: (0, 0)),
                     pl.BlockSpec((C_out, 1), lambda b: (0, 0))]

    kernel = functools.partial(
        _downblock_kernel, H=H, W=W, n_heads=n_heads, d_k=d_k,
        has_attn=has_attn, shortcut_conv=shortcut_conv, mxu_dtype=mxu_dtype)

    out = pl.pallas_call(
        kernel,
        out_shape=jax.ShapeDtypeStruct((B, C_out, S), f32),
        grid_spec=pltpu.PrefetchScalarGridSpec(
            num_scalar_prefetch=0,
            grid=(B,),
            in_specs=in_specs,
            out_specs=pl.BlockSpec((1, C_out, S), lambda b: (b, 0, 0)),
        ),
        compiler_params=pltpu.CompilerParams(
            dimension_semantics=("parallel",),
            vmem_limit_bytes=64 * 1024 * 1024),
    )(*inputs)

    return out.reshape(B, C_out, H, W)


def downblock_reference(x, t, params, *, n_groups, n_heads=1, d_k=None, has_attn=True):
    """Pure-JAX transcription of the PyTorch DownBlock.forward (for verification)."""
    hi = jax.lax.Precision.HIGHEST
    eps = 1e-5
    B, C_in, H, W = x.shape
    C_out = params["conv1_w"].shape[0]

    def group_norm(v, w, b):
        Bv, C = v.shape[0], v.shape[1]
        g = v.reshape(Bv, n_groups, C // n_groups, H, W)
        mean = g.mean(axis=(2, 3, 4), keepdims=True)
        var = ((g - mean) ** 2).mean(axis=(2, 3, 4), keepdims=True)
        g = (g - mean) / jnp.sqrt(var + eps)
        return g.reshape(Bv, C, H, W) * w[None, :, None, None] + b[None, :, None, None]

    def silu(v):
        return v * (1.0 / (1.0 + jnp.exp(-v)))

    def conv(v, w, b, pad):
        out = jax.lax.conv_general_dilated(
            v, w, window_strides=(1, 1), padding=((pad, pad), (pad, pad)),
            dimension_numbers=("NCHW", "OIHW", "NCHW"), precision=hi)
        return out + b[None, :, None, None]

    # ResidualBlock
    h = silu(group_norm(x, params["gn1_w"], params["gn1_b"]))
    h = conv(h, params["conv1_w"], params["conv1_b"], 1)
    temb = jnp.einsum("bt,ct->bc", t, params["time_w"], precision=hi) + params["time_b"]
    h = h + temb[:, :, None, None]
    h = silu(group_norm(h, params["gn2_w"], params["gn2_b"]))
    h = conv(h, params["conv2_w"], params["conv2_b"], 1)
    if C_in != C_out:
        h = h + conv(x, params["shortcut_w"], params["shortcut_b"], 0)
    else:
        h = h + x
    if not has_attn:
        return h

    # AttentionBlock (self.norm is never applied in the PyTorch forward)
    if d_k is None:
        d_k = C_out
    S = H * W
    xs = jnp.transpose(h.reshape(B, C_out, S), (0, 2, 1))                 # (B, S, C)
    qkv = (jnp.einsum("bsc,oc->bso", xs, params["attn_proj_w"], precision=hi)
           + params["attn_proj_b"]).reshape(B, S, n_heads, 3 * d_k)
    q, k, v = jnp.split(qkv, 3, axis=-1)
    attn = jnp.einsum("bihd,bjhd->bijh", q, k, precision=hi) * (float(d_k) ** -0.5)
    attn = jax.nn.softmax(attn, axis=-1)                                  # over heads!
    res = jnp.einsum("bijh,bjhd->bihd", attn, v, precision=hi)
    res = res.reshape(B, S, n_heads * d_k)
    res = (jnp.einsum("bsh,ch->bsc", res, params["attn_out_w"], precision=hi)
           + params["attn_out_b"])
    res = res + xs
    return jnp.transpose(res, (0, 2, 1)).reshape(B, C_out, H, W)


if __name__ == "__main__":
    key = jax.random.PRNGKey(0)
    ks = jax.random.split(key, 24)
    f32 = jnp.float32

    def nrm(k, shape, s=0.05):
        return s * jax.random.normal(k, shape, dtype=f32)

    # ---- Config 1: channel-changing ResidualBlock + AttentionBlock (has_attn=True) ----
    B, C_in, C_out, Tc = 2, 32, 64, 32
    Hs = Ws = 8
    n_groups = 8
    n_heads = 1                      # DownBlock uses AttentionBlock defaults
    d_k = C_out
    HD = n_heads * d_k

    x = jax.random.normal(ks[0], (B, C_in, Hs, Ws), f32)
    t = jax.random.normal(ks[1], (B, Tc), f32)

    params = {
        "gn1_w": 1.0 + nrm(ks[2], (C_in,), 0.1), "gn1_b": nrm(ks[3], (C_in,), 0.1),
        "conv1_w": nrm(ks[4], (C_out, C_in, 3, 3)), "conv1_b": nrm(ks[5], (C_out,)),
        "time_w": nrm(ks[6], (C_out, Tc)), "time_b": nrm(ks[7], (C_out,)),
        "gn2_w": 1.0 + nrm(ks[8], (C_out,), 0.1), "gn2_b": nrm(ks[9], (C_out,), 0.1),
        "conv2_w": nrm(ks[10], (C_out, C_out, 3, 3)), "conv2_b": nrm(ks[11], (C_out,)),
        "shortcut_w": nrm(ks[12], (C_out, C_in, 1, 1)), "shortcut_b": nrm(ks[13], (C_out,)),
        # AttentionBlock params (its GroupNorm exists in __init__ but is never used
        # in forward(), so no norm params are needed -- parity with the PyTorch code).
        "attn_proj_w": nrm(ks[14], (3 * HD, C_out)), "attn_proj_b": nrm(ks[15], (3 * HD,)),
        "attn_out_w": nrm(ks[16], (C_out, HD)), "attn_out_b": nrm(ks[17], (C_out,)),
    }

    ref = downblock_reference(x, t, params, n_groups=n_groups, n_heads=n_heads,
                              d_k=d_k, has_attn=True)

    # f32 MXU operands (v5e-friendly).  Tolerance allows for the approx reciprocal
    # and TPU matmul-precision differences vs. the HIGHEST-precision reference.
    out_f32 = downblock_pallas(x, t, params, n_groups=n_groups, n_heads=n_heads,
                               d_k=d_k, has_attn=True, mxu_dtype=jnp.float32)
    out_f32 = jax.block_until_ready(out_f32)
    assert out_f32.shape == (B, C_out, Hs, Ws)
    assert jnp.allclose(out_f32, ref, atol=5e-2, rtol=5e-2), \
        float(jnp.max(jnp.abs(out_f32 - ref)))

    # bf16 MXU operands (v6e/v7x feedback); f32 accumulation + f32 norm/softmax math.
    out_bf16 = downblock_pallas(x, t, params, n_groups=n_groups, n_heads=n_heads,
                                d_k=d_k, has_attn=True, mxu_dtype=jnp.bfloat16)
    out_bf16 = jax.block_until_ready(out_bf16)
    assert jnp.allclose(out_bf16, ref, atol=1e-1, rtol=1e-1), \
        float(jnp.max(jnp.abs(out_bf16 - ref)))

    # ---- Config 2: identity shortcut (C_in == C_out), has_attn=False ----
    C2 = 32
    x2 = jax.random.normal(ks[18], (B, C2, Hs, Ws), f32)
    params2 = {
        "gn1_w": 1.0 + nrm(ks[19], (C2,), 0.1), "gn1_b": nrm(ks[20], (C2,), 0.1),
        "conv1_w": nrm(ks[21], (C2, C2, 3, 3)), "conv1_b": nrm(ks[22], (C2,)),
        "time_w": nrm(ks[23], (C2, Tc)), "time_b": jnp.zeros((C2,), f32),
        "gn2_w": jnp.ones((C2,), f32), "gn2_b": jnp.zeros((C2,), f32),
        "conv2_w": nrm(ks[21], (C2, C2, 3, 3)), "conv2_b": nrm(ks[22], (C2,)),
    }
    ref2 = downblock_reference(x2, t, params2, n_groups=n_groups, has_attn=False)
    out2 = downblock_pallas(x2, t, params2, n_groups=n_groups, has_attn=False,
                            mxu_dtype=jnp.float32)
    out2 = jax.block_until_ready(out2)
    assert out2.shape == (B, C2, Hs, Ws)
    assert jnp.allclose(out2, ref2, atol=5e-2, rtol=5e-2), \
        float(jnp.max(jnp.abs(out2 - ref2)))

    print("KERNEL_OK")
</pallas_src>

<mosaic_0001>
module attributes {stable_mosaic.version = 11 : i64} {
  func.func @_downblock_kernel(%arg0: i32, %arg1: memref<1x32x64xf32, #tpu.memory_space<vmem>>, %arg2: memref<1x1x32xf32, #tpu.memory_space<vmem>>, %arg3: memref<9x1x64xf32, #tpu.memory_space<vmem>>, %arg4: memref<32x32xf32, #tpu.memory_space<vmem>>, %arg5: memref<32x1xf32, #tpu.memory_space<vmem>>, %arg6: memref<32x1xf32, #tpu.memory_space<vmem>>, %arg7: memref<64x288xf32, #tpu.memory_space<vmem>>, %arg8: memref<64x1xf32, #tpu.memory_space<vmem>>, %arg9: memref<64x32xf32, #tpu.memory_space<vmem>>, %arg10: memref<64x1xf32, #tpu.memory_space<vmem>>, %arg11: memref<64x64xf32, #tpu.memory_space<vmem>>, %arg12: memref<64x1xf32, #tpu.memory_space<vmem>>, %arg13: memref<64x1xf32, #tpu.memory_space<vmem>>, %arg14: memref<64x576xf32, #tpu.memory_space<vmem>>, %arg15: memref<64x1xf32, #tpu.memory_space<vmem>>, %arg16: memref<64x32xf32, #tpu.memory_space<vmem>>, %arg17: memref<64x1xf32, #tpu.memory_space<vmem>>, %arg18: memref<192x64xf32, #tpu.memory_space<vmem>>, %arg19: memref<192x1xf32, #tpu.memory_space<vmem>>, %arg20: memref<64x64xf32, #tpu.memory_space<vmem>>, %arg21: memref<64x1xf32, #tpu.memory_space<vmem>>, %arg22: memref<1x64x64xf32, #tpu.memory_space<vmem>>) attributes {dimension_semantics = [#tpu.dimension_semantics<parallel>], iteration_bounds = array<i64: 2>, scalar_prefetch = 0 : i64, scratch_operands = 0 : i64, tpu.core_type = #tpu.core_type<tc>, window_params = [{transform_indices = @transform_0, window_bounds = array<i64: 1, 32, 64>}, {transform_indices = @transform_1, window_bounds = array<i64: 1, 1, 32>}, {pipeline_mode = #tpu.pipeline_mode<synchronous>, transform_indices = @transform_2, window_bounds = array<i64: 9, 1, 64>}, {pipeline_mode = #tpu.pipeline_mode<synchronous>, transform_indices = @transform_3, window_bounds = array<i64: 32, 32>}, {pipeline_mode = #tpu.pipeline_mode<synchronous>, transform_indices = @transform_4, window_bounds = array<i64: 32, 1>}, {pipeline_mode = #tpu.pipeline_mode<synchronous>, transform_indices = @transform_5, window_bounds = array<i64: 32, 1>}, {pipeline_mode = #tpu.pipeline_mode<synchronous>, transform_indices = @transform_6, window_bounds = array<i64: 64, 288>}, {pipeline_mode = #tpu.pipeline_mode<synchronous>, transform_indices = @transform_7, window_bounds = array<i64: 64, 1>}, {pipeline_mode = #tpu.pipeline_mode<synchronous>, transform_indices = @transform_8, window_bounds = array<i64: 64, 32>}, {pipeline_mode = #tpu.pipeline_mode<synchronous>, transform_indices = @transform_9, window_bounds = array<i64: 64, 1>}, {pipeline_mode = #tpu.pipeline_mode<synchronous>, transform_indices = @transform_10, window_bounds = array<i64: 64, 64>}, {pipeline_mode = #tpu.pipeline_mode<synchronous>, transform_indices = @transform_11, window_bounds = array<i64: 64, 1>}, {pipeline_mode = #tpu.pipeline_mode<synchronous>, transform_indices = @transform_12, window_bounds = array<i64: 64, 1>}, {pipeline_mode = #tpu.pipeline_mode<synchronous>, transform_indices = @transform_13, window_bounds = array<i64: 64, 576>}, {pipeline_mode = #tpu.pipeline_mode<synchronous>, transform_indices = @transform_14, window_bounds = array<i64: 64, 1>}, {pipeline_mode = #tpu.pipeline_mode<synchronous>, transform_indices = @transform_15, window_bounds = array<i64: 64, 32>}, {pipeline_mode = #tpu.pipeline_mode<synchronous>, transform_indices = @transform_16, window_bounds = array<i64: 64, 1>}, {pipeline_mode = #tpu.pipeline_mode<synchronous>, transform_indices = @transform_17, window_bounds = array<i64: 192, 64>}, {pipeline_mode = #tpu.pipeline_mode<synchronous>, transform_indices = @transform_18, window_bounds = array<i64: 192, 1>}, {pipeline_mode = #tpu.pipeline_mode<synchronous>, transform_indices = @transform_19, window_bounds = array<i64: 64, 64>}, {pipeline_mode = #tpu.pipeline_mode<synchronous>, transform_indices = @transform_20, window_bounds = array<i64: 64, 1>}, {transform_indices = @transform_21, window_bounds = array<i64: 1, 64, 64>}]} {
    %c0 = arith.constant 0 : index
    %c0_0 = arith.constant 0 : index
    %c0_1 = arith.constant 0 : index
    %0 = vector.load %arg1[%c0, %c0_0, %c0_1] : memref<1x32x64xf32, #tpu.memory_space<vmem>>, vector<1x32x64xf32>
    %1 = vector.shape_cast %0 : vector<1x32x64xf32> to vector<32x64xf32>
    %cst = arith.constant dense<0.000000e+00> : vector<32xf32>
    %2 = vector.multi_reduction <add>, %1, %cst [1] : vector<32x64xf32> to vector<32xf32>
    %3 = vector.shape_cast %2 : vector<32xf32> to vector<32x1xf32>
    %4 = arith.mulf %1, %1 : vector<32x64xf32>
    %cst_2 = arith.constant dense<0.000000e+00> : vector<32xf32>
    %5 = vector.multi_reduction <add>, %4, %cst_2 [1] : vector<32x64xf32> to vector<32xf32>
    %6 = vector.shape_cast %5 : vector<32xf32> to vector<32x1xf32>
    %c0_3 = arith.constant 0 : index
    %c0_4 = arith.constant 0 : index
    %7 = vector.load %arg4[%c0_3, %c0_4] : memref<32x32xf32, #tpu.memory_space<vmem>>, vector<32x32xf32>
    %8 = tpu.concatenate %3, %6 in 1 : vector<32x1xf32>, vector<32x1xf32> -> vector<32x2xf32>
    %cst_5 = arith.constant dense<0.000000e+00> : vector<32x2xf32>
    %9 = tpu.matmul %7, %8, %cst_5 {dimension_numbers = #tpu.dot_dimension_numbers<[1], [0], [0], [1], [0, 0, 1, 1], [], []>} : vector<32x32xf32>, vector<32x2xf32>, vector<32x2xf32> -> vector<32x2xf32>
    %10 = vector.extract_strided_slice %9 {offsets = [0, 0], sizes = [32, 1], strides = [1, 1]} : vector<32x2xf32> to vector<32x1xf32>
    %11 = vector.extract_strided_slice %9 {offsets = [0, 1], sizes = [32, 1], strides = [1, 1]} : vector<32x2xf32> to vector<32x1xf32>
    %12 = arith.mulf %10, %10 : vector<32x1xf32>
    %13 = arith.subf %11, %12 : vector<32x1xf32>
    %14 = vector.broadcast %10 : vector<32x1xf32> to vector<32x64xf32>
    %15 = arith.subf %1, %14 : vector<32x64xf32>
    %cst_6 = arith.constant 9.99999974E-6 : f32
    %16 = vector.broadcast %cst_6 : f32 to vector<32x1xf32>
    %17 = arith.addf %13, %16 : vector<32x1xf32>
    %18 = math.rsqrt %17 : vector<32x1xf32>
    %19 = vector.broadcast %18 : vector<32x1xf32> to vector<32x64xf32>
    %20 = arith.mulf %15, %19 : vector<32x64xf32>
    %c0_7 = arith.constant 0 : index
    %c0_8 = arith.constant 0 : index
    %21 = vector.load %arg5[%c0_7, %c0_8] : memref<32x1xf32, #tpu.memory_space<vmem>>, vector<32x1xf32>
    %22 = vector.broadcast %21 : vector<32x1xf32> to vector<32x64xf32>
    %23 = arith.mulf %20, %22 : vector<32x64xf32>
    %c0_9 = arith.constant 0 : index
    %c0_10 = arith.constant 0 : index
    %24 = vector.load %arg6[%c0_9, %c0_10] : memref<32x1xf32, #tpu.memory_space<vmem>>, vector<32x1xf32>
    %25 = vector.broadcast %24 : vector<32x1xf32> to vector<32x64xf32>
    %26 = arith.addf %23, %25 : vector<32x64xf32>
    %cst_11 = arith.constant 0.000000e+00 : f32
    %27 = vector.broadcast %cst_11 : f32 to vector<32x64xf32>
    %28 = arith.subf %27, %26 : vector<32x64xf32>
    %29 = math.exp %28 : vector<32x64xf32>
    %cst_12 = arith.constant 1.000000e+00 : f32
    %30 = vector.broadcast %cst_12 : f32 to vector<32x64xf32>
    %31 = arith.addf %30, %29 : vector<32x64xf32>
    %cst_13 = arith.constant 1.000000e+00 : f32
    %32 = vector.broadcast %cst_13 : f32 to vector<32x64xf32>
    %33 = arith.divf %32, %31 : vector<32x64xf32>
    %34 = arith.mulf %26, %33 : vector<32x64xf32>
    %c0_14 = arith.constant 0 : index
    %c0_15 = arith.constant 0 : index
    %35 = vector.load %arg9[%c0_14, %c0_15] : memref<64x32xf32, #tpu.memory_space<vmem>>, vector<64x32xf32>
    %c0_16 = arith.constant 0 : index
    %c0_17 = arith.constant 0 : index
    %c0_18 = arith.constant 0 : index
    %36 = vector.load %arg2[%c0_16, %c0_17, %c0_18] : memref<1x1x32xf32, #tpu.memory_space<vmem>>, vector<1x1x32xf32>
    %37 = vector.shape_cast %36 : vector<1x1x32xf32> to vector<1x32xf32>
    %38 = vector.broadcast %37 : vector<1x32xf32> to vector<64x32xf32>
    %39 = arith.mulf %35, %38 : vector<64x32xf32>
    %cst_19 = arith.constant dense<0.000000e+00> : vector<64xf32>
    %40 = vector.multi_reduction <add>, %39, %cst_19 [1] : vector<64x32xf32> to vector<64xf32>
    %41 = vector.shape_cast %40 : vector<64xf32> to vector<64x1xf32>
    %c0_20 = arith.constant 0 : index
    %c0_21 = arith.constant 0 : index
    %42 = vector.load %arg10[%c0_20, %c0_21] : memref<64x1xf32, #tpu.memory_space<vmem>>, vector<64x1xf32>
    %43 = arith.addf %41, %42 : vector<64x1xf32>
    %cst_22 = arith.constant 0.000000e+00 : f32
    %44 = vector.broadcast %cst_22 : f32 to vector<32x9xf32>
    %45 = vector.extract_strided_slice %34 {offsets = [0, 0], sizes = [32, 55], strides = [1, 1]} : vector<32x64xf32> to vector<32x55xf32>
    %46 = tpu.concatenate %44, %45 in 1 : vector<32x9xf32>, vector<32x55xf32> -> vector<32x64xf32>
    %c0_23 = arith.constant 0 : index
    %c0_24 = arith.constant 0 : index
    %c0_25 = arith.constant 0 : index
    %47 = vector.load %arg3[%c0_23, %c0_24, %c0_25] : memref<9x1x64xf32, #tpu.memory_space<vmem>>, vector<1x1x64xf32>
    %48 = vector.shape_cast %47 : vector<1x1x64xf32> to vector<1x64xf32>
    %49 = vector.broadcast %48 : vector<1x64xf32> to vector<32x64xf32>
    %50 = arith.mulf %46, %49 : vector<32x64xf32>
    %cst_26 = arith.constant 0.000000e+00 : f32
    %51 = vector.broadcast %cst_26 : f32 to vector<32x8xf32>
    %52 = vector.extract_strided_slice %34 {offsets = [0, 0], sizes = [32, 56], strides = [1, 1]} : vector<32x64xf32> to vector<32x56xf32>
    %53 = tpu.concatenate %51, %52 in 1 : vector<32x8xf32>, vector<32x56xf32> -> vector<32x64xf32>
    %c1 = arith.constant 1 : index
    %c0_27 = arith.constant 0 : index
    %c0_28 = arith.constant 0 : index
    %54 = vector.load %arg3[%c1, %c0_27, %c0_28] : memref<9x1x64xf32, #tpu.memory_space<vmem>>, vector<1x1x64xf32>
    %55 = vector.shape_cast %54 : vector<1x1x64xf32> to vector<1x64xf32>
    %56 = vector.broadcast %55 : vector<1x64xf32> to vector<32x64xf32>
    %57 = arith.mulf %53, %56 : vector<32x64xf32>
    %cst_29 = arith.constant 0.000000e+00 : f32
    %58 = vector.broadcast %cst_29 : f32 to vector<32x7xf32>
    %59 = vector.extract_strided_slice %34 {offsets = [0, 0], sizes = [32, 57], strides = [1, 1]} : vector<32x64xf32> to vector<32x57xf32>
    %60 = tpu.concatenate %58, %59 in 1 : vector<32x7xf32>, vector<32x57xf32> -> vector<32x64xf32>
    %c2 = arith.constant 2 : index
    %c0_30 = arith.constant 0 : index
    %c0_31 = arith.constant 0 : index
    %61 = vector.load %arg3[%c2, %c0_30, %c0_31] : memref<9x1x64xf32, #tpu.memory_space<vmem>>, vector<1x1x64xf32>
    %62 = vector.shape_cast %61 : vector<1x1x64xf32> to vector<1x64xf32>
    %63 = vector.broadcast %62 : vector<1x64xf32> to vector<32x64xf32>
    %64 = arith.mulf %60, %63 : vector<32x64xf32>
    %cst_32 = arith.constant 0.000000e+00 : f32
    %65 = vector.broadcast %cst_32 : f32 to vector<32x1xf32>
    %66 = vector.extract_strided_slice %34 {offsets = [0, 0], sizes = [32, 63], strides = [1, 1]} : vector<32x64xf32> to vector<32x63xf32>
    %67 = tpu.concatenate %65, %66 in 1 : vector<32x1xf32>, vector<32x63xf32> -> vector<32x64xf32>
    %c3 = arith.constant 3 : index
    %c0_33 = arith.constant 0 : index
    %c0_34 = arith.constant 0 : index
    %68 = vector.load %arg3[%c3, %c0_33, %c0_34] : memref<9x1x64xf32, #tpu.memory_space<vmem>>, vector<1x1x64xf32>
    %69 = vector.shape_cast %68 : vector<1x1x64xf32> to vector<1x64xf32>
    %70 = vector.broadcast %69 : vector<1x64xf32> to vector<32x64xf32>
    %71 = arith.mulf %67, %70 : vector<32x64xf32>
    %c4 = arith.constant 4 : index
    %c0_35 = arith.constant 0 : index
    %c0_36 = arith.constant 0 : index
    %72 = vector.load %arg3[%c4, %c0_35, %c0_36] : memref<9x1x64xf32, #tpu.memory_space<vmem>>, vector<1x1x64xf32>
    %73 = vector.shape_cast %72 : vector<1x1x64xf32> to vector<1x64xf32>
    %74 = vector.broadcast %73 : vector<1x64xf32> to vector<32x64xf32>
    %75 = arith.mulf %34, %74 : vector<32x64xf32>
    %76 = vector.extract_strided_slice %34 {offsets = [0, 1], sizes = [32, 63], strides = [1, 1]} : vector<32x64xf32> to vector<32x63xf32>
    %cst_37 = arith.constant 0.000000e+00 : f32
    %77 = vector.broadcast %cst_37 : f32 to vector<32x1xf32>
    %78 = tpu.concatenate %76, %77 in 1 : vector<32x63xf32>, vector<32x1xf32> -> vector<32x64xf32>
    %c5 = arith.constant 5 : index
    %c0_38 = arith.constant 0 : index
    %c0_39 = arith.constant 0 : index
    %79 = vector.load %arg3[%c5, %c0_38, %c0_39] : memref<9x1x64xf32, #tpu.memory_space<vmem>>, vector<1x1x64xf32>
    %80 = vector.shape_cast %79 : vector<1x1x64xf32> to vector<1x64xf32>
    %81 = vector.broadcast %80 : vector<1x64xf32> to vector<32x64xf32>
    %82 = arith.mulf %78, %81 : vector<32x64xf32>
    %83 = vector.extract_strided_slice %34 {offsets = [0, 7], sizes = [32, 57], strides = [1, 1]} : vector<32x64xf32> to vector<32x57xf32>
    %cst_40 = arith.constant 0.000000e+00 : f32
    %84 = vector.broadcast %cst_40 : f32 to vector<32x7xf32>
    %85 = tpu.concatenate %83, %84 in 1 : vector<32x57xf32>, vector<32x7xf32> -> vector<32x64xf32>
    %c6 = arith.constant 6 : index
    %c0_41 = arith.constant 0 : index
    %c0_42 = arith.constant 0 : index
    %86 = vector.load %arg3[%c6, %c0_41, %c0_42] : memref<9x1x64xf32, #tpu.memory_space<vmem>>, vector<1x1x64xf32>
    %87 = vector.shape_cast %86 : vector<1x1x64xf32> to vector<1x64xf32>
    %88 = vector.broadcast %87 : vector<1x64xf32> to vector<32x64xf32>
    %89 = arith.mulf %85, %88 : vector<32x64xf32>
    %90 = vector.extract_strided_slice %34 {offsets = [0, 8], sizes = [32, 56], strides = [1, 1]} : vector<32x64xf32> to vector<32x56xf32>
    %cst_43 = arith.constant 0.000000e+00 : f32
    %91 = vector.broadcast %cst_43 : f32 to vector<32x8xf32>
    %92 = tpu.concatenate %90, %91 in 1 : vector<32x56xf32>, vector<32x8xf32> -> vector<32x64xf32>
    %c7 = arith.constant 7 : index
    %c0_44 = arith.constant 0 : index
    %c0_45 = arith.constant 0 : index
    %93 = vector.load %arg3[%c7, %c0_44, %c0_45] : memref<9x1x64xf32, #tpu.memory_space<vmem>>, vector<1x1x64xf32>
    %94 = vector.shape_cast %93 : vector<1x1x64xf32> to vector<1x64xf32>
    %95 = vector.broadcast %94 : vector<1x64xf32> to vector<32x64xf32>
    %96 = arith.mulf %92, %95 : vector<32x64xf32>
    %97 = vector.extract_strided_slice %34 {offsets = [0, 9], sizes = [32, 55], strides = [1, 1]} : vector<32x64xf32> to vector<32x55xf32>
    %cst_46 = arith.constant 0.000000e+00 : f32
    %98 = vector.broadcast %cst_46 : f32 to vector<32x9xf32>
    %99 = tpu.concatenate %97, %98 in 1 : vector<32x55xf32>, vector<32x9xf32> -> vector<32x64xf32>
    %c8 = arith.constant 8 : index
    %c0_47 = arith.constant 0 : index
    %c0_48 = arith.constant 0 : index
    %100 = vector.load %arg3[%c8, %c0_47, %c0_48] : memref<9x1x64xf32, #tpu.memory_space<vmem>>, vector<1x1x64xf32>
    %101 = vector.shape_cast %100 : vector<1x1x64xf32> to vector<1x64xf32>
    %102 = vector.broadcast %101 : vector<1x64xf32> to vector<32x64xf32>
    %103 = arith.mulf %99, %102 : vector<32x64xf32>
    %104 = tpu.concatenate %50, %57, %64, %71, %75, %82, %89, %96, %103 in 0 : vector<32x64xf32>, vector<32x64xf32>, vector<32x64xf32>, vector<32x64xf32>, vector<32x64xf32>, vector<32x64xf32>, vector<32x64xf32>, vector<32x64xf32>, vector<32x64xf32> -> vector<288x64xf32>
    %c0_49 = arith.constant 0 : index
    %c0_50 = arith.constant 0 : index
    %105 = vector.load %arg7[%c0_49, %c0_50] : memref<64x288xf32, #tpu.memory_space<vmem>>, vector<64x288xf32>
    %cst_51 = arith.constant dense<0.000000e+00> : vector<64x64xf32>
    %106 = tpu.matmul %105, %104, %cst_51 {dimension_numbers = #tpu.dot_dimension_numbers<[1], [0], [0], [1], [0, 0, 1, 1], [], []>} : vector<64x288xf32>, vector<288x64xf32>, vector<64x64xf32> -> vector<64x64xf32>
    %c0_52 = arith.constant 0 : index
    %c0_53 = arith.constant 0 : index
    %107 = vector.load %arg8[%c0_52, %c0_53] : memref<64x1xf32, #tpu.memory_space<vmem>>, vector<64x1xf32>
    %108 = vector.broadcast %107 : vector<64x1xf32> to vector<64x64xf32>
    %109 = arith.addf %106, %108 : vector<64x64xf32>
    %110 = vector.broadcast %43 : vector<64x1xf32> to vector<64x64xf32>
    %111 = arith.addf %109, %110 : vector<64x64xf32>
    %cst_54 = arith.constant dense<0.000000e+00> : vector<64xf32>
    %112 = vector.multi_reduction <add>, %111, %cst_54 [1] : vector<64x64xf32> to vector<64xf32>
    %113 = vector.shape_cast %112 : vector<64xf32> to vector<64x1xf32>
    %114 = arith.mulf %111, %111 : vector<64x64xf32>
    %cst_55 = arith.constant dense<0.000000e+00> : vector<64xf32>
    %115 = vector.multi_reduction <add>, %114, %cst_55 [1] : vector<64x64xf32> to vector<64xf32>
    %116 = vector.shape_cast %115 : vector<64xf32> to vector<64x1xf32>
    %c0_56 = arith.constant 0 : index
    %c0_57 = arith.constant 0 : index
    %117 = vector.load %arg11[%c0_56, %c0_57] : memref<64x64xf32, #tpu.memory_space<vmem>>, vector<64x64xf32>
    %118 = tpu.concatenate %113, %116 in 1 : vector<64x1xf32>, vector<64x1xf32> -> vector<64x2xf32>
    %cst_58 = arith.constant dense<0.000000e+00> : vector<64x2xf32>
    %119 = tpu.matmul %117, %118, %cst_58 {dimension_numbers = #tpu.dot_dimension_numbers<[1], [0], [0], [1], [0, 0, 1, 1], [], []>} : vector<64x64xf32>, vector<64x2xf32>, vector<64x2xf32> -> vector<64x2xf32>
    %120 = vector.extract_strided_slice %119 {offsets = [0, 0], sizes = [64, 1], strides = [1, 1]} : vector<64x2xf32> to vector<64x1xf32>
    %121 = vector.extract_strided_slice %119 {offsets = [0, 1], sizes = [64, 1], strides = [1, 1]} : vector<64x2xf32> to vector<64x1xf32>
    %122 = arith.mulf %120, %120 : vector<64x1xf32>
    %123 = arith.subf %121, %122 : vector<64x1xf32>
    %124 = vector.broadcast %120 : vector<64x1xf32> to vector<64x64xf32>
    %125 = arith.subf %111, %124 : vector<64x64xf32>
    %cst_59 = arith.constant 9.99999974E-6 : f32
    %126 = vector.broadcast %cst_59 : f32 to vector<64x1xf32>
    %127 = arith.addf %123, %126 : vector<64x1xf32>
    %128 = math.rsqrt %127 : vector<64x1xf32>
    %129 = vector.broadcast %128 : vector<64x1xf32> to vector<64x64xf32>
    %130 = arith.mulf %125, %129 : vector<64x64xf32>
    %c0_60 = arith.constant 0 : index
    %c0_61 = arith.constant 0 : index
    %131 = vector.load %arg12[%c0_60, %c0_61] : memref<64x1xf32, #tpu.memory_space<vmem>>, vector<64x1xf32>
    %132 = vector.broadcast %131 : vector<64x1xf32> to vector<64x64xf32>
    %133 = arith.mulf %130, %132 : vector<64x64xf32>
    %c0_62 = arith.constant 0 : index
    %c0_63 = arith.constant 0 : index
    %134 = vector.load %arg13[%c0_62, %c0_63] : memref<64x1xf32, #tpu.memory_space<vmem>>, vector<64x1xf32>
    %135 = vector.broadcast %134 : vector<64x1xf32> to vector<64x64xf32>
    %136 = arith.addf %133, %135 : vector<64x64xf32>
    %cst_64 = arith.constant 0.000000e+00 : f32
    %137 = vector.broadcast %cst_64 : f32 to vector<64x64xf32>
    %138 = arith.subf %137, %136 : vector<64x64xf32>
    %139 = math.exp %138 : vector<64x64xf32>
    %cst_65 = arith.constant 1.000000e+00 : f32
    %140 = vector.broadcast %cst_65 : f32 to vector<64x64xf32>
    %141 = arith.addf %140, %139 : vector<64x64xf32>
    %cst_66 = arith.constant 1.000000e+00 : f32
    %142 = vector.broadcast %cst_66 : f32 to vector<64x64xf32>
    %143 = arith.divf %142, %141 : vector<64x64xf32>
    %144 = arith.mulf %136, %143 : vector<64x64xf32>
    %cst_67 = arith.constant 0.000000e+00 : f32
    %145 = vector.broadcast %cst_67 : f32 to vector<64x9xf32>
    %146 = vector.extract_strided_slice %144 {offsets = [0, 0], sizes = [64, 55], strides = [1, 1]} : vector<64x64xf32> to vector<64x55xf32>
    %147 = tpu.concatenate %145, %146 in 1 : vector<64x9xf32>, vector<64x55xf32> -> vector<64x64xf32>
    %c0_68 = arith.constant 0 : index
    %c0_69 = arith.constant 0 : index
    %c0_70 = arith.constant 0 : index
    %148 = vector.load %arg3[%c0_68, %c0_69, %c0_70] : memref<9x1x64xf32, #tpu.memory_space<vmem>>, vector<1x1x64xf32>
    %149 = vector.shape_cast %148 : vector<1x1x64xf32> to vector<1x64xf32>
    %150 = vector.broadcast %149 : vector<1x64xf32> to vector<64x64xf32>
    %151 = arith.mulf %147, %150 : vector<64x64xf32>
    %cst_71 = arith.constant 0.000000e+00 : f32
    %152 = vector.broadcast %cst_71 : f32 to vector<64x8xf32>
    %153 = vector.extract_strided_slice %144 {offsets = [0, 0], sizes = [64, 56], strides = [1, 1]} : vector<64x64xf32> to vector<64x56xf32>
    %154 = tpu.concatenate %152, %153 in 1 : vector<64x8xf32>, vector<64x56xf32> -> vector<64x64xf32>
    %c1_72 = arith.constant 1 : index
    %c0_73 = arith.constant 0 : index
    %c0_74 = arith.constant 0 : index
    %155 = vector.load %arg3[%c1_72, %c0_73, %c0_74] : memref<9x1x64xf32, #tpu.memory_space<vmem>>, vector<1x1x64xf32>
    %156 = vector.shape_cast %155 : vector<1x1x64xf32> to vector<1x64xf32>
    %157 = vector.broadcast %156 : vector<1x64xf32> to vector<64x64xf32>
    %158 = arith.mulf %154, %157 : vector<64x64xf32>
    %cst_75 = arith.constant 0.000000e+00 : f32
    %159 = vector.broadcast %cst_75 : f32 to vector<64x7xf32>
    %160 = vector.extract_strided_slice %144 {offsets = [0, 0], sizes = [64, 57], strides = [1, 1]} : vector<64x64xf32> to vector<64x57xf32>
    %161 = tpu.concatenate %159, %160 in 1 : vector<64x7xf32>, vector<64x57xf32> -> vector<64x64xf32>
    %c2_76 = arith.constant 2 : index
    %c0_77 = arith.constant 0 : index
    %c0_78 = arith.constant 0 : index
    %162 = vector.load %arg3[%c2_76, %c0_77, %c0_78] : memref<9x1x64xf32, #tpu.memory_space<vmem>>, vector<1x1x64xf32>
    %163 = vector.shape_cast %162 : vector<1x1x64xf32> to vector<1x64xf32>
    %164 = vector.broadcast %163 : vector<1x64xf32> to vector<64x64xf32>
    %165 = arith.mulf %161, %164 : vector<64x64xf32>
    %cst_79 = arith.constant 0.000000e+00 : f32
    %166 = vector.broadcast %cst_79 : f32 to vector<64x1xf32>
    %167 = vector.extract_strided_slice %144 {offsets = [0, 0], sizes = [64, 63], strides = [1, 1]} : vector<64x64xf32> to vector<64x63xf32>
    %168 = tpu.concatenate %166, %167 in 1 : vector<64x1xf32>, vector<64x63xf32> -> vector<64x64xf32>
    %c3_80 = arith.constant 3 : index
    %c0_81 = arith.constant 0 : index
    %c0_82 = arith.constant 0 : index
    %169 = vector.load %arg3[%c3_80, %c0_81, %c0_82] : memref<9x1x64xf32, #tpu.memory_space<vmem>>, vector<1x1x64xf32>
    %170 = vector.shape_cast %169 : vector<1x1x64xf32> to vector<1x64xf32>
    %171 = vector.broadcast %170 : vector<1x64xf32> to vector<64x64xf32>
    %172 = arith.mulf %168, %171 : vector<64x64xf32>
    %c4_83 = arith.constant 4 : index
    %c0_84 = arith.constant 0 : index
    %c0_85 = arith.constant 0 : index
    %173 = vector.load %arg3[%c4_83, %c0_84, %c0_85] : memref<9x1x64xf32, #tpu.memory_space<vmem>>, vector<1x1x64xf32>
    %174 = vector.shape_cast %173 : vector<1x1x64xf32> to vector<1x64xf32>
    %175 = vector.broadcast %174 : vector<1x64xf32> to vector<64x64xf32>
    %176 = arith.mulf %144, %175 : vector<64x64xf32>
    %177 = vector.extract_strided_slice %144 {offsets = [0, 1], sizes = [64, 63], strides = [1, 1]} : vector<64x64xf32> to vector<64x63xf32>
    %cst_86 = arith.constant 0.000000e+00 : f32
    %178 = vector.broadcast %cst_86 : f32 to vector<64x1xf32>
    %179 = tpu.concatenate %177, %178 in 1 : vector<64x63xf32>, vector<64x1xf32> -> vector<64x64xf32>
    %c5_87 = arith.constant 5 : index
    %c0_88 = arith.constant 0 : index
    %c0_89 = arith.constant 0 : index
    %180 = vector.load %arg3[%c5_87, %c0_88, %c0_89] : memref<9x1x64xf32, #tpu.memory_space<vmem>>, vector<1x1x64xf32>
    %181 = vector.shape_cast %180 : vector<1x1x64xf32> to vector<1x64xf32>
    %182 = vector.broadcast %181 : vector<1x64xf32> to vector<64x64xf32>
    %183 = arith.mulf %179, %182 : vector<64x64xf32>
    %184 = vector.extract_strided_slice %144 {offsets = [0, 7], sizes = [64, 57], strides = [1, 1]} : vector<64x64xf32> to vector<64x57xf32>
    %cst_90 = arith.constant 0.000000e+00 : f32
    %185 = vector.broadcast %cst_90 : f32 to vector<64x7xf32>
    %186 = tpu.concatenate %184, %185 in 1 : vector<64x57xf32>, vector<64x7xf32> -> vector<64x64xf32>
    %c6_91 = arith.constant 6 : index
    %c0_92 = arith.constant 0 : index
    %c0_93 = arith.constant 0 : index
    %187 = vector.load %arg3[%c6_91, %c0_92, %c0_93] : memref<9x1x64xf32, #tpu.memory_space<vmem>>, vector<1x1x64xf32>
    %188 = vector.shape_cast %187 : vector<1x1x64xf32> to vector<1x64xf32>
    %189 = vector.broadcast %188 : vector<1x64xf32> to vector<64x64xf32>
    %190 = arith.mulf %186, %189 : vector<64x64xf32>
    %191 = vector.extract_strided_slice %144 {offsets = [0, 8], sizes = [64, 56], strides = [1, 1]} : vector<64x64xf32> to vector<64x56xf32>
    %cst_94 = arith.constant 0.000000e+00 : f32
    %192 = vector.broadcast %cst_94 : f32 to vector<64x8xf32>
    %193 = tpu.concatenate %191, %192 in 1 : vector<64x56xf32>, vector<64x8xf32> -> vector<64x64xf32>
    %c7_95 = arith.constant 7 : index
    %c0_96 = arith.constant 0 : index
    %c0_97 = arith.constant 0 : index
    %194 = vector.load %arg3[%c7_95, %c0_96, %c0_97] : memref<9x1x64xf32, #tpu.memory_space<vmem>>, vector<1x1x64xf32>
    %195 = vector.shape_cast %194 : vector<1x1x64xf32> to vector<1x64xf32>
    %196 = vector.broadcast %195 : vector<1x64xf32> to vector<64x64xf32>
    %197 = arith.mulf %193, %196 : vector<64x64xf32>
    %198 = vector.extract_strided_slice %144 {offsets = [0, 9], sizes = [64, 55], strides = [1, 1]} : vector<64x64xf32> to vector<64x55xf32>
    %cst_98 = arith.constant 0.000000e+00 : f32
    %199 = vector.broadcast %cst_98 : f32 to vector<64x9xf32>
    %200 = tpu.concatenate %198, %199 in 1 : vector<64x55xf32>, vector<64x9xf32> -> vector<64x64xf32>
    %c8_99 = arith.constant 8 : index
    %c0_100 = arith.constant 0 : index
    %c0_101 = arith.constant 0 : index
    %201 = vector.load %arg3[%c8_99, %c0_100, %c0_101] : memref<9x1x64xf32, #tpu.memory_space<vmem>>, vector<1x1x64xf32>
    %202 = vector.shape_cast %201 : vector<1x1x64xf32> to vector<1x64xf32>
    %203 = vector.broadcast %202 : vector<1x64xf32> to vector<64x64xf32>
    %204 = arith.mulf %200, %203 : vector<64x64xf32>
    %205 = tpu.concatenate %151, %158, %165, %172, %176, %183, %190, %197, %204 in 0 : vector<64x64xf32>, vector<64x64xf32>, vector<64x64xf32>, vector<64x64xf32>, vector<64x64xf32>, vector<64x64xf32>, vector<64x64xf32>, vector<64x64xf32>, vector<64x64xf32> -> vector<576x64xf32>
    %c0_102 = arith.constant 0 : index
    %c0_103 = arith.constant 0 : index
    %206 = vector.load %arg14[%c0_102, %c0_103] : memref<64x576xf32, #tpu.memory_space<vmem>>, vector<64x576xf32>
    %cst_104 = arith.constant dense<0.000000e+00> : vector<64x64xf32>
    %207 = tpu.matmul %206, %205, %cst_104 {dimension_numbers = #tpu.dot_dimension_numbers<[1], [0], [0], [1], [0, 0, 1, 1], [], []>} : vector<64x576xf32>, vector<576x64xf32>, vector<64x64xf32> -> vector<64x64xf32>
    %c0_105 = arith.constant 0 : index
    %c0_106 = arith.constant 0 : index
    %208 = vector.load %arg15[%c0_105, %c0_106] : memref<64x1xf32, #tpu.memory_space<vmem>>, vector<64x1xf32>
    %209 = vector.broadcast %208 : vector<64x1xf32> to vector<64x64xf32>
    %210 = arith.addf %207, %209 : vector<64x64xf32>
    %c0_107 = arith.constant 0 : index
    %c0_108 = arith.constant 0 : index
    %211 = vector.load %arg16[%c0_107, %c0_108] : memref<64x32xf32, #tpu.memory_space<vmem>>, vector<64x32xf32>
    %cst_109 = arith.constant dense<0.000000e+00> : vector<64x64xf32>
    %212 = tpu.matmul %211, %1, %cst_109 {dimension_numbers = #tpu.dot_dimension_numbers<[1], [0], [0], [1], [0, 0, 1, 1], [], []>} : vector<64x32xf32>, vector<32x64xf32>, vector<64x64xf32> -> vector<64x64xf32>
    %213 = arith.addf %210, %212 : vector<64x64xf32>
    %c0_110 = arith.constant 0 : index
    %c0_111 = arith.constant 0 : index
    %214 = vector.load %arg17[%c0_110, %c0_111] : memref<64x1xf32, #tpu.memory_space<vmem>>, vector<64x1xf32>
    %215 = vector.broadcast %214 : vector<64x1xf32> to vector<64x64xf32>
    %216 = arith.addf %213, %215 : vector<64x64xf32>
    %c0_112 = arith.constant 0 : index
    %c0_113 = arith.constant 0 : index
    %217 = vector.load %arg18[%c0_112, %c0_113] : memref<192x64xf32, #tpu.memory_space<vmem>>, vector<192x64xf32>
    %cst_114 = arith.constant dense<0.000000e+00> : vector<192x64xf32>
    %218 = tpu.matmul %217, %216, %cst_114 {dimension_numbers = #tpu.dot_dimension_numbers<[1], [0], [0], [1], [0, 0, 1, 1], [], []>} : vector<192x64xf32>, vector<64x64xf32>, vector<192x64xf32> -> vector<192x64xf32>
    %c0_115 = arith.constant 0 : index
    %c0_116 = arith.constant 0 : index
    %219 = vector.load %arg19[%c0_115, %c0_116] : memref<192x1xf32, #tpu.memory_space<vmem>>, vector<192x1xf32>
    %220 = vector.broadcast %219 : vector<192x1xf32> to vector<192x64xf32>
    %221 = arith.addf %218, %220 : vector<192x64xf32>
    %222 = vector.extract_strided_slice %221 {offsets = [0, 0], sizes = [64, 64], strides = [1, 1]} : vector<192x64xf32> to vector<64x64xf32>
    %223 = vector.extract_strided_slice %221 {offsets = [64, 0], sizes = [64, 64], strides = [1, 1]} : vector<192x64xf32> to vector<64x64xf32>
    %224 = vector.extract_strided_slice %221 {offsets = [128, 0], sizes = [64, 64], strides = [1, 1]} : vector<192x64xf32> to vector<64x64xf32>
    %225 = tpu.transpose %223, [1, 0] : vector<64x64xf32> -> vector<64x64xf32>
    %cst_117 = arith.constant dense<0.000000e+00> : vector<64x64xf32>
    %226 = tpu.matmul %225, %222, %cst_117 {dimension_numbers = #tpu.dot_dimension_numbers<[1], [0], [0], [1], [0, 0, 1, 1], [], []>} : vector<64x64xf32>, vector<64x64xf32>, vector<64x64xf32> -> vector<64x64xf32>
    %227 = arith.subf %226, %226 : vector<64x64xf32>
    %228 = math.exp %227 : vector<64x64xf32>
    %229 = tpu.reciprocal %228 {approx = true} : vector<64x64xf32> -> vector<64x64xf32>
    %cst_118 = arith.constant 0.000000e+00 : f32
    %230 = vector.broadcast %cst_118 : f32 to vector<64x64xf32>
    %231 = arith.mulf %228, %229 : vector<64x64xf32>
    %cst_119 = arith.constant dense<0.000000e+00> : vector<64x64xf32>
    %232 = tpu.matmul %224, %231, %cst_119 {dimension_numbers = #tpu.dot_dimension_numbers<[1], [0], [0], [1], [0, 0, 1, 1], [], []>} : vector<64x64xf32>, vector<64x64xf32>, vector<64x64xf32> -> vector<64x64xf32>
    %c0_120 = arith.constant 0 : index
    %c0_121 = arith.constant 0 : index
    %233 = vector.load %arg20[%c0_120, %c0_121] : memref<64x64xf32, #tpu.memory_space<vmem>>, vector<64x64xf32>
    %cst_122 = arith.constant dense<0.000000e+00> : vector<64x64xf32>
    %234 = tpu.matmul %233, %232, %cst_122 {dimension_numbers = #tpu.dot_dimension_numbers<[1], [0], [0], [1], [0, 0, 1, 1], [], []>} : vector<64x64xf32>, vector<64x64xf32>, vector<64x64xf32> -> vector<64x64xf32>
    %235 = arith.addf %230, %234 : vector<64x64xf32>
    %c0_123 = arith.constant 0 : index
    %c0_124 = arith.constant 0 : index
    %236 = vector.load %arg21[%c0_123, %c0_124] : memref<64x1xf32, #tpu.memory_space<vmem>>, vector<64x1xf32>
    %237 = vector.broadcast %236 : vector<64x1xf32> to vector<64x64xf32>
    %238 = arith.addf %235, %237 : vector<64x64xf32>
    %239 = arith.addf %238, %216 : vector<64x64xf32>
    %c0_125 = arith.constant 0 : index
    %c0_126 = arith.constant 0 : index
    %c0_127 = arith.constant 0 : index
    %240 = vector.load %arg22[%c0_125, %c0_126, %c0_127] : memref<1x64x64xf32, #tpu.memory_space<vmem>>, vector<1x64x64xf32>
    %241 = vector.shape_cast %240 : vector<1x64x64xf32> to vector<64x64xf32>
    %242 = vector.shape_cast %239 : vector<64x64xf32> to vector<1x64x64xf32>
    tpu.vector_store %arg22[%c0_125, %c0_126, %c0_127], %242 {strides = array<i32>} : memref<1x64x64xf32, #tpu.memory_space<vmem>>, vector<1x64x64xf32>,
    return
  }
  func.func @transform_0(%arg0: i32) -> (i32, i32, i32) {
    %c0_i32 = arith.constant 0 : i32
    %c0_i32_0 = arith.constant 0 : i32
    %c0_i32_1 = arith.constant 0 : i32
    return %arg0, %c0_i32, %c0_i32_0 : i32, i32, i32
  }
  func.func @transform_1(%arg0: i32) -> (i32, i32, i32) {
    %c0_i32 = arith.constant 0 : i32
    %c0_i32_0 = arith.constant 0 : i32
    %c0_i32_1 = arith.constant 0 : i32
    return %arg0, %c0_i32, %c0_i32_0 : i32, i32, i32
  }
  func.func @transform_2(%arg0: i32) -> (i32, i32, i32) {
    %c0_i32 = arith.constant 0 : i32
    %c0_i32_0 = arith.constant 0 : i32
    %c0_i32_1 = arith.constant 0 : i32
    %c0_i32_2 = arith.constant 0 : i32
    return %c0_i32, %c0_i32_0, %c0_i32_1 : i32, i32, i32
  }
  func.func @transform_3(%arg0: i32) -> (i32, i32) {
    %c0_i32 = arith.constant 0 : i32
    %c0_i32_0 = arith.constant 0 : i32
    %c0_i32_1 = arith.constant 0 : i32
    return %c0_i32, %c0_i32_0 : i32, i32
  }
  func.func @transform_4(%arg0: i32) -> (i32, i32) {
    %c0_i32 = arith.constant 0 : i32
    %c0_i32_0 = arith.constant 0 : i32
    %c0_i32_1 = arith.constant 0 : i32
    return %c0_i32, %c0_i32_0 : i32, i32
  }
  func.func @transform_5(%arg0: i32) -> (i32, i32) {
    %c0_i32 = arith.constant 0 : i32
    %c0_i32_0 = arith.constant 0 : i32
    %c0_i32_1 = arith.constant 0 : i32
    return %c0_i32, %c0_i32_0 : i32, i32
  }
  func.func @transform_6(%arg0: i32) -> (i32, i32) {
    %c0_i32 = arith.constant 0 : i32
    %c0_i32_0 = arith.constant 0 : i32
    %c0_i32_1 = arith.constant 0 : i32
    return %c0_i32, %c0_i32_0 : i32, i32
  }
  func.func @transform_7(%arg0: i32) -> (i32, i32) {
    %c0_i32 = arith.constant 0 : i32
    %c0_i32_0 = arith.constant 0 : i32
    %c0_i32_1 = arith.constant 0 : i32
    return %c0_i32, %c0_i32_0 : i32, i32
  }
  func.func @transform_8(%arg0: i32) -> (i32, i32) {
    %c0_i32 = arith.constant 0 : i32
    %c0_i32_0 = arith.constant 0 : i32
    %c0_i32_1 = arith.constant 0 : i32
    return %c0_i32, %c0_i32_0 : i32, i32
  }
  func.func @transform_9(%arg0: i32) -> (i32, i32) {
    %c0_i32 = arith.constant 0 : i32
    %c0_i32_0 = arith.constant 0 : i32
    %c0_i32_1 = arith.constant 0 : i32
    return %c0_i32, %c0_i32_0 : i32, i32
  }
  func.func @transform_10(%arg0: i32) -> (i32, i32) {
    %c0_i32 = arith.constant 0 : i32
    %c0_i32_0 = arith.constant 0 : i32
    %c0_i32_1 = arith.constant 0 : i32
    return %c0_i32, %c0_i32_0 : i32, i32
  }
  func.func @transform_11(%arg0: i32) -> (i32, i32) {
    %c0_i32 = arith.constant 0 : i32
    %c0_i32_0 = arith.constant 0 : i32
    %c0_i32_1 = arith.constant 0 : i32
    return %c0_i32, %c0_i32_0 : i32, i32
  }
  func.func @transform_12(%arg0: i32) -> (i32, i32) {
    %c0_i32 = arith.constant 0 : i32
    %c0_i32_0 = arith.constant 0 : i32
    %c0_i32_1 = arith.constant 0 : i32
    return %c0_i32, %c0_i32_0 : i32, i32
  }
  func.func @transform_13(%arg0: i32) -> (i32, i32) {
    %c0_i32 = arith.constant 0 : i32
    %c0_i32_0 = arith.constant 0 : i32
    %c0_i32_1 = arith.constant 0 : i32
    return %c0_i32, %c0_i32_0 : i32, i32
  }
  func.func @transform_14(%arg0: i32) -> (i32, i32) {
    %c0_i32 = arith.constant 0 : i32
    %c0_i32_0 = arith.constant 0 : i32
    %c0_i32_1 = arith.constant 0 : i32
    return %c0_i32, %c0_i32_0 : i32, i32
  }
  func.func @transform_15(%arg0: i32) -> (i32, i32) {
    %c0_i32 = arith.constant 0 : i32
    %c0_i32_0 = arith.constant 0 : i32
    %c0_i32_1 = arith.constant 0 : i32
    return %c0_i32, %c0_i32_0 : i32, i32
  }
  func.func @transform_16(%arg0: i32) -> (i32, i32) {
    %c0_i32 = arith.constant 0 : i32
    %c0_i32_0 = arith.constant 0 : i32
    %c0_i32_1 = arith.constant 0 : i32
    return %c0_i32, %c0_i32_0 : i32, i32
  }
  func.func @transform_17(%arg0: i32) -> (i32, i32) {
    %c0_i32 = arith.constant 0 : i32
    %c0_i32_0 = arith.constant 0 : i32
    %c0_i32_1 = arith.constant 0 : i32
    return %c0_i32, %c0_i32_0 : i32, i32
  }
  func.func @transform_18(%arg0: i32) -> (i32, i32) {
    %c0_i32 = arith.constant 0 : i32
    %c0_i32_0 = arith.constant 0 : i32
    %c0_i32_1 = arith.constant 0 : i32
    return %c0_i32, %c0_i32_0 : i32, i32
  }
  func.func @transform_19(%arg0: i32) -> (i32, i32) {
    %c0_i32 = arith.constant 0 : i32
    %c0_i32_0 = arith.constant 0 : i32
    %c0_i32_1 = arith.constant 0 : i32
    return %c0_i32, %c0_i32_0 : i32, i32
  }
  func.func @transform_20(%arg0: i32) -> (i32, i32) {
    %c0_i32 = arith.constant 0 : i32
    %c0_i32_0 = arith.constant 0 : i32
    %c0_i32_1 = arith.constant 0 : i32
    return %c0_i32, %c0_i32_0 : i32, i32
  }
  func.func @transform_21(%arg0: i32) -> (i32, i32, i32) {
    %c0_i32 = arith.constant 0 : i32
    %c0_i32_0 = arith.constant 0 : i32
    %c0_i32_1 = arith.constant 0 : i32
    return %arg0, %c0_i32, %c0_i32_0 : i32, i32, i32
  }
}

</mosaic_0001>

<llo_original>
// kernel: tpu_custom_call.1
$region0: #{tpu_custom_call.1}
  #allocation0 [shape = 'u32[]', space=smem, size = 0x4, offset = 0x4, fixed_abs, tag = 'smem constant byte address 0x4 - core index']
  #allocation1 [shape = 'u32[72,128]{1,0:T(1,128)}', space=vmem, size = 0x9000, scoped, tag = 'internal scratch']
  %s0 = inlined_call_operand.vmem [shape: f32[2,32,64], index: 0, kind: input, shape index: {}]
  %s1 = inlined_call_operand.vmem [shape: f32[2,1,32], index: 1, kind: input, shape index: {}]
  %s2 = inlined_call_operand.vmem [shape: f32[9,1,64], index: 2, kind: input, shape index: {}]
  %s3 = inlined_call_operand.vmem [shape: f32[32,32], index: 3, kind: input, shape index: {}]
  %s4 = inlined_call_operand.vmem [shape: f32[32,1], index: 4, kind: input, shape index: {}]
  %s5 = inlined_call_operand.vmem [shape: f32[32,1], index: 5, kind: input, shape index: {}]
  %s6 = inlined_call_operand.vmem [shape: f32[64,288], index: 6, kind: input, shape index: {}]
  %s7 = inlined_call_operand.vmem [shape: f32[64,1], index: 7, kind: input, shape index: {}]
  %s8 = inlined_call_operand.vmem [shape: f32[64,32], index: 8, kind: input, shape index: {}]
  %s9 = inlined_call_operand.vmem [shape: f32[64,1], index: 9, kind: input, shape index: {}]
  %s10 = inlined_call_operand.vmem [shape: f32[64,64], index: 10, kind: input, shape index: {}]
  %s11 = inlined_call_operand.vmem [shape: f32[64,1], index: 11, kind: input, shape index: {}]
  %s12 = inlined_call_operand.vmem [shape: f32[64,1], index: 12, kind: input, shape index: {}]
  %s13 = inlined_call_operand.vmem [shape: f32[64,576], index: 13, kind: input, shape index: {}]
  %s14 = inlined_call_operand.vmem [shape: f32[64,1], index: 14, kind: input, shape index: {}]
  %s15 = inlined_call_operand.vmem [shape: f32[64,32], index: 15, kind: input, shape index: {}]
  %s16 = inlined_call_operand.vmem [shape: f32[64,1], index: 16, kind: input, shape index: {}]
  %s17 = inlined_call_operand.vmem [shape: f32[192,64], index: 17, kind: input, shape index: {}]
  %s18 = inlined_call_operand.vmem [shape: f32[192,1], index: 18, kind: input, shape index: {}]
  %s19 = inlined_call_operand.vmem [shape: f32[64,64], index: 19, kind: input, shape index: {}]
  %s20 = inlined_call_operand.vmem [shape: f32[64,1], index: 20, kind: input, shape index: {}]
  %s21 = inlined_call_operand.hbm [shape: f32[2,64,64], index: 21, kind: output, shape index: {}]
  %s22 = sld [smem:[#allocation0]]
  $region117: #{tpu_custom_call.1} parent=0
    _
  %s24 = ssub.s32 1, %s22
  %s25 = scalar_select 0, %s24, %s22
  $region1: #{tpu_custom_call.1} parent=0
    #allocation2 [shape = 'u8[65536]{0}', space=vmem, size = 0x10000, scoped, tag = 'output window, operand 0']
    #allocation3 [shape = 's32[2]{0}', space=sflag, size = 0x8, scoped, tag = 'scoped memory for tpu_custom_call.1']
    %26 = vsyncpa [#allocation3], 0
    %s27 = scalar_lea.sflag [#allocation3], 1
    %28 = vsyncpa %s27, 0
    loop: start=0, step=1, limit=4
    $region2: #{tpu_custom_call.1} parent=1 // loop_pre_header
      _
    $region3: #{tpu_custom_call.1} parent=1 // loop_header
      %s30 = sphi 0, %s34
      %p31 = scmp.ge.s32.totalorder %s30, 4
      %s40 = sphi 0, %s42
      %s43 = sphi 0, %s40
      %s44 = sphi 0, %s43
      %s60 = sphi 0, %s44
      %s66 = sphi 0, %s68
      %s69 = sphi 0, %s66
      %s70 = sphi 0, %s69
      %s86 = sphi 0, %s70
      %s90 = sphi 0, %s90
      %s92 = sphi 0, %s90
      %s93 = sphi 0, %s92
      %s107 = sphi 0, %s93
      %s111 = sphi 0, %s111
      %s113 = sphi 0, %s111
      %s114 = sphi 0, %s113
      %s128 = sphi 0, %s114
      %s132 = sphi 0, %s132
      %s134 = sphi 0, %s132
      %s135 = sphi 0, %s134
      %s149 = sphi 0, %s135
      %s153 = sphi 0, %s153
      %s155 = sphi 0, %s153
      %s156 = sphi 0, %s155
      %s170 = sphi 0, %s156
      %s174 = sphi 0, %s174
      %s176 = sphi 0, %s174
      %s177 = sphi 0, %s176
      %s191 = sphi 0, %s177
      %s195 = sphi 0, %s195
      %s197 = sphi 0, %s195
      %s198 = sphi 0, %s197
      %s212 = sphi 0, %s198
      %s216 = sphi 0, %s216
      %s218 = sphi 0, %s216
      %s219 = sphi 0, %s218
      %s233 = sphi 0, %s219
      %s237 = sphi 0, %s237
      %s239 = sphi 0, %s237
      %s240 = sphi 0, %s239
      %s254 = sphi 0, %s240
      %s258 = sphi 0, %s258
      %s260 = sphi 0, %s258
      %s261 = sphi 0, %s260
      %s275 = sphi 0, %s261
      %s279 = sphi 0, %s279
      %s281 = sphi 0, %s279
      %s282 = sphi 0, %s281
      %s296 = sphi 0, %s282
      %s300 = sphi 0, %s300
      %s302 = sphi 0, %s300
      %s303 = sphi 0, %s302
      %s317 = sphi 0, %s303
      %s321 = sphi 0, %s321
      %s323 = sphi 0, %s321
      %s324 = sphi 0, %s323
      %s338 = sphi 0, %s324
      %s342 = sphi 0, %s342
      %s344 = sphi 0, %s342
      %s345 = sphi 0, %s344
      %s359 = sphi 0, %s345
      %s363 = sphi 0, %s363
      %s365 = sphi 0, %s363
      %s366 = sphi 0, %s365
      %s380 = sphi 0, %s366
      %s384 = sphi 0, %s384
      %s386 = sphi 0, %s384
      %s387 = sphi 0, %s386
      %s401 = sphi 0, %s387
      %s405 = sphi 0, %s405
      %s407 = sphi 0, %s405
      %s408 = sphi 0, %s407
      %s422 = sphi 0, %s408
      %s426 = sphi 0, %s426
      %s428 = sphi 0, %s426
      %s429 = sphi 0, %s428
      %s443 = sphi 0, %s429
      %s447 = sphi 0, %s447
      %s449 = sphi 0, %s447
      %s450 = sphi 0, %s449
      %s464 = sphi 0, %s450
      %s468 = sphi 0, %s468
      %s470 = sphi 0, %s468
      %s471 = sphi 0, %s470
      %s485 = sphi 0, %s471
      %s491 = sphi 0, %s493
      %s494 = sphi 0, %s491
      %s495 = sphi 0, %s494
      %s511 = sphi 0, %s495
    $region4: #{tpu_custom_call.1} parent=1 // loop_header_branch
      %33 = sbr.rel (%p31) target = $region8
    $region5: #{tpu_custom_call.1} parent=1 // loop_body
      %s35 = ssub.s32 %s30, 1
      %s36 = ssub.s32 %s30, 2
      %s37 = sadd.s32 %s30, 1
      %s38 = ssub.s32 %s30, %s37
      %p39 = scmp.eq.s32.totalorder %s38, 0
      %s41 = sadd.s32 %s40, 1
      %s42 = scalar_select %p39, %s40, %s41
      %p45 = pneg %p39
      %p46 = scmp.eq.s32.totalorder %s30, 1
      %p47 = por %p45, %p46
      %p48 = scmp.ne.s32.totalorder %s40, %s43
      %p49 = scmp.eq.s32.totalorder %s30, 0
      %p50 = por %p48, %p49
      %p51 = scmp.ne.s32.totalorder %s40, %s43
      %p52 = scmp.eq.s32.totalorder %s35, 1
      %p53 = por %p51, %p52
      %p54 = scmp.ne.s32.totalorder %s43, %s44
      %p55 = scmp.eq.s32.totalorder %s35, 0
      %p56 = por %p54, %p55
      %p57 = scmp.ne.s32.totalorder %s43, %s44
      %p58 = scmp.eq.s32.totalorder %s36, 1
      %p59 = por %p57, %p58
      %p61 = scmp.ne.s32.totalorder %s44, %s60
      %p62 = scmp.eq.s32.totalorder %s36, 0
      %p63 = por %p61, %p62
      %s64 = ssub.s32 %s30, %s37
      %p65 = scmp.eq.s32.totalorder %s64, 0
      %s67 = sadd.s32 %s66, 1
      %s68 = scalar_select %p65, %s66, %s67
      %p71 = pneg %p65
      %p72 = scmp.eq.s32.totalorder %s30, 1
      %p73 = por %p71, %p72
      %p74 = scmp.ne.s32.totalorder %s66, %s69
      %p75 = scmp.eq.s32.totalorder %s30, 0
      %p76 = por %p74, %p75
      %p77 = scmp.ne.s32.totalorder %s66, %s69
      %p78 = scmp.eq.s32.totalorder %s35, 1
      %p79 = por %p77, %p78
      %p80 = scmp.ne.s32.totalorder %s69, %s70
      %p81 = scmp.eq.s32.totalorder %s35, 0
      %p82 = por %p80, %p81
      %p83 = scmp.ne.s32.totalorder %s69, %s70
      %p84 = scmp.eq.s32.totalorder %s36, 1
      %p85 = por %p83, %p84
      %p87 = scmp.ne.s32.totalorder %s70, %s86
      %p88 = scmp.eq.s32.totalorder %s36, 0
      %p89 = por %p87, %p88
      %s91 = sadd.s32 %s90, 1
      %p94 = scmp.eq.s32.totalorder %s30, 1
      %p95 = scmp.ne.s32.totalorder %s90, %s92
      %p96 = scmp.eq.s32.totalorder %s30, 0
      %p97 = por %p95, %p96
      %p98 = scmp.ne.s32.totalorder %s90, %s92
      %p99 = scmp.eq.s32.totalorder %s35, 1
      %p100 = por %p98, %p99
      %p101 = scmp.ne.s32.totalorder %s92, %s93
      %p102 = scmp.eq.s32.totalorder %s35, 0
      %p103 = por %p101, %p102
      %p104 = scmp.ne.s32.totalorder %s92, %s93
      %p105 = scmp.eq.s32.totalorder %s36, 1
      %p106 = por %p104, %p105
      %p108 = scmp.ne.s32.totalorder %s93, %s107
      %p109 = scmp.eq.s32.totalorder %s36, 0
      %p110 = por %p108, %p109
      %s112 = sadd.s32 %s111, 1
      %p115 = scmp.eq.s32.totalorder %s30, 1
      %p116 = scmp.ne.s32.totalorder %s111, %s113
      %p117 = scmp.eq.s32.totalorder %s30, 0
      %p118 = por %p116, %p117
      %p119 = scmp.ne.s32.totalorder %s111, %s113
      %p120 = scmp.eq.s32.totalorder %s35, 1
      %p121 = por %p119, %p120
      %p122 = scmp.ne.s32.totalorder %s113, %s114
      %p123 = scmp.eq.s32.totalorder %s35, 0
      %p124 = por %p122, %p123
      %p125 = scmp.ne.s32.totalorder %s113, %s114
      %p126 = scmp.eq.s32.totalorder %s36, 1
      %p127 = por %p125, %p126
      %p129 = scmp.ne.s32.totalorder %s114, %s128
      %p130 = scmp.eq.s32.totalorder %s36, 0
      %p131 = por %p129, %p130
      %s133 = sadd.s32 %s132, 1
      %p136 = scmp.eq.s32.totalorder %s30, 1
      %p137 = scmp.ne.s32.totalorder %s132, %s134
      %p138 = scmp.eq.s32.totalorder %s30, 0
      %p139 = por %p137, %p138
      %p140 = scmp.ne.s32.totalorder %s132, %s134
      %p141 = scmp.eq.s32.totalorder %s35, 1
      %p142 = por %p140, %p141
      %p143 = scmp.ne.s32.totalorder %s134, %s135
      %p144 = scmp.eq.s32.totalorder %s35, 0
      %p145 = por %p143, %p144
      %p146 = scmp.ne.s32.totalorder %s134, %s135
      %p147 = scmp.eq.s32.totalorder %s36, 1
      %p148 = por %p146, %p147
      %p150 = scmp.ne.s32.totalorder %s135, %s149
      %p151 = scmp.eq.s32.totalorder %s36, 0
      %p152 = por %p150, %p151
      %s154 = sadd.s32 %s153, 1
      %p157 = scmp.eq.s32.totalorder %s30, 1
      %p158 = scmp.ne.s32.totalorder %s153, %s155
      %p159 = scmp.eq.s32.totalorder %s30, 0
      %p160 = por %p158, %p159
      %p161 = scmp.ne.s32.totalorder %s153, %s155
      %p162 = scmp.eq.s32.totalorder %s35, 1
      %p163 = por %p161, %p162
      %p164 = scmp.ne.s32.totalorder %s155, %s156
      %p165 = scmp.eq.s32.totalorder %s35, 0
      %p166 = por %p164, %p165
      %p167 = scmp.ne.s32.totalorder %s155, %s156
      %p168 = scmp.eq.s32.totalorder %s36, 1
      %p169 = por %p167, %p168
      %p171 = scmp.ne.s32.totalorder %s156, %s170
      %p172 = scmp.eq.s32.totalorder %s36, 0
      %p173 = por %p171, %p172
      %s175 = sadd.s32 %s174, 1
      %p178 = scmp.eq.s32.totalorder %s30, 1
      %p179 = scmp.ne.s32.totalorder %s174, %s176
      %p180 = scmp.eq.s32.totalorder %s30, 0
      %p181 = por %p179, %p180
      %p182 = scmp.ne.s32.totalorder %s174, %s176
      %p183 = scmp.eq.s32.totalorder %s35, 1
      %p184 = por %p182, %p183
      %p185 = scmp.ne.s32.totalorder %s176, %s177
      %p186 = scmp.eq.s32.totalorder %s35, 0
      %p187 = por %p185, %p186
      %p188 = scmp.ne.s32.totalorder %s176, %s177
      %p189 = scmp.eq.s32.totalorder %s36, 1
      %p190 = por %p188, %p189
      %p192 = scmp.ne.s32.totalorder %s177, %s191
      %p193 = scmp.eq.s32.totalorder %s36, 0
      %p194 = por %p192, %p193
      %s196 = sadd.s32 %s195, 1
      %p199 = scmp.eq.s32.totalorder %s30, 1
      %p200 = scmp.ne.s32.totalorder %s195, %s197
      %p201 = scmp.eq.s32.totalorder %s30, 0
      %p202 = por %p200, %p201
      %p203 = scmp.ne.s32.totalorder %s195, %s197
      %p204 = scmp.eq.s32.totalorder %s35, 1
      %p205 = por %p203, %p204
      %p206 = scmp.ne.s32.totalorder %s197, %s198
      %p207 = scmp.eq.s32.totalorder %s35, 0
      %p208 = por %p206, %p207
      %p209 = scmp.ne.s32.totalorder %s197, %s198
      %p210 = scmp.eq.s32.totalorder %s36, 1
      %p211 = por %p209, %p210
      %p213 = scmp.ne.s32.totalorder %s198, %s212
      %p214 = scmp.eq.s32.totalorder %s36, 0
      %p215 = por %p213, %p214
      %s217 = sadd.s32 %s216, 1
      %p220 = scmp.eq.s32.totalorder %s30, 1
      %p221 = scmp.ne.s32.totalorder %s216, %s218
      %p222 = scmp.eq.s32.totalorder %s30, 0
      %p223 = por %p221, %p222
      %p224 = scmp.ne.s32.totalorder %s216, %s218
      %p225 = scmp.eq.s32.totalorder %s35, 1
      %p226 = por %p224, %p225
      %p227 = scmp.ne.s32.totalorder %s218, %s219
      %p228 = scmp.eq.s32.totalorder %s35, 0
      %p229 = por %p227, %p228
      %p230 = scmp.ne.s32.totalorder %s218, %s219
      %p231 = scmp.eq.s32.totalorder %s36, 1
      %p232 = por %p230, %p231
      %p234 = scmp.ne.s32.totalorder %s219, %s233
      %p235 = scmp.eq.s32.totalorder %s36, 0
      %p236 = por %p234, %p235
      %s238 = sadd.s32 %s237, 1
      %p241 = scmp.eq.s32.totalorder %s30, 1
      %p242 = scmp.ne.s32.totalorder %s237, %s239
      %p243 = scmp.eq.s32.totalorder %s30, 0
      %p244 = por %p242, %p243
      %p245 = scmp.ne.s32.totalorder %s237, %s239
      %p246 = scmp.eq.s32.totalorder %s35, 1
      %p247 = por %p245, %p246
      %p248 = scmp.ne.s32.totalorder %s239, %s240
      %p249 = scmp.eq.s32.totalorder %s35, 0
      %p250 = por %p248, %p249
      %p251 = scmp.ne.s32.totalorder %s239, %s240
      %p252 = scmp.eq.s32.totalorder %s36, 1
      %p253 = por %p251, %p252
      %p255 = scmp.ne.s32.totalorder %s240, %s254
      %p256 = scmp.eq.s32.totalorder %s36, 0
      %p257 = por %p255, %p256
      %s259 = sadd.s32 %s258, 1
      %p262 = scmp.eq.s32.totalorder %s30, 1
      %p263 = scmp.ne.s32.totalorder %s258, %s260
      %p264 = scmp.eq.s32.totalorder %s30, 0
      %p265 = por %p263, %p264
      %p266 = scmp.ne.s32.totalorder %s258, %s260
      %p267 = scmp.eq.s32.totalorder %s35, 1
      %p268 = por %p266, %p267
      %p269 = scmp.ne.s32.totalorder %s260, %s261
      %p270 = scmp.eq.s32.totalorder %s35, 0
      %p271 = por %p269, %p270
      %p272 = scmp.ne.s32.totalorder %s260, %s261
      %p273 = scmp.eq.s32.totalorder %s36, 1
      %p274 = por %p272, %p273
      %p276 = scmp.ne.s32.totalorder %s261, %s275
      %p277 = scmp.eq.s32.totalorder %s36, 0
      %p278 = por %p276, %p277
      %s280 = sadd.s32 %s279, 1
      %p283 = scmp.eq.s32.totalorder %s30, 1
      %p284 = scmp.ne.s32.totalorder %s279, %s281
      %p285 = scmp.eq.s32.totalorder %s30, 0
      %p286 = por %p284, %p285
      %p287 = scmp.ne.s32.totalorder %s279, %s281
      %p288 = scmp.eq.s32.totalorder %s35, 1
      %p289 = por %p287, %p288
      %p290 = scmp.ne.s32.totalorder %s281, %s282
      %p291 = scmp.eq.s32.totalorder %s35, 0
      %p292 = por %p290, %p291
      %p293 = scmp.ne.s32.totalorder %s281, %s282
      %p294 = scmp.eq.s32.totalorder %s36, 1
      %p295 = por %p293, %p294
      %p297 = scmp.ne.s32.totalorder %s282, %s296
      %p298 = scmp.eq.s32.totalorder %s36, 0
      %p299 = por %p297, %p298
      %s301 = sadd.s32 %s300, 1
      %p304 = scmp.eq.s32.totalorder %s30, 1
      %p305 = scmp.ne.s32.totalorder %s300, %s302
      %p306 = scmp.eq.s32.totalorder %s30, 0
      %p307 = por %p305, %p306
      %p308 = scmp.ne.s32.totalorder %s300, %s302
      %p309 = scmp.eq.s32.totalorder %s35, 1
      %p310 = por %p308, %p309
      %p311 = scmp.ne.s32.totalorder %s302, %s303
      %p312 = scmp.eq.s32.totalorder %s35, 0
      %p313 = por %p311, %p312
      %p314 = scmp.ne.s32.totalorder %s302, %s303
      %p315 = scmp.eq.s32.totalorder %s36, 1
      %p316 = por %p314, %p315
      %p318 = scmp.ne.s32.totalorder %s303, %s317
      %p319 = scmp.eq.s32.totalorder %s36, 0
      %p320 = por %p318, %p319
      %s322 = sadd.s32 %s321, 1
      %p325 = scmp.eq.s32.totalorder %s30, 1
      %p326 = scmp.ne.s32.totalorder %s321, %s323
      %p327 = scmp.eq.s32.totalorder %s30, 0
      %p328 = por %p326, %p327
      %p329 = scmp.ne.s32.totalorder %s321, %s323
      %p330 = scmp.eq.s32.totalorder %s35, 1
      %p331 = por %p329, %p330
      %p332 = scmp.ne.s32.totalorder %s323, %s324
      %p333 = scmp.eq.s32.totalorder %s35, 0
      %p334 = por %p332, %p333
      %p335 = scmp.ne.s32.totalorder %s323, %s324
      %p336 = scmp.eq.s32.totalorder %s36, 1
      %p337 = por %p335, %p336
      %p339 = scmp.ne.s32.totalorder %s324, %s338
      %p340 = scmp.eq.s32.totalorder %s36, 0
      %p341 = por %p339, %p340
      %s343 = sadd.s32 %s342, 1
      %p346 = scmp.eq.s32.totalorder %s30, 1
      %p347 = scmp.ne.s32.totalorder %s342, %s344
      %p348 = scmp.eq.s32.totalorder %s30, 0
      %p349 = por %p347, %p348
      %p350 = scmp.ne.s32.totalorder %s342, %s344
      %p351 = scmp.eq.s32.totalorder %s35, 1
      %p352 = por %p350, %p351
      %p353 = scmp.ne.s32.totalorder %s344, %s345
      %p354 = scmp.eq.s32.totalorder %s35, 0
      %p355 = por %p353, %p354
      %p356 = scmp.ne.s32.totalorder %s344, %s345
      %p357 = scmp.eq.s32.totalorder %s36, 1
      %p358 = por %p356, %p357
      %p360 = scmp.ne.s32.totalorder %s345, %s359
      %p361 = scmp.eq.s32.totalorder %s36, 0
      %p362 = por %p360, %p361
      %s364 = sadd.s32 %s363, 1
      %p367 = scmp.eq.s32.totalorder %s30, 1
      %p368 = scmp.ne.s32.totalorder %s363, %s365
      %p369 = scmp.eq.s32.totalorder %s30, 0
      %p370 = por %p368, %p369
      %p371 = scmp.ne.s32.totalorder %s363, %s365
      %p372 = scmp.eq.s32.totalorder %s35, 1
      %p373 = por %p371, %p372
      %p374 = scmp.ne.s32.totalorder %s365, %s366
      %p375 = scmp.eq.s32.totalorder %s35, 0
      %p376 = por %p374, %p375
      %p377 = scmp.ne.s32.totalorder %s365, %s366
      %p378 = scmp.eq.s32.totalorder %s36, 1
      %p379 = por %p377, %p378
      %p381 = scmp.ne.s32.totalorder %s366, %s380
      %p382 = scmp.eq.s32.totalorder %s36, 0
      %p383 = por %p381, %p382
      %s385 = sadd.s32 %s384, 1
      %p388 = scmp.eq.s32.totalorder %s30, 1
      %p389 = scmp.ne.s32.totalorder %s384, %s386
      %p390 = scmp.eq.s32.totalorder %s30, 0
      %p391 = por %p389, %p390
      %p392 = scmp.ne.s32.totalorder %s384, %s386
      %p393 = scmp.eq.s32.totalorder %s35, 1
      %p394 = por %p392, %p393
      %p395 = scmp.ne.s32.totalorder %s386, %s387
      %p396 = scmp.eq.s32.totalorder %s35, 0
      %p397 = por %p395, %p396
      %p398 = scmp.ne.s32.totalorder %s386, %s387
      %p399 = scmp.eq.s32.totalorder %s36, 1
      %p400 = por %p398, %p399
      %p402 = scmp.ne.s32.totalorder %s387, %s401
      %p403 = scmp.eq.s32.totalorder %s36, 0
      %p404 = por %p402, %p403
      %s406 = sadd.s32 %s405, 1
      %p409 = scmp.eq.s32.totalorder %s30, 1
      %p410 = scmp.ne.s32.totalorder %s405, %s407
      %p411 = scmp.eq.s32.totalorder %s30, 0
      %p412 = por %p410, %p411
      %p413 = scmp.ne.s32.totalorder %s405, %s407
      %p414 = scmp.eq.s32.totalorder %s35, 1
      %p415 = por %p413, %p414
      %p416 = scmp.ne.s32.totalorder %s407, %s408
      %p417 = scmp.eq.s32.totalorder %s35, 0
      %p418 = por %p416, %p417
      %p419 = scmp.ne.s32.totalorder %s407, %s408
      %p420 = scmp.eq.s32.totalorder %s36, 1
      %p421 = por %p419, %p420
      %p423 = scmp.ne.s32.totalorder %s408, %s422
      %p424 = scmp.eq.s32.totalorder %s36, 0
      %p425 = por %p423, %p424
      %s427 = sadd.s32 %s426, 1
      %p430 = scmp.eq.s32.totalorder %s30, 1
      %p431 = scmp.ne.s32.totalorder %s426, %s428
      %p432 = scmp.eq.s32.totalorder %s30, 0
      %p433 = por %p431, %p432
      %p434 = scmp.ne.s32.totalorder %s426, %s428
      %p435 = scmp.eq.s32.totalorder %s35, 1
      %p436 = por %p434, %p435
      %p437 = scmp.ne.s32.totalorder %s428, %s429
      %p438 = scmp.eq.s32.totalorder %s35, 0
      %p439 = por %p437, %p438
      %p440 = scmp.ne.s32.totalorder %s428, %s429
      %p441 = scmp.eq.s32.totalorder %s36, 1
      %p442 = por %p440, %p441
      %p444 = scmp.ne.s32.totalorder %s429, %s443
      %p445 = scmp.eq.s32.totalorder %s36, 0
      %p446 = por %p444, %p445
      %s448 = sadd.s32 %s447, 1
      %p451 = scmp.eq.s32.totalorder %s30, 1
      %p452 = scmp.ne.s32.totalorder %s447, %s449
      %p453 = scmp.eq.s32.totalorder %s30, 0
      %p454 = por %p452, %p453
      %p455 = scmp.ne.s32.totalorder %s447, %s449
      %p456 = scmp.eq.s32.totalorder %s35, 1
      %p457 = por %p455, %p456
      %p458 = scmp.ne.s32.totalorder %s449, %s450
      %p459 = scmp.eq.s32.totalorder %s35, 0
      %p460 = por %p458, %p459
      %p461 = scmp.ne.s32.totalorder %s449, %s450
      %p462 = scmp.eq.s32.totalorder %s36, 1
      %p463 = por %p461, %p462
      %p465 = scmp.ne.s32.totalorder %s450, %s464
      %p466 = scmp.eq.s32.totalorder %s36, 0
      %p467 = por %p465, %p466
      %s469 = sadd.s32 %s468, 1
      %p472 = scmp.eq.s32.totalorder %s30, 1
      %p473 = scmp.ne.s32.totalorder %s468, %s470
      %p474 = scmp.eq.s32.totalorder %s30, 0
      %p475 = por %p473, %p474
      %p476 = scmp.ne.s32.totalorder %s468, %s470
      %p477 = scmp.eq.s32.totalorder %s35, 1
      %p478 = por %p476, %p477
      %p479 = scmp.ne.s32.totalorder %s470, %s471
      %p480 = scmp.eq.s32.totalorder %s35, 0
      %p481 = por %p479, %p480
      %p482 = scmp.ne.s32.totalorder %s470, %s471
      %p483 = scmp.eq.s32.totalorder %s36, 1
      %p484 = por %p482, %p483
      %p486 = scmp.ne.s32.totalorder %s471, %s485
      %p487 = scmp.eq.s32.totalorder %s36, 0
      %p488 = por %p486, %p487
      %s489 = ssub.s32 %s30, %s37
      %p490 = scmp.eq.s32.totalorder %s489, 0
      %s492 = sadd.s32 %s491, 1
      %s493 = scalar_select %p490, %s491, %s492
      %p496 = pneg %p490
      %p497 = scmp.eq.s32.totalorder %s30, 1
      %p498 = por %p496, %p497
      %p499 = scmp.ne.s32.totalorder %s491, %s494
      %p500 = scmp.eq.s32.totalorder %s30, 0
      %p501 = por %p499, %p500
      %p502 = scmp.ne.s32.totalorder %s491, %s494
      %p503 = scmp.eq.s32.totalorder %s35, 1
      %p504 = por %p502, %p503
      %p505 = scmp.ne.s32.totalorder %s494, %s495
      %p506 = scmp.eq.s32.totalorder %s35, 0
      %p507 = por %p505, %p506
      %p508 = scmp.ne.s32.totalorder %s494, %s495
      %p509 = scmp.eq.s32.totalorder %s36, 1
      %p510 = por %p508, %p509
      %p512 = scmp.ne.s32.totalorder %s495, %s511
      %p513 = scmp.eq.s32.totalorder %s36, 0
      %p514 = por %p512, %p513
      %p515 = scmp.le.s32.totalorder 1, %s30
      %p516 = scmp.lt.s32.totalorder %s30, 3
      %p517 = pnand %p515, %p516
      %p518 = pneg %p517
      // Predicated region
      $region9: #{tpu_custom_call.1} parent=5 // pred_check
        _
      $region10: #{tpu_custom_call.1} parent=5 // pred_check_branch
        %520 = sbr.rel (%p517) target = $region12
      $region11: #{tpu_custom_call.1} parent=5 // pred_region
        %s521 = ssub.s32 %s30, 1
        // Predicated region
        $region13: #{tpu_custom_call.1} parent=11 // pred_check
          %p522 = pneg %p103
        $region14: #{tpu_custom_call.1} parent=11 // pred_check_branch
          %524 = sbr.rel (%p522) target = $region16
        $region15: #{tpu_custom_call.1} parent=11 // pred_region
          _
        $region16: #{tpu_custom_call.1} parent=11 // pred_fallthru
          _
        // Predicated region
        $region17: #{tpu_custom_call.1} parent=11 // pred_check
          %p525 = pneg %p124
        $region18: #{tpu_custom_call.1} parent=11 // pred_check_branch
          %527 = sbr.rel (%p525) target = $region20
        $region19: #{tpu_custom_call.1} parent=11 // pred_region
          _
        $region20: #{tpu_custom_call.1} parent=11 // pred_fallthru
          _
        // Predicated region
        $region21: #{tpu_custom_call.1} parent=11 // pred_check
          %p528 = pneg %p145
        $region22: #{tpu_custom_call.1} parent=11 // pred_check_branch
          %530 = sbr.rel (%p528) target = $region24
        $region23: #{tpu_custom_call.1} parent=11 // pred_region
          _
        $region24: #{tpu_custom_call.1} parent=11 // pred_fallthru
          _
        // Predicated region
        $region25: #{tpu_custom_call.1} parent=11 // pred_check
          %p531 = pneg %p166
        $region26: #{tpu_custom_call.1} parent=11 // pred_check_branch
          %533 = sbr.rel (%p531) target = $region28
        $region27: #{tpu_custom_call.1} parent=11 // pred_region
          _
        $region28: #{tpu_custom_call.1} parent=11 // pred_fallthru
          _
        // Predicated region
        $region29: #{tpu_custom_call.1} parent=11 // pred_check
          %p534 = pneg %p187
        $region30: #{tpu_custom_call.1} parent=11 // pred_check_branch
          %536 = sbr.rel (%p534) target = $region32
        $region31: #{tpu_custom_call.1} parent=11 // pred_region
          _
        $region32: #{tpu_custom_call.1} parent=11 // pred_fallthru
          _
        // Predicated region
        $region33: #{tpu_custom_call.1} parent=11 // pred_check
          %p537 = pneg %p208
        $region34: #{tpu_custom_call.1} parent=11 // pred_check_branch
          %539 = sbr.rel (%p537) target = $region36
        $region35: #{tpu_custom_call.1} parent=11 // pred_region
          _
        $region36: #{tpu_custom_call.1} parent=11 // pred_fallthru
          _
        // Predicated region
        $region37: #{tpu_custom_call.1} parent=11 // pred_check
          %p540 = pneg %p229
        $region38: #{tpu_custom_call.1} parent=11 // pred_check_branch
          %542 = sbr.rel (%p540) target = $region40
        $region39: #{tpu_custom_call.1} parent=11 // pred_region
          _
        $region40: #{tpu_custom_call.1} parent=11 // pred_fallthru
          _
        // Predicated region
        $region41: #{tpu_custom_call.1} parent=11 // pred_check
          %p543 = pneg %p250
        $region42: #{tpu_custom_call.1} parent=11 // pred_check_branch
          %545 = sbr.rel (%p543) target = $region44
        $region43: #{tpu_custom_call.1} parent=11 // pred_region
          _
        $region44: #{tpu_custom_call.1} parent=11 // pred_fallthru
          _
        // Predicated region
        $region45: #{tpu_custom_call.1} parent=11 // pred_check
          %p546 = pneg %p271
        $region46: #{tpu_custom_call.1} parent=11 // pred_check_branch
          %548 = sbr.rel (%p546) target = $region48
        $region47: #{tpu_custom_call.1} parent=11 // pred_region
          _
        $region48: #{tpu_custom_call.1} parent=11 // pred_fallthru
          _
        // Predicated region
        $region49: #{tpu_custom_call.1} parent=11 // pred_check
          %p549 = pneg %p292
        $region50: #{tpu_custom_call.1} parent=11 // pred_check_branch
          %551 = sbr.rel (%p549) target = $region52
        $region51: #{tpu_custom_call.1} parent=11 // pred_region
          _
        $region52: #{tpu_custom_call.1} parent=11 // pred_fallthru
          _
        // Predicated region
        $region53: #{tpu_custom_call.1} parent=11 // pred_check
          %p552 = pneg %p313
        $region54: #{tpu_custom_call.1} parent=11 // pred_check_branch
          %554 = sbr.rel (%p552) target = $region56
        $region55: #{tpu_custom_call.1} parent=11 // pred_region
          _
        $region56: #{tpu_custom_call.1} parent=11 // pred_fallthru
          _
        // Predicated region
        $region57: #{tpu_custom_call.1} parent=11 // pred_check
          %p555 = pneg %p334
        $region58: #{tpu_custom_call.1} parent=11 // pred_check_branch
          %557 = sbr.rel (%p555) target = $region60
        $region59: #{tpu_custom_call.1} parent=11 // pred_region
          _
        $region60: #{tpu_custom_call.1} parent=11 // pred_fallthru
          _
        // Predicated region
        $region61: #{tpu_custom_call.1} parent=11 // pred_check
          %p558 = pneg %p355
        $region62: #{tpu_custom_call.1} parent=11 // pred_check_branch
          %560 = sbr.rel (%p558) target = $region64
        $region63: #{tpu_custom_call.1} parent=11 // pred_region
          _
        $region64: #{tpu_custom_call.1} parent=11 // pred_fallthru
          _
        // Predicated region
        $region65: #{tpu_custom_call.1} parent=11 // pred_check
          %p561 = pneg %p376
        $region66: #{tpu_custom_call.1} parent=11 // pred_check_branch
          %563 = sbr.rel (%p561) target = $region68
        $region67: #{tpu_custom_call.1} parent=11 // pred_region
          _
        $region68: #{tpu_custom_call.1} parent=11 // pred_fallthru
          _
        // Predicated region
        $region69: #{tpu_custom_call.1} parent=11 // pred_check
          %p564 = pneg %p397
        $region70: #{tpu_custom_call.1} parent=11 // pred_check_branch
          %566 = sbr.rel (%p564) target = $region72
        $region71: #{tpu_custom_call.1} parent=11 // pred_region
          _
        $region72: #{tpu_custom_call.1} parent=11 // pred_fallthru
          _
        // Predicated region
        $region73: #{tpu_custom_call.1} parent=11 // pred_check
          %p567 = pneg %p418
        $region74: #{tpu_custom_call.1} parent=11 // pred_check_branch
          %569 = sbr.rel (%p567) target = $region76
        $region75: #{tpu_custom_call.1} parent=11 // pred_region
          _
        $region76: #{tpu_custom_call.1} parent=11 // pred_fallthru
          _
        // Predicated region
        $region77: #{tpu_custom_call.1} parent=11 // pred_check
          %p570 = pneg %p439
        $region78: #{tpu_custom_call.1} parent=11 // pred_check_branch
          %572 = sbr.rel (%p570) target = $region80
        $region79: #{tpu_custom_call.1} parent=11 // pred_region
          _
        $region80: #{tpu_custom_call.1} parent=11 // pred_fallthru
          _
        // Predicated region
        $region81: #{tpu_custom_call.1} parent=11 // pred_check
          %p573 = pneg %p460
        $region82: #{tpu_custom_call.1} parent=11 // pred_check_branch
          %575 = sbr.rel (%p573) target = $region84
        $region83: #{tpu_custom_call.1} parent=11 // pred_region
          _
        $region84: #{tpu_custom_call.1} parent=11 // pred_fallthru
          _
        // Predicated region
        $region85: #{tpu_custom_call.1} parent=11 // pred_check
          %p576 = pneg %p481
        $region86: #{tpu_custom_call.1} parent=11 // pred_check_branch
          %578 = sbr.rel (%p576) target = $region88
        $region87: #{tpu_custom_call.1} parent=11 // pred_region
          _
        $region88: #{tpu_custom_call.1} parent=11 // pred_fallthru
          _
      $region12: #{tpu_custom_call.1} parent=5 // pred_fallthru
        _
      %p579 = scmp.lt.s32.totalorder %s30, 2
      // Predicated region
      $region89: #{tpu_custom_call.1} parent=5 // pred_check
        %p580 = pneg %p579
      $region90: #{tpu_custom_call.1} parent=5 // pred_check_branch
        %582 = sbr.rel (%p580) target = $region92
      $region91: #{tpu_custom_call.1} parent=5 // pred_region
        // Predicated region
        $region93: #{tpu_custom_call.1} parent=91 // pred_check
          %p583 = pneg %p50
        $region94: #{tpu_custom_call.1} parent=91 // pred_check_branch
          %585 = sbr.rel (%p583) target = $region96
        $region95: #{tpu_custom_call.1} parent=91 // pred_region
          %p586 = scmp.lt.s32.totalorder %s30, 1
          %s587 = scalar_select %p586, %s30, 1
          %s588 = smul.addr %s587, 4
          %s589 = smul.addr %s588, 8
          %s590 = scalar_lea.vmem %s0, %s589
        $region96: #{tpu_custom_call.1} parent=91 // pred_fallthru
          _
        // Predicated region
        $region97: #{tpu_custom_call.1} parent=91 // pred_check
          %p591 = pneg %p76
        $region98: #{tpu_custom_call.1} parent=91 // pred_check_branch
          %593 = sbr.rel (%p591) target = $region100
        $region99: #{tpu_custom_call.1} parent=91 // pred_region
          %p594 = scmp.lt.s32.totalorder %s30, 1
          %s595 = scalar_select %p594, %s30, 1
          %s596 = scalar_lea.vmem %s1, %s595
        $region100: #{tpu_custom_call.1} parent=91 // pred_fallthru
          _
      $region92: #{tpu_custom_call.1} parent=5 // pred_fallthru
        _
      %p597 = scmp.le.s32.totalorder 1, %s30
      %p598 = scmp.lt.s32.totalorder %s30, 3
      %p599 = pnand %p597, %p598
      %p600 = pneg %p599
      // Predicated region
      $region101: #{tpu_custom_call.1} parent=5 // pred_check
        _
      $region102: #{tpu_custom_call.1} parent=5 // pred_check_branch
        %602 = sbr.rel (%p599) target = $region104
      $region103: #{tpu_custom_call.1} parent=5 // pred_region
        %s603 = ssub.s32 %s30, 1
        %p604 = scmp.lt.s32.totalorder %s35, 1
        %s605 = scalar_select %p604, %s35, 1
        %s606 = smul.addr %s605, 4
        %s607 = smul.addr %s606, 8
        %s608 = scalar_lea.vmem %s0, %s607
        %p609 = pneg %p56
        %p610 = pneg %p53
        %p611 = scmp.lt.s32.totalorder %s35, 1
        %s612 = scalar_select %p611, %s35, 1
        %s613 = scalar_lea.vmem %s1, %s612
        %p614 = pneg %p82
        %p615 = pneg %p79
        %p616 = pneg %p103
        %p617 = pneg %p100
        %p618 = pneg %p124
        %p619 = pneg %p121
        %p620 = pneg %p145
        %p621 = pneg %p142
        %p622 = pneg %p166
        %p623 = pneg %p163
        %p624 = pneg %p187
        %p625 = pneg %p184
        %p626 = pneg %p208
        %p627 = pneg %p205
        %p628 = pneg %p229
        %p629 = pneg %p226
        %p630 = pneg %p250
        %p631 = pneg %p247
        %p632 = pneg %p271
        %p633 = pneg %p268
        %p634 = pneg %p292
        %p635 = pneg %p289
        %p636 = pneg %p313
        %p637 = pneg %p310
        %p638 = pneg %p334
        %p639 = pneg %p331
        %p640 = pneg %p355
        %p641 = pneg %p352
        %p642 = pneg %p376
        %p643 = pneg %p373
        %p644 = pneg %p397
        %p645 = pneg %p394
        %p646 = pneg %p418
        %p647 = pneg %p415
        %p648 = pneg %p439
        %p649 = pneg %p436
        %p650 = pneg %p460
        %p651 = pneg %p457
        %p652 = pneg %p481
        %p653 = pneg %p478
        %p654 = pneg %p507
        %p655 = pneg %p504
        %s656 = sand.u32 %s494, 1
        %s657 = scalar_lea.sflag [#allocation3], %s656
        %s658 = sand.u32 %s494, 1
        %s659 = smul.addr %s658, 64
        %s660 = scalar_lea.vmem [#allocation2], %s659
        %p661 = scmp.lt.s32.totalorder %s35, 1
        %s662 = scalar_select %p661, %s35, 1
        %s663 = smul.addr %s662, 4
        %s664 = smul.addr %s663, 8
        %s665 = scalar_lea.vmem %s0, %s664
        %p666 = scmp.lt.s32.totalorder %s35, 1
        %s667 = scalar_select %p666, %s35, 1
        %s668 = scalar_lea.vmem %s1, %s667
        %v669 = vld [vmem:[%s665] sm:$0xff]
        %v670 = vld [vmem:[%s665 + $0x8] sm:$0xff]
        %v671 = vld [vmem:[%s665 + $0x10] sm:$0xff]
        %v672 = vld [vmem:[%s665 + $0x18] sm:$0xff]
        %vm673 = vcmask 523264
        %v674 = vsel %vm673, %v669, 0.0
        %675 = vadd.xlane.f32.xlu0 %v674
        %v676 = vpop.xlane.xlu0 %675
        %v677 = vsel %vm673, %v670, 0.0
        %678 = vadd.xlane.f32.xlu0 %v677
        %v679 = vpop.xlane.xlu0 %678
        %v680 = vsel %vm673, %v671, 0.0
        %681 = vadd.xlane.f32.xlu0 %v680
        %v682 = vpop.xlane.xlu0 %681
        %v683 = vsel %vm673, %v672, 0.0
        %684 = vadd.xlane.f32.xlu0 %v683
        %v685 = vpop.xlane.xlu0 %684
        %v686 = vmul.f32 %v669, %v669
        %v687 = vmul.f32 %v670, %v670
        %v688 = vmul.f32 %v671, %v671
        %v689 = vmul.f32 %v672, %v672
        %v690 = vsel %vm673, %v686, 0.0
        %691 = vadd.xlane.f32.xlu0 %v690
        %v692 = vpop.xlane.xlu0 %691
        %v693 = vsel %vm673, %v687, 0.0
        %694 = vadd.xlane.f32.xlu0 %v693
        %v695 = vpop.xlane.xlu0 %694
        %v696 = vsel %vm673, %v688, 0.0
        %697 = vadd.xlane.f32.xlu0 %v696
        %v698 = vpop.xlane.xlu0 %697
        %v699 = vsel %vm673, %v689, 0.0
        %700 = vadd.xlane.f32.xlu0 %v699
        %v701 = vpop.xlane.xlu0 %700
        %v702 = vld [vmem:[%s3] sm:$0xff]
        %v703 = vld [vmem:[%s3 + $0x8] sm:$0xff]
        %v704 = vld [vmem:[%s3 + $0x10] sm:$0xff]
        %v705 = vld [vmem:[%s3 + $0x18] sm:$0xff]
        %vm706 = vcmask 7168
        %v707 = vsel %vm706, %v676, %v692
        %v708 = vsel %vm706, %v679, %v695
        %v709 = vsel %vm706, %v682, %v698
        %v710 = vsel %vm706, %v685, %v701
        %vm711 = vcmask 261120
        %v713 = vsel %vm711, %v702, 0
        %v716 = vsel %vm711, %v703, 0
        %v719 = vsel %vm711, %v704, 0
        %v722 = vsel %vm711, %v705, 0
        %724 = vmatpush.msra.mxu0 0.0
        %725 = vmatpush.msra.mxu0 0.0
        %726 = vmatpush.msra.mxu0 0.0
        %727 = vmatpush.msra.mxu0 0.0
        %728 = vmatpush.msra.mxu0 0.0
        %729 = vmatpush.msra.mxu0 0.0
        %730 = vmatpush.msra.mxu0 0.0
        %731 = vmatpush.msra.mxu0 0.0
        %732 = vmatpush.msra.mxu0 0.0
        %733 = vmatpush.msra.mxu0 0.0
        %734 = vmatpush.msra.mxu0 0.0
        %735 = vmatpush.msra.mxu0 0.0
        %736 = vmatpush.msra.mxu0 %v710
        %737 = vmatpush.msra.mxu0 %v709
        %738 = vmatpush.msra.mxu0 %v708
        %739 = vmatpush.msra.mxu0 %v707
        %740 = vmatmul.f32.gmra.mxu0 %v713
        %v741 = vpop.f32.mrf.mxu0
        %v742 = vadd.f32 0.0, %v741
        %743 = vmatmul.f32.gmra.mxu0 %v716
        %v744 = vpop.f32.mrf.mxu0
        %v745 = vadd.f32 0.0, %v744
        %746 = vmatmul.f32.gmra.mxu0 %v719
        %v747 = vpop.f32.mrf.mxu0
        %v748 = vadd.f32 0.0, %v747
        %749 = vmatmul.f32.gmra.mxu0 %v722
        %v750 = vpop.f32.mrf.mxu0
        %v751 = vadd.f32 0.0, %v750
        %752 = vdwg.mxu0
        %v753 = vmul.f32 %v742, %v742
        %v754 = vmul.f32 %v745, %v745
        %v755 = vmul.f32 %v748, %v748
        %v756 = vmul.f32 %v751, %v751
        %761 = vrot.lane.b32.xlu0 %v753, 1
        %v762 = vpop.permute.xlu0 %761
        %763 = vrot.lane.b32.xlu0 %v754, 1
        %v764 = vpop.permute.xlu0 %763
        %765 = vrot.lane.b32.xlu0 %v755, 1
        %v766 = vpop.permute.xlu0 %765
        %767 = vrot.lane.b32.xlu0 %v756, 1
        %v768 = vpop.permute.xlu0 %767
        %v773 = vsub.f32 %v742, %v762
        %v774 = vsub.f32 %v745, %v764
        %v775 = vsub.f32 %v748, %v766
        %v776 = vsub.f32 %v751, %v768
        %778 = vset.pattern.permute.xlu0 0
        %779 = vperm.xlu0 %778, %v742
        %v780 = vpop.permute.xlu0 %779
        %783 = vset.pattern.permute.xlu0 0
        %784 = vperm.xlu0 %783, %v745
        %v785 = vpop.permute.xlu0 %784
        %788 = vset.pattern.permute.xlu0 0
        %789 = vperm.xlu0 %788, %v748
        %v790 = vpop.permute.xlu0 %789
        %793 = vset.pattern.permute.xlu0 0
        %794 = vperm.xlu0 %793, %v751
        %v795 = vpop.permute.xlu0 %794
        %v797 = vsub.f32 %v669, %v780
        %v798 = vsub.f32 %v670, %v785
        %v799 = vsub.f32 %v671, %v790
        %v800 = vsub.f32 %v672, %v795
        %v801 = vadd.f32 %v773, 1e-05
        %v802 = vadd.f32 %v774, 1e-05
        %v803 = vadd.f32 %v775, 1e-05
        %v804 = vadd.f32 %v776, 1e-05
        %v805 = vrsqrt.pop %v801
        %v806 = vmul.f32 %v805, %v801
        %v807 = vmul.f32 %v806, %v805
        %v808 = vmul.f32 0.5, %v807
        %v809 = vsub.f32 1.5, %v808
        %v810 = vmul.f32 %v805, %v809
        %vm811 = vweird.f32 %v801
        %vm812 = vweird.f32 %v805
        %vm813 = vmor %vm811, %vm812
        %v814 = vsel %vm813, %v805, %v810
        %v815 = vrsqrt.pop %v802
        %v816 = vmul.f32 %v815, %v802
        %v817 = vmul.f32 %v816, %v815
        %v818 = vmul.f32 0.5, %v817
        %v819 = vsub.f32 1.5, %v818
        %v820 = vmul.f32 %v815, %v819
        %vm821 = vweird.f32 %v802
        %vm822 = vweird.f32 %v815
        %vm823 = vmor %vm821, %vm822
        %v824 = vsel %vm823, %v815, %v820
        %v825 = vrsqrt.pop %v803
        %v826 = vmul.f32 %v825, %v803
        %v827 = vmul.f32 %v826, %v825
        %v828 = vmul.f32 0.5, %v827
        %v829 = vsub.f32 1.5, %v828
        %v830 = vmul.f32 %v825, %v829
        %vm831 = vweird.f32 %v803
        %vm832 = vweird.f32 %v825
        %vm833 = vmor %vm831, %vm832
        %v834 = vsel %vm833, %v825, %v830
        %v835 = vrsqrt.pop %v804
        %v836 = vmul.f32 %v835, %v804
        %v837 = vmul.f32 %v836, %v835
        %v838 = vmul.f32 0.5, %v837
        %v839 = vsub.f32 1.5, %v838
        %v840 = vmul.f32 %v835, %v839
        %vm841 = vweird.f32 %v804
        %vm842 = vweird.f32 %v835
        %vm843 = vmor %vm841, %vm842
        %v844 = vsel %vm843, %v835, %v840
        %846 = vset.pattern.permute.xlu0 1
        %847 = vperm.xlu0 %846, %v814
        %v848 = vpop.permute.xlu0 %847
        %851 = vset.pattern.permute.xlu0 1
        %852 = vperm.xlu0 %851, %v824
        %v853 = vpop.permute.xlu0 %852
        %856 = vset.pattern.permute.xlu0 1
        %857 = vperm.xlu0 %856, %v834
        %v858 = vpop.permute.xlu0 %857
        %861 = vset.pattern.permute.xlu0 1
        %862 = vperm.xlu0 %861, %v844
        %v863 = vpop.permute.xlu0 %862
        %v865 = vmul.f32 %v797, %v848
        %v866 = vmul.f32 %v798, %v853
        %v867 = vmul.f32 %v799, %v858
        %v868 = vmul.f32 %v800, %v863
        %v869 = vld [vmem:[%s4] sm:$0xff]
        %v870 = vld [vmem:[%s4 + $0x8] sm:$0xff]
        %v871 = vld [vmem:[%s4 + $0x10] sm:$0xff]
        %v872 = vld [vmem:[%s4 + $0x18] sm:$0xff]
        %874 = vset.pattern.permute.xlu0 0
        %875 = vperm.xlu0 %874, %v869
        %v876 = vpop.permute.xlu0 %875
        %879 = vset.pattern.permute.xlu0 0
        %880 = vperm.xlu0 %879, %v870
        %v881 = vpop.permute.xlu0 %880
        %884 = vset.pattern.permute.xlu0 0
        %885 = vperm.xlu0 %884, %v871
        %v886 = vpop.permute.xlu0 %885
        %889 = vset.pattern.permute.xlu0 0
        %890 = vperm.xlu0 %889, %v872
        %v891 = vpop.permute.xlu0 %890
        %v893 = vmul.f32 %v865, %v876
        %v894 = vmul.f32 %v866, %v881
        %v895 = vmul.f32 %v867, %v886
        %v896 = vmul.f32 %v868, %v891
        %v897 = vld [vmem:[%s5] sm:$0xff]
        %v898 = vld [vmem:[%s5 + $0x8] sm:$0xff]
        %v899 = vld [vmem:[%s5 + $0x10] sm:$0xff]
        %v900 = vld [vmem:[%s5 + $0x18] sm:$0xff]
        %902 = vset.pattern.permute.xlu0 0
        %903 = vperm.xlu0 %902, %v897
        %v904 = vpop.permute.xlu0 %903
        %907 = vset.pattern.permute.xlu0 0
        %908 = vperm.xlu0 %907, %v898
        %v909 = vpop.permute.xlu0 %908
        %912 = vset.pattern.permute.xlu0 0
        %913 = vperm.xlu0 %912, %v899
        %v914 = vpop.permute.xlu0 %913
        %917 = vset.pattern.permute.xlu0 0
        %918 = vperm.xlu0 %917, %v900
        %v919 = vpop.permute.xlu0 %918
        %v921 = vadd.f32 %v893, %v904
        %v922 = vadd.f32 %v894, %v909
        %v923 = vadd.f32 %v895, %v914
        %v924 = vadd.f32 %v896, %v919
        %v925 = vsub.f32 0.0, %v921
        %v926 = vsub.f32 0.0, %v922
        %v927 = vsub.f32 0.0, %v923
        %v928 = vsub.f32 0.0, %v924
        %v929 = vmul.f32 %v925, 1.442695
        %v930 = vpow.pop %v929
        %v931 = vmul.f32 %v926, 1.442695
        %v932 = vpow.pop %v931
        %v933 = vmul.f32 %v927, 1.442695
        %v934 = vpow.pop %v933
        %v935 = vmul.f32 %v928, 1.442695
        %v936 = vpow.pop %v935
        %v937 = vadd.f32 %v930, 1.0
        %v938 = vadd.f32 %v932, 1.0
        %v939 = vadd.f32 %v934, 1.0
        %v940 = vadd.f32 %v936, 1.0
        %v941 = vrcp.pop %v937
        %v942 = vmul.f32 %v937, %v941
        %v943 = vsub.f32 1.0, %v942
        %v944 = vmul.f32 %v941, %v943
        %v945 = vadd.f32 %v941, %v944
        %vm946 = vweird.f32 %v937
        %vm947 = vweird.f32 %v941
        %vm948 = vmor %vm946, %vm947
        %v949 = vsel %vm948, %v941, %v945
        %v950 = vand.u32 2147483647, %v937
        %vm951 = vcmp.eq.f32.partialorder %v950, 8.507059e+37
        %v952 = vand.u32 %v937, 2147483648
        %v953 = vor.u32 1.1754944e-38, %v952
        %v954 = vsel %vm951, %v953, %v949
        %v955 = vmul.f32 1.0, %v954
        %v956 = vrcp.pop %v938
        %v957 = vmul.f32 %v938, %v956
        %v958 = vsub.f32 1.0, %v957
        %v959 = vmul.f32 %v956, %v958
        %v960 = vadd.f32 %v956, %v959
        %vm961 = vweird.f32 %v938
        %vm962 = vweird.f32 %v956
        %vm963 = vmor %vm961, %vm962
        %v964 = vsel %vm963, %v956, %v960
        %v965 = vand.u32 2147483647, %v938
        %vm966 = vcmp.eq.f32.partialorder %v965, 8.507059e+37
        %v967 = vand.u32 %v938, 2147483648
        %v968 = vor.u32 1.1754944e-38, %v967
        %v969 = vsel %vm966, %v968, %v964
        %v970 = vmul.f32 1.0, %v969
        %v971 = vrcp.pop %v939
        %v972 = vmul.f32 %v939, %v971
        %v973 = vsub.f32 1.0, %v972
        %v974 = vmul.f32 %v971, %v973
        %v975 = vadd.f32 %v971, %v974
        %vm976 = vweird.f32 %v939
        %vm977 = vweird.f32 %v971
        %vm978 = vmor %vm976, %vm977
        %v979 = vsel %vm978, %v971, %v975
        %v980 = vand.u32 2147483647, %v939
        %vm981 = vcmp.eq.f32.partialorder %v980, 8.507059e+37
        %v982 = vand.u32 %v939, 2147483648
        %v983 = vor.u32 1.1754944e-38, %v982
        %v984 = vsel %vm981, %v983, %v979
        %v985 = vmul.f32 1.0, %v984
        %v986 = vrcp.pop %v940
        %v987 = vmul.f32 %v940, %v986
        %v988 = vsub.f32 1.0, %v987
        %v989 = vmul.f32 %v986, %v988
        %v990 = vadd.f32 %v986, %v989
        %vm991 = vweird.f32 %v940
        %vm992 = vweird.f32 %v986
        %vm993 = vmor %vm991, %vm992
        %v994 = vsel %vm993, %v986, %v990
        %v995 = vand.u32 2147483647, %v940
        %vm996 = vcmp.eq.f32.partialorder %v995, 8.507059e+37
        %v997 = vand.u32 %v940, 2147483648
        %v998 = vor.u32 1.1754944e-38, %v997
        %v999 = vsel %vm996, %v998, %v994
        %v1000 = vmul.f32 1.0, %v999
        %v1001 = vmul.f32 %v921, %v955
        %v1002 = vmul.f32 %v922, %v970
        %v1003 = vmul.f32 %v923, %v985
        %v1004 = vmul.f32 %v924, %v1000
        %v1005 = vld [vmem:[%s8] sm:$0xff]
        %v1006 = vld [vmem:[%s8 + $0x8] sm:$0xff]
        %v1007 = vld [vmem:[%s8 + $0x10] sm:$0xff]
        %v1008 = vld [vmem:[%s8 + $0x18] sm:$0xff]
        %v1009 = vld [vmem:[%s8 + $0x20] sm:$0xff]
        %v1010 = vld [vmem:[%s8 + $0x28] sm:$0xff]
        %v1011 = vld [vmem:[%s8 + $0x30] sm:$0xff]
        %v1012 = vld [vmem:[%s8 + $0x38] sm:$0xff]
        %v1013 = vld [vmem:[%s668] sm:$0x1]
        %v1015 = vperm.slane %v1013, 0
        %v1017 = vmul.f32 %v1005, %v1015
        %v1018 = vmul.f32 %v1006, %v1015
        %v1019 = vmul.f32 %v1007, %v1015
        %v1020 = vmul.f32 %v1008, %v1015
        %v1021 = vmul.f32 %v1009, %v1015
        %v1022 = vmul.f32 %v1010, %v1015
        %v1023 = vmul.f32 %v1011, %v1015
        %v1024 = vmul.f32 %v1012, %v1015
        %v1025 = vsel %vm711, %v1017, 0.0
        %1026 = vadd.xlane.f32.xlu0 %v1025
        %v1027 = vpop.xlane.xlu0 %1026
        %v1028 = vsel %vm711, %v1018, 0.0
        %1029 = vadd.xlane.f32.xlu0 %v1028
        %v1030 = vpop.xlane.xlu0 %1029
        %v1031 = vsel %vm711, %v1019, 0.0
        %1032 = vadd.xlane.f32.xlu0 %v1031
        %v1033 = vpop.xlane.xlu0 %1032
        %v1034 = vsel %vm711, %v1020, 0.0
        %1035 = vadd.xlane.f32.xlu0 %v1034
        %v1036 = vpop.xlane.xlu0 %1035
        %v1037 = vsel %vm711, %v1021, 0.0
        %1038 = vadd.xlane.f32.xlu0 %v1037
        %v1039 = vpop.xlane.xlu0 %1038
        %v1040 = vsel %vm711, %v1022, 0.0
        %1041 = vadd.xlane.f32.xlu0 %v1040
        %v1042 = vpop.xlane.xlu0 %1041
        %v1043 = vsel %vm711, %v1023, 0.0
        %1044 = vadd.xlane.f32.xlu0 %v1043
        %v1045 = vpop.xlane.xlu0 %1044
        %v1046 = vsel %vm711, %v1024, 0.0
        %1047 = vadd.xlane.f32.xlu0 %v1046
        %v1048 = vpop.xlane.xlu0 %1047
        %v1049 = vld [vmem:[%s9] sm:$0xff]
        %v1050 = vld [vmem:[%s9 + $0x8] sm:$0xff]
        %v1051 = vld [vmem:[%s9 + $0x10] sm:$0xff]
        %v1052 = vld [vmem:[%s9 + $0x18] sm:$0xff]
        %v1053 = vld [vmem:[%s9 + $0x20] sm:$0xff]
        %v1054 = vld [vmem:[%s9 + $0x28] sm:$0xff]
        %v1055 = vld [vmem:[%s9 + $0x30] sm:$0xff]
        %v1056 = vld [vmem:[%s9 + $0x38] sm:$0xff]
        %v1057 = vadd.f32 %v1027, %v1049
        %v1058 = vadd.f32 %v1030, %v1050
        %v1059 = vadd.f32 %v1033, %v1051
        %v1060 = vadd.f32 %v1036, %v1052
        %v1061 = vadd.f32 %v1039, %v1053
        %v1062 = vadd.f32 %v1042, %v1054
        %v1063 = vadd.f32 %v1045, %v1055
        %v1064 = vadd.f32 %v1048, %v1056
        %1069 = vrot.lane.b32.xlu0 %v1001, 9
        %v1070 = vpop.permute.xlu0 %1069
        %1071 = vrot.lane.b32.xlu0 %v1002, 9
        %v1072 = vpop.permute.xlu0 %1071
        %1073 = vrot.lane.b32.xlu0 %v1003, 9
        %v1074 = vpop.permute.xlu0 %1073
        %1075 = vrot.lane.b32.xlu0 %v1004, 9
        %v1076 = vpop.permute.xlu0 %1075
        %vm1081 = vcmask 72704
        %v1082 = vsel %vm1081, 0.0, %v1070
        %v1083 = vsel %vm1081, 0.0, %v1072
        %v1084 = vsel %vm1081, 0.0, %v1074
        %v1085 = vsel %vm1081, 0.0, %v1076
        %v1086 = vld [vmem:[%s2] sm:$0x1]
        %v1088 = vperm.slane %v1086, 0
        %v1090 = vmul.f32 %v1082, %v1088
        %v1091 = vmul.f32 %v1083, %v1088
        %v1092 = vmul.f32 %v1084, %v1088
        %v1093 = vmul.f32 %v1085, %v1088
        %1094 = vrot.lane.b32.xlu0 %v1001, 8
        %v1095 = vpop.permute.xlu0 %1094
        %1096 = vrot.lane.b32.xlu0 %v1002, 8
        %v1097 = vpop.permute.xlu0 %1096
        %1098 = vrot.lane.b32.xlu0 %v1003, 8
        %v1099 = vpop.permute.xlu0 %1098
        %1100 = vrot.lane.b32.xlu0 %v1004, 8
        %v1101 = vpop.permute.xlu0 %1100
        %vm1106 = vcmask 64512
        %v1107 = vsel %vm1106, 0.0, %v1095
        %v1108 = vsel %vm1106, 0.0, %v1097
        %v1109 = vsel %vm1106, 0.0, %v1099
        %v1110 = vsel %vm1106, 0.0, %v1101
        %s1111 = scalar_lea.vmem %s2, 1
        %v1112 = vld [vmem:[%s1111] sm:$0x1]
        %v1114 = vperm.slane %v1112, 0
        %v1116 = vmul.f32 %v1107, %v1114
        %v1117 = vmul.f32 %v1108, %v1114
        %v1118 = vmul.f32 %v1109, %v1114
        %v1119 = vmul.f32 %v1110, %v1114
        %1120 = vrot.lane.b32.xlu0 %v1001, 7
        %v1121 = vpop.permute.xlu0 %1120
        %1122 = vrot.lane.b32.xlu0 %v1002, 7
        %v1123 = vpop.permute.xlu0 %1122
        %1124 = vrot.lane.b32.xlu0 %v1003, 7
        %v1125 = vpop.permute.xlu0 %1124
        %1126 = vrot.lane.b32.xlu0 %v1004, 7
        %v1127 = vpop.permute.xlu0 %1126
        %vm1132 = vcmask 56320
        %v1133 = vsel %vm1132, 0.0, %v1121
        %v1134 = vsel %vm1132, 0.0, %v1123
        %v1135 = vsel %vm1132, 0.0, %v1125
        %v1136 = vsel %vm1132, 0.0, %v1127
        %s1137 = scalar_lea.vmem %s2, 2
        %v1138 = vld [vmem:[%s1137] sm:$0x1]
        %v1140 = vperm.slane %v1138, 0
        %v1142 = vmul.f32 %v1133, %v1140
        %v1143 = vmul.f32 %v1134, %v1140
        %v1144 = vmul.f32 %v1135, %v1140
        %v1145 = vmul.f32 %v1136, %v1140
        %1146 = vrot.lane.b32.xlu0 %v1001, 1
        %v1147 = vpop.permute.xlu0 %1146
        %1148 = vrot.lane.b32.xlu0 %v1002, 1
        %v1149 = vpop.permute.xlu0 %1148
        %1150 = vrot.lane.b32.xlu0 %v1003, 1
        %v1151 = vpop.permute.xlu0 %1150
        %1152 = vrot.lane.b32.xlu0 %v1004, 1
        %v1153 = vpop.permute.xlu0 %1152
        %v1158 = vsel %vm706, 0.0, %v1147
        %v1159 = vsel %vm706, 0.0, %v1149
        %v1160 = vsel %vm706, 0.0, %v1151
        %v1161 = vsel %vm706, 0.0, %v1153
        %s1162 = scalar_lea.vmem %s2, 3
        %v1163 = vld [vmem:[%s1162] sm:$0x1]
        %v1165 = vperm.slane %v1163, 0
        %v1167 = vmul.f32 %v1158, %v1165
        %v1168 = vmul.f32 %v1159, %v1165
        %v1169 = vmul.f32 %v1160, %v1165
        %v1170 = vmul.f32 %v1161, %v1165
        %s1171 = scalar_lea.vmem %s2, 4
        %v1172 = vld [vmem:[%s1171] sm:$0x1]
        %v1174 = vperm.slane %v1172, 0
        %v1176 = vmul.f32 %v1001, %v1174
        %v1177 = vmul.f32 %v1002, %v1174
        %v1178 = vmul.f32 %v1003, %v1174
        %v1179 = vmul.f32 %v1004, %v1174
        %1180 = vrot.lane.b32.xlu0 %v1001, 127
        %v1181 = vpop.permute.xlu0 %1180
        %1182 = vrot.lane.b32.xlu0 %v1002, 127
        %v1183 = vpop.permute.xlu0 %1182
        %1184 = vrot.lane.b32.xlu0 %v1003, 127
        %v1185 = vpop.permute.xlu0 %1184
        %1186 = vrot.lane.b32.xlu0 %v1004, 127
        %v1187 = vpop.permute.xlu0 %1186
        %vm1192 = vcmask 515072
        %v1193 = vsel %vm1192, %v1181, 0.0
        %v1194 = vsel %vm1192, %v1183, 0.0
        %v1195 = vsel %vm1192, %v1185, 0.0
        %v1196 = vsel %vm1192, %v1187, 0.0
        %s1197 = scalar_lea.vmem %s2, 5
        %v1198 = vld [vmem:[%s1197] sm:$0x1]
        %v1200 = vperm.slane %v1198, 0
        %v1202 = vmul.f32 %v1193, %v1200
        %v1203 = vmul.f32 %v1194, %v1200
        %v1204 = vmul.f32 %v1195, %v1200
        %v1205 = vmul.f32 %v1196, %v1200
        %1206 = vrot.lane.b32.xlu0 %v1001, 121
        %v1207 = vpop.permute.xlu0 %1206
        %1208 = vrot.lane.b32.xlu0 %v1002, 121
        %v1209 = vpop.permute.xlu0 %1208
        %1210 = vrot.lane.b32.xlu0 %v1003, 121
        %v1211 = vpop.permute.xlu0 %1210
        %1212 = vrot.lane.b32.xlu0 %v1004, 121
        %v1213 = vpop.permute.xlu0 %1212
        %vm1218 = vcmask 465920
        %v1219 = vsel %vm1218, %v1207, 0.0
        %v1220 = vsel %vm1218, %v1209, 0.0
        %v1221 = vsel %vm1218, %v1211, 0.0
        %v1222 = vsel %vm1218, %v1213, 0.0
        %s1223 = scalar_lea.vmem %s2, 6
        %v1224 = vld [vmem:[%s1223] sm:$0x1]
        %v1226 = vperm.slane %v1224, 0
        %v1228 = vmul.f32 %v1219, %v1226
        %v1229 = vmul.f32 %v1220, %v1226
        %v1230 = vmul.f32 %v1221, %v1226
        %v1231 = vmul.f32 %v1222, %v1226
        %1232 = vrot.lane.b32.xlu0 %v1001, 120
        %v1233 = vpop.permute.xlu0 %1232
        %1234 = vrot.lane.b32.xlu0 %v1002, 120
        %v1235 = vpop.permute.xlu0 %1234
        %1236 = vrot.lane.b32.xlu0 %v1003, 120
        %v1237 = vpop.permute.xlu0 %1236
        %1238 = vrot.lane.b32.xlu0 %v1004, 120
        %v1239 = vpop.permute.xlu0 %1238
        %vm1244 = vcmask 457728
        %v1245 = vsel %vm1244, %v1233, 0.0
        %v1246 = vsel %vm1244, %v1235, 0.0
        %v1247 = vsel %vm1244, %v1237, 0.0
        %v1248 = vsel %vm1244, %v1239, 0.0
        %s1249 = scalar_lea.vmem %s2, 7
        %v1250 = vld [vmem:[%s1249] sm:$0x1]
        %v1252 = vperm.slane %v1250, 0
        %v1254 = vmul.f32 %v1245, %v1252
        %v1255 = vmul.f32 %v1246, %v1252
        %v1256 = vmul.f32 %v1247, %v1252
        %v1257 = vmul.f32 %v1248, %v1252
        %1258 = vrot.lane.b32.xlu0 %v1001, 119
        %v1259 = vpop.permute.xlu0 %1258
        %1260 = vrot.lane.b32.xlu0 %v1002, 119
        %v1261 = vpop.permute.xlu0 %1260
        %1262 = vrot.lane.b32.xlu0 %v1003, 119
        %v1263 = vpop.permute.xlu0 %1262
        %1264 = vrot.lane.b32.xlu0 %v1004, 119
        %v1265 = vpop.permute.xlu0 %1264
        %vm1270 = vcmask 449536
        %v1271 = vsel %vm1270, %v1259, 0.0
        %v1272 = vsel %vm1270, %v1261, 0.0
        %v1273 = vsel %vm1270, %v1263, 0.0
        %v1274 = vsel %vm1270, %v1265, 0.0
        %s1275 = scalar_lea.vmem %s2, 8
        %v1276 = vld [vmem:[%s1275] sm:$0x1]
        %v1278 = vperm.slane %v1276, 0
        %v1280 = vmul.f32 %v1271, %v1278
        %v1281 = vmul.f32 %v1272, %v1278
        %v1282 = vmul.f32 %v1273, %v1278
        %v1283 = vmul.f32 %v1274, %v1278
        %v1284 = vld [vmem:[%s6] sm:$0xff]
        %v1285 = vld [vmem:[%s6 + $0x8] sm:$0xff]
        %v1286 = vld [vmem:[%s6 + $0x10] sm:$0xff]
        %v1287 = vld [vmem:[%s6 + $0x18] sm:$0xff]
        %v1288 = vld [vmem:[%s6 + $0x20] sm:$0xff]
        %v1289 = vld [vmem:[%s6 + $0x28] sm:$0xff]
        %v1290 = vld [vmem:[%s6 + $0x30] sm:$0xff]
        %v1291 = vld [vmem:[%s6 + $0x38] sm:$0xff]
        %v1292 = vld [vmem:[%s6 + $0x40] sm:$0xff]
        %v1293 = vld [vmem:[%s6 + $0x48] sm:$0xff]
        %v1294 = vld [vmem:[%s6 + $0x50] sm:$0xff]
        %v1295 = vld [vmem:[%s6 + $0x58] sm:$0xff]
        %v1296 = vld [vmem:[%s6 + $0x60] sm:$0xff]
        %v1297 = vld [vmem:[%s6 + $0x68] sm:$0xff]
        %v1298 = vld [vmem:[%s6 + $0x70] sm:$0xff]
        %v1299 = vld [vmem:[%s6 + $0x78] sm:$0xff]
        %v1300 = vld [vmem:[%s6 + $0x80] sm:$0xff]
        %v1301 = vld [vmem:[%s6 + $0x88] sm:$0xff]
        %v1302 = vld [vmem:[%s6 + $0x90] sm:$0xff]
        %v1303 = vld [vmem:[%s6 + $0x98] sm:$0xff]
        %v1304 = vld [vmem:[%s6 + $0xa0] sm:$0xff]
        %v1305 = vld [vmem:[%s6 + $0xa8] sm:$0xff]
        %v1306 = vld [vmem:[%s6 + $0xb0] sm:$0xff]
        %v1307 = vld [vmem:[%s6 + $0xb8] sm:$0xff]
        %v1308 = vld [vmem:[%s7] sm:$0xff]
        %v1309 = vld [vmem:[%s7 + $0x8] sm:$0xff]
        %v1310 = vld [vmem:[%s7 + $0x10] sm:$0xff]
        %v1311 = vld [vmem:[%s7 + $0x18] sm:$0xff]
        %v1312 = vld [vmem:[%s7 + $0x20] sm:$0xff]
        %v1313 = vld [vmem:[%s7 + $0x28] sm:$0xff]
        %v1314 = vld [vmem:[%s7 + $0x30] sm:$0xff]
        %v1315 = vld [vmem:[%s7 + $0x38] sm:$0xff]
        %1317 = vset.pattern.permute.xlu0 0
        %1318 = vperm.xlu0 %1317, %v1308
        %v1319 = vpop.permute.xlu0 %1318
        %1322 = vset.pattern.permute.xlu0 0
        %1323 = vperm.xlu0 %1322, %v1309
        %v1324 = vpop.permute.xlu0 %1323
        %1327 = vset.pattern.permute.xlu0 0
        %1328 = vperm.xlu0 %1327, %v1310
        %v1329 = vpop.permute.xlu0 %1328
        %1332 = vset.pattern.permute.xlu0 0
        %1333 = vperm.xlu0 %1332, %v1311
        %v1334 = vpop.permute.xlu0 %1333
        %1337 = vset.pattern.permute.xlu0 0
        %1338 = vperm.xlu0 %1337, %v1312
        %v1339 = vpop.permute.xlu0 %1338
        %1342 = vset.pattern.permute.xlu0 0
        %1343 = vperm.xlu0 %1342, %v1313
        %v1344 = vpop.permute.xlu0 %1343
        %1347 = vset.pattern.permute.xlu0 0
        %1348 = vperm.xlu0 %1347, %v1314
        %v1349 = vpop.permute.xlu0 %1348
        %1352 = vset.pattern.permute.xlu0 0
        %1353 = vperm.xlu0 %1352, %v1315
        %v1354 = vpop.permute.xlu0 %1353
        %v1357 = vsel %vm711, %v1286, 0
        %v1360 = vsel %vm711, %v1289, 0
        %v1363 = vsel %vm711, %v1292, 0
        %v1366 = vsel %vm711, %v1295, 0
        %v1369 = vsel %vm711, %v1298, 0
        %v1372 = vsel %vm711, %v1301, 0
        %v1375 = vsel %vm711, %v1304, 0
        %v1378 = vsel %vm711, %v1307, 0
        %1380 = vmatpush.msra.mxu0 %v1170
        %1381 = vmatpush.msra.mxu0 %v1169
        %1382 = vmatpush.msra.mxu0 %v1168
        %1383 = vmatpush.msra.mxu0 %v1167
        %1384 = vmatpush.msra.mxu0 %v1145
        %1385 = vmatpush.msra.mxu0 %v1144
        %1386 = vmatpush.msra.mxu0 %v1143
        %1387 = vmatpush.msra.mxu0 %v1142
        %1388 = vmatpush.msra.mxu0 %v1119
        %1389 = vmatpush.msra.mxu0 %v1118
        %1390 = vmatpush.msra.mxu0 %v1117
        %1391 = vmatpush.msra.mxu0 %v1116
        %1392 = vmatpush.msra.mxu0 %v1093
        %1393 = vmatpush.msra.mxu0 %v1092
        %1394 = vmatpush.msra.mxu0 %v1091
        %1395 = vmatpush.msra.mxu0 %v1090
        %1396 = vmatmul.f32.gmra.mxu0 %v1284
        %v1397 = vpop.f32.mrf.mxu0
        %v1398 = vadd.f32 %v1319, %v1397
        %1399 = vmatmul.f32.gmra.mxu0 %v1287
        %v1400 = vpop.f32.mrf.mxu0
        %v1401 = vadd.f32 %v1324, %v1400
        %1402 = vmatmul.f32.gmra.mxu0 %v1290
        %v1403 = vpop.f32.mrf.mxu0
        %v1404 = vadd.f32 %v1329, %v1403
        %1405 = vmatmul.f32.gmra.mxu0 %v1293
        %v1406 = vpop.f32.mrf.mxu0
        %v1407 = vadd.f32 %v1334, %v1406
        %1408 = vmatmul.f32.gmra.mxu0 %v1296
        %v1409 = vpop.f32.mrf.mxu0
        %v1410 = vadd.f32 %v1339, %v1409
        %1411 = vmatmul.f32.gmra.mxu0 %v1299
        %v1412 = vpop.f32.mrf.mxu0
        %v1413 = vadd.f32 %v1344, %v1412
        %1414 = vmatmul.f32.gmra.mxu0 %v1302
        %v1415 = vpop.f32.mrf.mxu0
        %v1416 = vadd.f32 %v1349, %v1415
        %1417 = vmatmul.f32.gmra.mxu0 %v1305
        %v1418 = vpop.f32.mrf.mxu0
        %v1419 = vadd.f32 %v1354, %v1418
        %1420 = vdwg.mxu0
        %1421 = vmatpush.msra.mxu0 %v1257
        %1422 = vmatpush.msra.mxu0 %v1256
        %1423 = vmatpush.msra.mxu0 %v1255
        %1424 = vmatpush.msra.mxu0 %v1254
        %1425 = vmatpush.msra.mxu0 %v1231
        %1426 = vmatpush.msra.mxu0 %v1230
        %1427 = vmatpush.msra.mxu0 %v1229
        %1428 = vmatpush.msra.mxu0 %v1228
        %1429 = vmatpush.msra.mxu0 %v1205
        %1430 = vmatpush.msra.mxu0 %v1204
        %1431 = vmatpush.msra.mxu0 %v1203
        %1432 = vmatpush.msra.mxu0 %v1202
        %1433 = vmatpush.msra.mxu0 %v1179
        %1434 = vmatpush.msra.mxu0 %v1178
        %1435 = vmatpush.msra.mxu0 %v1177
        %1436 = vmatpush.msra.mxu0 %v1176
        %1437 = vmatmul.f32.gmra.mxu0 %v1285
        %v1438 = vpop.f32.mrf.mxu0
        %v1439 = vadd.f32 %v1398, %v1438
        %1440 = vmatmul.f32.gmra.mxu0 %v1288
        %v1441 = vpop.f32.mrf.mxu0
        %v1442 = vadd.f32 %v1401, %v1441
        %1443 = vmatmul.f32.gmra.mxu0 %v1291
        %v1444 = vpop.f32.mrf.mxu0
        %v1445 = vadd.f32 %v1404, %v1444
        %1446 = vmatmul.f32.gmra.mxu0 %v1294
        %v1447 = vpop.f32.mrf.mxu0
        %v1448 = vadd.f32 %v1407, %v1447
        %1449 = vmatmul.f32.gmra.mxu0 %v1297
        %v1450 = vpop.f32.mrf.mxu0
        %v1451 = vadd.f32 %v1410, %v1450
        %1452 = vmatmul.f32.gmra.mxu0 %v1300
        %v1453 = vpop.f32.mrf.mxu0
        %v1454 = vadd.f32 %v1413, %v1453
        %1455 = vmatmul.f32.gmra.mxu0 %v1303
        %v1456 = vpop.f32.mrf.mxu0
        %v1457 = vadd.f32 %v1416, %v1456
        %1458 = vmatmul.f32.gmra.mxu0 %v1306
        %v1459 = vpop.f32.mrf.mxu0
        %v1460 = vadd.f32 %v1419, %v1459
        %1461 = vdwg.mxu0
        %1462 = vmatpush.msra.mxu0 0.0
        %1463 = vmatpush.msra.mxu0 0.0
        %1464 = vmatpush.msra.mxu0 0.0
        %1465 = vmatpush.msra.mxu0 0.0
        %1466 = vmatpush.msra.mxu0 0.0
        %1467 = vmatpush.msra.mxu0 0.0
        %1468 = vmatpush.msra.mxu0 0.0
        %1469 = vmatpush.msra.mxu0 0.0
        %1470 = vmatpush.msra.mxu0 0.0
        %1471 = vmatpush.msra.mxu0 0.0
        %1472 = vmatpush.msra.mxu0 0.0
        %1473 = vmatpush.msra.mxu0 0.0
        %1474 = vmatpush.msra.mxu0 %v1283
        %1475 = vmatpush.msra.mxu0 %v1282
        %1476 = vmatpush.msra.mxu0 %v1281
        %1477 = vmatpush.msra.mxu0 %v1280
        %1478 = vmatmul.f32.gmra.mxu0 %v1357
        %v1479 = vpop.f32.mrf.mxu0
        %v1480 = vadd.f32 %v1439, %v1479
        %1481 = vmatmul.f32.gmra.mxu0 %v1360
        %v1482 = vpop.f32.mrf.mxu0
        %v1483 = vadd.f32 %v1442, %v1482
        %1484 = vmatmul.f32.gmra.mxu0 %v1363
        %v1485 = vpop.f32.mrf.mxu0
        %v1486 = vadd.f32 %v1445, %v1485
        %1487 = vmatmul.f32.gmra.mxu0 %v1366
        %v1488 = vpop.f32.mrf.mxu0
        %v1489 = vadd.f32 %v1448, %v1488
        %1490 = vmatmul.f32.gmra.mxu0 %v1369
        %v1491 = vpop.f32.mrf.mxu0
        %v1492 = vadd.f32 %v1451, %v1491
        %1493 = vmatmul.f32.gmra.mxu0 %v1372
        %v1494 = vpop.f32.mrf.mxu0
        %v1495 = vadd.f32 %v1454, %v1494
        %1496 = vmatmul.f32.gmra.mxu0 %v1375
        %v1497 = vpop.f32.mrf.mxu0
        %v1498 = vadd.f32 %v1457, %v1497
        %1499 = vmatmul.f32.gmra.mxu0 %v1378
        %v1500 = vpop.f32.mrf.mxu0
        %v1501 = vadd.f32 %v1460, %v1500
        %1502 = vdwg.mxu0
        %1504 = vset.pattern.permute.xlu0 0
        %1505 = vperm.xlu0 %1504, %v1057
        %v1506 = vpop.permute.xlu0 %1505
        %1509 = vset.pattern.permute.xlu0 0
        %1510 = vperm.xlu0 %1509, %v1058
        %v1511 = vpop.permute.xlu0 %1510
        %1514 = vset.pattern.permute.xlu0 0
        %1515 = vperm.xlu0 %1514, %v1059
        %v1516 = vpop.permute.xlu0 %1515
        %1519 = vset.pattern.permute.xlu0 0
        %1520 = vperm.xlu0 %1519, %v1060
        %v1521 = vpop.permute.xlu0 %1520
        %1524 = vset.pattern.permute.xlu0 0
        %1525 = vperm.xlu0 %1524, %v1061
        %v1526 = vpop.permute.xlu0 %1525
        %1529 = vset.pattern.permute.xlu0 0
        %1530 = vperm.xlu0 %1529, %v1062
        %v1531 = vpop.permute.xlu0 %1530
        %1534 = vset.pattern.permute.xlu0 0
        %1535 = vperm.xlu0 %1534, %v1063
        %v1536 = vpop.permute.xlu0 %1535
        %1539 = vset.pattern.permute.xlu0 0
        %1540 = vperm.xlu0 %1539, %v1064
        %v1541 = vpop.permute.xlu0 %1540
        %v1543 = vadd.f32 %v1480, %v1506
        %v1544 = vadd.f32 %v1483, %v1511
        %v1545 = vadd.f32 %v1486, %v1516
        %v1546 = vadd.f32 %v1489, %v1521
        %v1547 = vadd.f32 %v1492, %v1526
        %v1548 = vadd.f32 %v1495, %v1531
        %v1549 = vadd.f32 %v1498, %v1536
        %v1550 = vadd.f32 %v1501, %v1541
        %v1551 = vsel %vm673, %v1543, 0.0
        %1552 = vadd.xlane.f32.xlu0 %v1551
        %v1553 = vpop.xlane.xlu0 %1552
        %v1554 = vsel %vm673, %v1544, 0.0
        %1555 = vadd.xlane.f32.xlu0 %v1554
        %v1556 = vpop.xlane.xlu0 %1555
        %v1557 = vsel %vm673, %v1545, 0.0
        %1558 = vadd.xlane.f32.xlu0 %v1557
        %v1559 = vpop.xlane.xlu0 %1558
        %v1560 = vsel %vm673, %v1546, 0.0
        %1561 = vadd.xlane.f32.xlu0 %v1560
        %v1562 = vpop.xlane.xlu0 %1561
        %v1563 = vsel %vm673, %v1547, 0.0
        %1564 = vadd.xlane.f32.xlu0 %v1563
        %v1565 = vpop.xlane.xlu0 %1564
        %v1566 = vsel %vm673, %v1548, 0.0
        %1567 = vadd.xlane.f32.xlu0 %v1566
        %v1568 = vpop.xlane.xlu0 %1567
        %v1569 = vsel %vm673, %v1549, 0.0
        %1570 = vadd.xlane.f32.xlu0 %v1569
        %v1571 = vpop.xlane.xlu0 %1570
        %v1572 = vsel %vm673, %v1550, 0.0
        %1573 = vadd.xlane.f32.xlu0 %v1572
        %v1574 = vpop.xlane.xlu0 %1573
        %v1575 = vmul.f32 %v1543, %v1543
        %v1576 = vmul.f32 %v1544, %v1544
        %v1577 = vmul.f32 %v1545, %v1545
        %v1578 = vmul.f32 %v1546, %v1546
        %v1579 = vmul.f32 %v1547, %v1547
        %v1580 = vmul.f32 %v1548, %v1548
        %v1581 = vmul.f32 %v1549, %v1549
        %v1582 = vmul.f32 %v1550, %v1550
        %v1583 = vsel %vm673, %v1575, 0.0
        %1584 = vadd.xlane.f32.xlu0 %v1583
        %v1585 = vpop.xlane.xlu0 %1584
        %v1586 = vsel %vm673, %v1576, 0.0
        %1587 = vadd.xlane.f32.xlu0 %v1586
        %v1588 = vpop.xlane.xlu0 %1587
        %v1589 = vsel %vm673, %v1577, 0.0
        %1590 = vadd.xlane.f32.xlu0 %v1589
        %v1591 = vpop.xlane.xlu0 %1590
        %v1592 = vsel %vm673, %v1578, 0.0
        %1593 = vadd.xlane.f32.xlu0 %v1592
        %v1594 = vpop.xlane.xlu0 %1593
        %v1595 = vsel %vm673, %v1579, 0.0
        %1596 = vadd.xlane.f32.xlu0 %v1595
        %v1597 = vpop.xlane.xlu0 %1596
        %v1598 = vsel %vm673, %v1580, 0.0
        %1599 = vadd.xlane.f32.xlu0 %v1598
        %v1600 = vpop.xlane.xlu0 %1599
        %v1601 = vsel %vm673, %v1581, 0.0
        %1602 = vadd.xlane.f32.xlu0 %v1601
        %v1603 = vpop.xlane.xlu0 %1602
        %v1604 = vsel %vm673, %v1582, 0.0
        %1605 = vadd.xlane.f32.xlu0 %v1604
        %v1606 = vpop.xlane.xlu0 %1605
        %v1607 = vld [vmem:[%s10] sm:$0xff]
        %v1608 = vld [vmem:[%s10 + $0x8] sm:$0xff]
        %v1609 = vld [vmem:[%s10 + $0x10] sm:$0xff]
        %v1610 = vld [vmem:[%s10 + $0x18] sm:$0xff]
        %v1611 = vld [vmem:[%s10 + $0x20] sm:$0xff]
        %v1612 = vld [vmem:[%s10 + $0x28] sm:$0xff]
        %v1613 = vld [vmem:[%s10 + $0x30] sm:$0xff]
        %v1614 = vld [vmem:[%s10 + $0x38] sm:$0xff]
        %v1615 = vsel %vm706, %v1553, %v1585
        %v1616 = vsel %vm706, %v1556, %v1588
        %v1617 = vsel %vm706, %v1559, %v1591
        %v1618 = vsel %vm706, %v1562, %v1594
        %v1619 = vsel %vm706, %v1565, %v1597
        %v1620 = vsel %vm706, %v1568, %v1600
        %v1621 = vsel %vm706, %v1571, %v1603
        %v1622 = vsel %vm706, %v1574, %v1606
        %v1624 = vsel %vm673, %v1607, 0
        %v1627 = vsel %vm673, %v1608, 0
        %v1630 = vsel %vm673, %v1609, 0
        %v1633 = vsel %vm673, %v1610, 0
        %v1636 = vsel %vm673, %v1611, 0
        %v1639 = vsel %vm673, %v1612, 0
        %v1642 = vsel %vm673, %v1613, 0
        %v1645 = vsel %vm673, %v1614, 0
        %1647 = vmatpush.msra.mxu0 0.0
        %1648 = vmatpush.msra.mxu0 0.0
        %1649 = vmatpush.msra.mxu0 0.0
        %1650 = vmatpush.msra.mxu0 0.0
        %1651 = vmatpush.msra.mxu0 0.0
        %1652 = vmatpush.msra.mxu0 0.0
        %1653 = vmatpush.msra.mxu0 0.0
        %1654 = vmatpush.msra.mxu0 0.0
        %1655 = vmatpush.msra.mxu0 %v1622
        %1656 = vmatpush.msra.mxu0 %v1621
        %1657 = vmatpush.msra.mxu0 %v1620
        %1658 = vmatpush.msra.mxu0 %v1619
        %1659 = vmatpush.msra.mxu0 %v1618
        %1660 = vmatpush.msra.mxu0 %v1617
        %1661 = vmatpush.msra.mxu0 %v1616
        %1662 = vmatpush.msra.mxu0 %v1615
        %1663 = vmatmul.f32.gmra.mxu0 %v1624
        %v1664 = vpop.f32.mrf.mxu0
        %v1665 = vadd.f32 0.0, %v1664
        %1666 = vmatmul.f32.gmra.mxu0 %v1627
        %v1667 = vpop.f32.mrf.mxu0
        %v1668 = vadd.f32 0.0, %v1667
        %1669 = vmatmul.f32.gmra.mxu0 %v1630
        %v1670 = vpop.f32.mrf.mxu0
        %v1671 = vadd.f32 0.0, %v1670
        %1672 = vmatmul.f32.gmra.mxu0 %v1633
        %v1673 = vpop.f32.mrf.mxu0
        %v1674 = vadd.f32 0.0, %v1673
        %1675 = vmatmul.f32.gmra.mxu0 %v1636
        %v1676 = vpop.f32.mrf.mxu0
        %v1677 = vadd.f32 0.0, %v1676
        %1678 = vmatmul.f32.gmra.mxu0 %v1639
        %v1679 = vpop.f32.mrf.mxu0
        %v1680 = vadd.f32 0.0, %v1679
        %1681 = vmatmul.f32.gmra.mxu0 %v1642
        %v1682 = vpop.f32.mrf.mxu0
        %v1683 = vadd.f32 0.0, %v1682
        %1684 = vmatmul.f32.gmra.mxu0 %v1645
        %v1685 = vpop.f32.mrf.mxu0
        %v1686 = vadd.f32 0.0, %v1685
        %1687 = vdwg.mxu0
        %v1688 = vmul.f32 %v1665, %v1665
        %v1689 = vmul.f32 %v1668, %v1668
        %v1690 = vmul.f32 %v1671, %v1671
        %v1691 = vmul.f32 %v1674, %v1674
        %v1692 = vmul.f32 %v1677, %v1677
        %v1693 = vmul.f32 %v1680, %v1680
        %v1694 = vmul.f32 %v1683, %v1683
        %v1695 = vmul.f32 %v1686, %v1686
        %1704 = vrot.lane.b32.xlu0 %v1688, 1
        %v1705 = vpop.permute.xlu0 %1704
        %1706 = vrot.lane.b32.xlu0 %v1689, 1
        %v1707 = vpop.permute.xlu0 %1706
        %1708 = vrot.lane.b32.xlu0 %v1690, 1
        %v1709 = vpop.permute.xlu0 %1708
        %1710 = vrot.lane.b32.xlu0 %v1691, 1
        %v1711 = vpop.permute.xlu0 %1710
        %1712 = vrot.lane.b32.xlu0 %v1692, 1
        %v1713 = vpop.permute.xlu0 %1712
        %1714 = vrot.lane.b32.xlu0 %v1693, 1
        %v1715 = vpop.permute.xlu0 %1714
        %1716 = vrot.lane.b32.xlu0 %v1694, 1
        %v1717 = vpop.permute.xlu0 %1716
        %1718 = vrot.lane.b32.xlu0 %v1695, 1
        %v1719 = vpop.permute.xlu0 %1718
        %v1728 = vsub.f32 %v1665, %v1705
        %v1729 = vsub.f32 %v1668, %v1707
        %v1730 = vsub.f32 %v1671, %v1709
        %v1731 = vsub.f32 %v1674, %v1711
        %v1732 = vsub.f32 %v1677, %v1713
        %v1733 = vsub.f32 %v1680, %v1715
        %v1734 = vsub.f32 %v1683, %v1717
        %v1735 = vsub.f32 %v1686, %v1719
        %1737 = vset.pattern.permute.xlu0 0
        %1738 = vperm.xlu0 %1737, %v1665
        %v1739 = vpop.permute.xlu0 %1738
        %1742 = vset.pattern.permute.xlu0 0
        %1743 = vperm.xlu0 %1742, %v1668
        %v1744 = vpop.permute.xlu0 %1743
        %1747 = vset.pattern.permute.xlu0 0
        %1748 = vperm.xlu0 %1747, %v1671
        %v1749 = vpop.permute.xlu0 %1748
        %1752 = vset.pattern.permute.xlu0 0
        %1753 = vperm.xlu0 %1752, %v1674
        %v1754 = vpop.permute.xlu0 %1753
        %1757 = vset.pattern.permute.xlu0 0
        %1758 = vperm.xlu0 %1757, %v1677
        %v1759 = vpop.permute.xlu0 %1758
        %1762 = vset.pattern.permute.xlu0 0
        %1763 = vperm.xlu0 %1762, %v1680
        %v1764 = vpop.permute.xlu0 %1763
        %1767 = vset.pattern.permute.xlu0 0
        %1768 = vperm.xlu0 %1767, %v1683
        %v1769 = vpop.permute.xlu0 %1768
        %1772 = vset.pattern.permute.xlu0 0
        %1773 = vperm.xlu0 %1772, %v1686
        %v1774 = vpop.permute.xlu0 %1773
        %v1776 = vsub.f32 %v1543, %v1739
        %v1777 = vsub.f32 %v1544, %v1744
        %v1778 = vsub.f32 %v1545, %v1749
        %v1779 = vsub.f32 %v1546, %v1754
        %v1780 = vsub.f32 %v1547, %v1759
        %v1781 = vsub.f32 %v1548, %v1764
        %v1782 = vsub.f32 %v1549, %v1769
        %v1783 = vsub.f32 %v1550, %v1774
        %v1784 = vadd.f32 %v1728, 1e-05
        %v1785 = vadd.f32 %v1729, 1e-05
        %v1786 = vadd.f32 %v1730, 1e-05
        %v1787 = vadd.f32 %v1731, 1e-05
        %v1788 = vadd.f32 %v1732, 1e-05
        %v1789 = vadd.f32 %v1733, 1e-05
        %v1790 = vadd.f32 %v1734, 1e-05
        %v1791 = vadd.f32 %v1735, 1e-05
        %v1792 = vrsqrt.pop %v1784
        %v1793 = vmul.f32 %v1792, %v1784
        %v1794 = vmul.f32 %v1793, %v1792
        %v1795 = vmul.f32 0.5, %v1794
        %v1796 = vsub.f32 1.5, %v1795
        %v1797 = vmul.f32 %v1792, %v1796
        %vm1798 = vweird.f32 %v1784
        %vm1799 = vweird.f32 %v1792
        %vm1800 = vmor %vm1798, %vm1799
        %v1801 = vsel %vm1800, %v1792, %v1797
        %v1802 = vrsqrt.pop %v1785
        %v1803 = vmul.f32 %v1802, %v1785
        %v1804 = vmul.f32 %v1803, %v1802
        %v1805 = vmul.f32 0.5, %v1804
        %v1806 = vsub.f32 1.5, %v1805
        %v1807 = vmul.f32 %v1802, %v1806
        %vm1808 = vweird.f32 %v1785
        %vm1809 = vweird.f32 %v1802
        %vm1810 = vmor %vm1808, %vm1809
        %v1811 = vsel %vm1810, %v1802, %v1807
        %v1812 = vrsqrt.pop %v1786
        %v1813 = vmul.f32 %v1812, %v1786
        %v1814 = vmul.f32 %v1813, %v1812
        %v1815 = vmul.f32 0.5, %v1814
        %v1816 = vsub.f32 1.5, %v1815
        %v1817 = vmul.f32 %v1812, %v1816
        %vm1818 = vweird.f32 %v1786
        %vm1819 = vweird.f32 %v1812
        %vm1820 = vmor %vm1818, %vm1819
        %v1821 = vsel %vm1820, %v1812, %v1817
        %v1822 = vrsqrt.pop %v1787
        %v1823 = vmul.f32 %v1822, %v1787
        %v1824 = vmul.f32 %v1823, %v1822
        %v1825 = vmul.f32 0.5, %v1824
        %v1826 = vsub.f32 1.5, %v1825
        %v1827 = vmul.f32 %v1822, %v1826
        %vm1828 = vweird.f32 %v1787
        %vm1829 = vweird.f32 %v1822
        %vm1830 = vmor %vm1828, %vm1829
        %v1831 = vsel %vm1830, %v1822, %v1827
        %v1832 = vrsqrt.pop %v1788
        %v1833 = vmul.f32 %v1832, %v1788
        %v1834 = vmul.f32 %v1833, %v1832
        %v1835 = vmul.f32 0.5, %v1834
        %v1836 = vsub.f32 1.5, %v1835
        %v1837 = vmul.f32 %v1832, %v1836
        %vm1838 = vweird.f32 %v1788
        %vm1839 = vweird.f32 %v1832
        %vm1840 = vmor %vm1838, %vm1839
        %v1841 = vsel %vm1840, %v1832, %v1837
        %v1842 = vrsqrt.pop %v1789
        %v1843 = vmul.f32 %v1842, %v1789
        %v1844 = vmul.f32 %v1843, %v1842
        %v1845 = vmul.f32 0.5, %v1844
        %v1846 = vsub.f32 1.5, %v1845
        %v1847 = vmul.f32 %v1842, %v1846
        %vm1848 = vweird.f32 %v1789
        %vm1849 = vweird.f32 %v1842
        %vm1850 = vmor %vm1848, %vm1849
        %v1851 = vsel %vm1850, %v1842, %v1847
        %v1852 = vrsqrt.pop %v1790
        %v1853 = vmul.f32 %v1852, %v1790
        %v1854 = vmul.f32 %v1853, %v1852
        %v1855 = vmul.f32 0.5, %v1854
        %v1856 = vsub.f32 1.5, %v1855
        %v1857 = vmul.f32 %v1852, %v1856
        %vm1858 = vweird.f32 %v1790
        %vm1859 = vweird.f32 %v1852
        %vm1860 = vmor %vm1858, %vm1859
        %v1861 = vsel %vm1860, %v1852, %v1857
        %v1862 = vrsqrt.pop %v1791
        %v1863 = vmul.f32 %v1862, %v1791
        %v1864 = vmul.f32 %v1863, %v1862
        %v1865 = vmul.f32 0.5, %v1864
        %v1866 = vsub.f32 1.5, %v1865
        %v1867 = vmul.f32 %v1862, %v1866
        %vm1868 = vweird.f32 %v1791
        %vm1869 = vweird.f32 %v1862
        %vm1870 = vmor %vm1868, %vm1869
        %v1871 = vsel %vm1870, %v1862, %v1867
        %1873 = vset.pattern.permute.xlu0 1
        %1874 = vperm.xlu0 %1873, %v1801
        %v1875 = vpop.permute.xlu0 %1874
        %1878 = vset.pattern.permute.xlu0 1
        %1879 = vperm.xlu0 %1878, %v1811
        %v1880 = vpop.permute.xlu0 %1879
        %1883 = vset.pattern.permute.xlu0 1
        %1884 = vperm.xlu0 %1883, %v1821
        %v1885 = vpop.permute.xlu0 %1884
        %1888 = vset.pattern.permute.xlu0 1
        %1889 = vperm.xlu0 %1888, %v1831
        %v1890 = vpop.permute.xlu0 %1889
        %1893 = vset.pattern.permute.xlu0 1
        %1894 = vperm.xlu0 %1893, %v1841
        %v1895 = vpop.permute.xlu0 %1894
        %1898 = vset.pattern.permute.xlu0 1
        %1899 = vperm.xlu0 %1898, %v1851
        %v1900 = vpop.permute.xlu0 %1899
        %1903 = vset.pattern.permute.xlu0 1
        %1904 = vperm.xlu0 %1903, %v1861
        %v1905 = vpop.permute.xlu0 %1904
        %1908 = vset.pattern.permute.xlu0 1
        %1909 = vperm.xlu0 %1908, %v1871
        %v1910 = vpop.permute.xlu0 %1909
        %v1912 = vmul.f32 %v1776, %v1875
        %v1913 = vmul.f32 %v1777, %v1880
        %v1914 = vmul.f32 %v1778, %v1885
        %v1915 = vmul.f32 %v1779, %v1890
        %v1916 = vmul.f32 %v1780, %v1895
        %v1917 = vmul.f32 %v1781, %v1900
        %v1918 = vmul.f32 %v1782, %v1905
        %v1919 = vmul.f32 %v1783, %v1910
        %v1920 = vld [vmem:[%s11] sm:$0xff]
        %v1921 = vld [vmem:[%s11 + $0x8] sm:$0xff]
        %v1922 = vld [vmem:[%s11 + $0x10] sm:$0xff]
        %v1923 = vld [vmem:[%s11 + $0x18] sm:$0xff]
        %v1924 = vld [vmem:[%s11 + $0x20] sm:$0xff]
        %v1925 = vld [vmem:[%s11 + $0x28] sm:$0xff]
        %v1926 = vld [vmem:[%s11 + $0x30] sm:$0xff]
        %v1927 = vld [vmem:[%s11 + $0x38] sm:$0xff]
        %1929 = vset.pattern.permute.xlu0 0
        %1930 = vperm.xlu0 %1929, %v1920
        %v1931 = vpop.permute.xlu0 %1930
        %1934 = vset.pattern.permute.xlu0 0
        %1935 = vperm.xlu0 %1934, %v1921
        %v1936 = vpop.permute.xlu0 %1935
        %1939 = vset.pattern.permute.xlu0 0
        %1940 = vperm.xlu0 %1939, %v1922
        %v1941 = vpop.permute.xlu0 %1940
        %1944 = vset.pattern.permute.xlu0 0
        %1945 = vperm.xlu0 %1944, %v1923
        %v1946 = vpop.permute.xlu0 %1945
        %1949 = vset.pattern.permute.xlu0 0
        %1950 = vperm.xlu0 %1949, %v1924
        %v1951 = vpop.permute.xlu0 %1950
        %1954 = vset.pattern.permute.xlu0 0
        %1955 = vperm.xlu0 %1954, %v1925
        %v1956 = vpop.permute.xlu0 %1955
        %1959 = vset.pattern.permute.xlu0 0
        %1960 = vperm.xlu0 %1959, %v1926
        %v1961 = vpop.permute.xlu0 %1960
        %1964 = vset.pattern.permute.xlu0 0
        %1965 = vperm.xlu0 %1964, %v1927
        %v1966 = vpop.permute.xlu0 %1965
        %v1968 = vmul.f32 %v1912, %v1931
        %v1969 = vmul.f32 %v1913, %v1936
        %v1970 = vmul.f32 %v1914, %v1941
        %v1971 = vmul.f32 %v1915, %v1946
        %v1972 = vmul.f32 %v1916, %v1951
        %v1973 = vmul.f32 %v1917, %v1956
        %v1974 = vmul.f32 %v1918, %v1961
        %v1975 = vmul.f32 %v1919, %v1966
        %v1976 = vld [vmem:[%s12] sm:$0xff]
        %v1977 = vld [vmem:[%s12 + $0x8] sm:$0xff]
        %v1978 = vld [vmem:[%s12 + $0x10] sm:$0xff]
        %v1979 = vld [vmem:[%s12 + $0x18] sm:$0xff]
        %v1980 = vld [vmem:[%s12 + $0x20] sm:$0xff]
        %v1981 = vld [vmem:[%s12 + $0x28] sm:$0xff]
        %v1982 = vld [vmem:[%s12 + $0x30] sm:$0xff]
        %v1983 = vld [vmem:[%s12 + $0x38] sm:$0xff]
        %1985 = vset.pattern.permute.xlu0 0
        %1986 = vperm.xlu0 %1985, %v1976
        %v1987 = vpop.permute.xlu0 %1986
        %1990 = vset.pattern.permute.xlu0 0
        %1991 = vperm.xlu0 %1990, %v1977
        %v1992 = vpop.permute.xlu0 %1991
        %1995 = vset.pattern.permute.xlu0 0
        %1996 = vperm.xlu0 %1995, %v1978
        %v1997 = vpop.permute.xlu0 %1996
        %2000 = vset.pattern.permute.xlu0 0
        %2001 = vperm.xlu0 %2000, %v1979
        %v2002 = vpop.permute.xlu0 %2001
        %2005 = vset.pattern.permute.xlu0 0
        %2006 = vperm.xlu0 %2005, %v1980
        %v2007 = vpop.permute.xlu0 %2006
        %2010 = vset.pattern.permute.xlu0 0
        %2011 = vperm.xlu0 %2010, %v1981
        %v2012 = vpop.permute.xlu0 %2011
        %2015 = vset.pattern.permute.xlu0 0
        %2016 = vperm.xlu0 %2015, %v1982
        %v2017 = vpop.permute.xlu0 %2016
        %2020 = vset.pattern.permute.xlu0 0
        %2021 = vperm.xlu0 %2020, %v1983
        %v2022 = vpop.permute.xlu0 %2021
        %v2024 = vadd.f32 %v1968, %v1987
        %v2025 = vadd.f32 %v1969, %v1992
        %v2026 = vadd.f32 %v1970, %v1997
        %v2027 = vadd.f32 %v1971, %v2002
        %v2028 = vadd.f32 %v1972, %v2007
        %v2029 = vadd.f32 %v1973, %v2012
        %v2030 = vadd.f32 %v1974, %v2017
        %v2031 = vadd.f32 %v1975, %v2022
        %v2032 = vsub.f32 0.0, %v2024
        %v2033 = vsub.f32 0.0, %v2025
        %v2034 = vsub.f32 0.0, %v2026
        %v2035 = vsub.f32 0.0, %v2027
        %v2036 = vsub.f32 0.0, %v2028
        %v2037 = vsub.f32 0.0, %v2029
        %v2038 = vsub.f32 0.0, %v2030
        %v2039 = vsub.f32 0.0, %v2031
        %v2040 = vmul.f32 %v2032, 1.442695
        %v2041 = vpow.pop %v2040
        %v2042 = vmul.f32 %v2033, 1.442695
        %v2043 = vpow.pop %v2042
        %v2044 = vmul.f32 %v2034, 1.442695
        %v2045 = vpow.pop %v2044
        %v2046 = vmul.f32 %v2035, 1.442695
        %v2047 = vpow.pop %v2046
        %v2048 = vmul.f32 %v2036, 1.442695
        %v2049 = vpow.pop %v2048
        %v2050 = vmul.f32 %v2037, 1.442695
        %v2051 = vpow.pop %v2050
        %v2052 = vmul.f32 %v2038, 1.442695
        %v2053 = vpow.pop %v2052
        %v2054 = vmul.f32 %v2039, 1.442695
        %v2055 = vpow.pop %v2054
        %v2056 = vadd.f32 %v2041, 1.0
        %v2057 = vadd.f32 %v2043, 1.0
        %v2058 = vadd.f32 %v2045, 1.0
        %v2059 = vadd.f32 %v2047, 1.0
        %v2060 = vadd.f32 %v2049, 1.0
        %v2061 = vadd.f32 %v2051, 1.0
        %v2062 = vadd.f32 %v2053, 1.0
        %v2063 = vadd.f32 %v2055, 1.0
        %v2064 = vrcp.pop %v2056
        %v2065 = vmul.f32 %v2056, %v2064
        %v2066 = vsub.f32 1.0, %v2065
        %v2067 = vmul.f32 %v2064, %v2066
        %v2068 = vadd.f32 %v2064, %v2067
        %vm2069 = vweird.f32 %v2056
        %vm2070 = vweird.f32 %v2064
        %vm2071 = vmor %vm2069, %vm2070
        %v2072 = vsel %vm2071, %v2064, %v2068
        %v2073 = vand.u32 2147483647, %v2056
        %vm2074 = vcmp.eq.f32.partialorder %v2073, 8.507059e+37
        %v2075 = vand.u32 %v2056, 2147483648
        %v2076 = vor.u32 1.1754944e-38, %v2075
        %v2077 = vsel %vm2074, %v2076, %v2072
        %v2078 = vmul.f32 1.0, %v2077
        %v2079 = vrcp.pop %v2057
        %v2080 = vmul.f32 %v2057, %v2079
        %v2081 = vsub.f32 1.0, %v2080
        %v2082 = vmul.f32 %v2079, %v2081
        %v2083 = vadd.f32 %v2079, %v2082
        %vm2084 = vweird.f32 %v2057
        %vm2085 = vweird.f32 %v2079
        %vm2086 = vmor %vm2084, %vm2085
        %v2087 = vsel %vm2086, %v2079, %v2083
        %v2088 = vand.u32 2147483647, %v2057
        %vm2089 = vcmp.eq.f32.partialorder %v2088, 8.507059e+37
        %v2090 = vand.u32 %v2057, 2147483648
        %v2091 = vor.u32 1.1754944e-38, %v2090
        %v2092 = vsel %vm2089, %v2091, %v2087
        %v2093 = vmul.f32 1.0, %v2092
        %v2094 = vrcp.pop %v2058
        %v2095 = vmul.f32 %v2058, %v2094
        %v2096 = vsub.f32 1.0, %v2095
        %v2097 = vmul.f32 %v2094, %v2096
        %v2098 = vadd.f32 %v2094, %v2097
        %vm2099 = vweird.f32 %v2058
        %vm2100 = vweird.f32 %v2094
        %vm2101 = vmor %vm2099, %vm2100
        %v2102 = vsel %vm2101, %v2094, %v2098
        %v2103 = vand.u32 2147483647, %v2058
        %vm2104 = vcmp.eq.f32.partialorder %v2103, 8.507059e+37
        %v2105 = vand.u32 %v2058, 2147483648
        %v2106 = vor.u32 1.1754944e-38, %v2105
        %v2107 = vsel %vm2104, %v2106, %v2102
        %v2108 = vmul.f32 1.0, %v2107
        %v2109 = vrcp.pop %v2059
        %v2110 = vmul.f32 %v2059, %v2109
        %v2111 = vsub.f32 1.0, %v2110
        %v2112 = vmul.f32 %v2109, %v2111
        %v2113 = vadd.f32 %v2109, %v2112
        %vm2114 = vweird.f32 %v2059
        %vm2115 = vweird.f32 %v2109
        %vm2116 = vmor %vm2114, %vm2115
        %v2117 = vsel %vm2116, %v2109, %v2113
        %v2118 = vand.u32 2147483647, %v2059
        %vm2119 = vcmp.eq.f32.partialorder %v2118, 8.507059e+37
        %v2120 = vand.u32 %v2059, 2147483648
        %v2121 = vor.u32 1.1754944e-38, %v2120
        %v2122 = vsel %vm2119, %v2121, %v2117
        %v2123 = vmul.f32 1.0, %v2122
        %v2124 = vrcp.pop %v2060
        %v2125 = vmul.f32 %v2060, %v2124
        %v2126 = vsub.f32 1.0, %v2125
        %v2127 = vmul.f32 %v2124, %v2126
        %v2128 = vadd.f32 %v2124, %v2127
        %vm2129 = vweird.f32 %v2060
        %vm2130 = vweird.f32 %v2124
        %vm2131 = vmor %vm2129, %vm2130
        %v2132 = vsel %vm2131, %v2124, %v2128
        %v2133 = vand.u32 2147483647, %v2060
        %vm2134 = vcmp.eq.f32.partialorder %v2133, 8.507059e+37
        %v2135 = vand.u32 %v2060, 2147483648
        %v2136 = vor.u32 1.1754944e-38, %v2135
        %v2137 = vsel %vm2134, %v2136, %v2132
        %v2138 = vmul.f32 1.0, %v2137
        %v2139 = vrcp.pop %v2061
        %v2140 = vmul.f32 %v2061, %v2139
        %v2141 = vsub.f32 1.0, %v2140
        %v2142 = vmul.f32 %v2139, %v2141
        %v2143 = vadd.f32 %v2139, %v2142
        %vm2144 = vweird.f32 %v2061
        %vm2145 = vweird.f32 %v2139
        %vm2146 = vmor %vm2144, %vm2145
        %v2147 = vsel %vm2146, %v2139, %v2143
        %v2148 = vand.u32 2147483647, %v2061
        %vm2149 = vcmp.eq.f32.partialorder %v2148, 8.507059e+37
        %v2150 = vand.u32 %v2061, 2147483648
        %v2151 = vor.u32 1.1754944e-38, %v2150
        %v2152 = vsel %vm2149, %v2151, %v2147
        %v2153 = vmul.f32 1.0, %v2152
        %v2154 = vrcp.pop %v2062
        %v2155 = vmul.f32 %v2062, %v2154
        %v2156 = vsub.f32 1.0, %v2155
        %v2157 = vmul.f32 %v2154, %v2156
        %v2158 = vadd.f32 %v2154, %v2157
        %vm2159 = vweird.f32 %v2062
        %vm2160 = vweird.f32 %v2154
        %vm2161 = vmor %vm2159, %vm2160
        %v2162 = vsel %vm2161, %v2154, %v2158
        %v2163 = vand.u32 2147483647, %v2062
        %vm2164 = vcmp.eq.f32.partialorder %v2163, 8.507059e+37
        %v2165 = vand.u32 %v2062, 2147483648
        %v2166 = vor.u32 1.1754944e-38, %v2165
        %v2167 = vsel %vm2164, %v2166, %v2162
        %v2168 = vmul.f32 1.0, %v2167
        %v2169 = vrcp.pop %v2063
        %v2170 = vmul.f32 %v2063, %v2169
        %v2171 = vsub.f32 1.0, %v2170
        %v2172 = vmul.f32 %v2169, %v2171
        %v2173 = vadd.f32 %v2169, %v2172
        %vm2174 = vweird.f32 %v2063
        %vm2175 = vweird.f32 %v2169
        %vm2176 = vmor %vm2174, %vm2175
        %v2177 = vsel %vm2176, %v2169, %v2173
        %v2178 = vand.u32 2147483647, %v2063
        %vm2179 = vcmp.eq.f32.partialorder %v2178, 8.507059e+37
        %v2180 = vand.u32 %v2063, 2147483648
        %v2181 = vor.u32 1.1754944e-38, %v2180
        %v2182 = vsel %vm2179, %v2181, %v2177
        %v2183 = vmul.f32 1.0, %v2182
        %v2184 = vmul.f32 %v2024, %v2078
        %v2185 = vmul.f32 %v2025, %v2093
        %v2186 = vmul.f32 %v2026, %v2108
        %v2187 = vmul.f32 %v2027, %v2123
        %v2188 = vmul.f32 %v2028, %v2138
        %v2189 = vmul.f32 %v2029, %v2153
        %v2190 = vmul.f32 %v2030, %v2168
        %v2191 = vmul.f32 %v2031, %v2183
        %2200 = vrot.lane.b32.xlu0 %v2184, 9
        %v2201 = vpop.permute.xlu0 %2200
        %2202 = vrot.lane.b32.xlu0 %v2185, 9
        %v2203 = vpop.permute.xlu0 %2202
        %2204 = vrot.lane.b32.xlu0 %v2186, 9
        %v2205 = vpop.permute.xlu0 %2204
        %2206 = vrot.lane.b32.xlu0 %v2187, 9
        %v2207 = vpop.permute.xlu0 %2206
        %2208 = vrot.lane.b32.xlu0 %v2188, 9
        %v2209 = vpop.permute.xlu0 %2208
        %2210 = vrot.lane.b32.xlu0 %v2189, 9
        %v2211 = vpop.permute.xlu0 %2210
        %2212 = vrot.lane.b32.xlu0 %v2190, 9
        %v2213 = vpop.permute.xlu0 %2212
        %2214 = vrot.lane.b32.xlu0 %v2191, 9
        %v2215 = vpop.permute.xlu0 %2214
        %v2224 = vsel %vm1081, 0.0, %v2201
        %v2225 = vsel %vm1081, 0.0, %v2203
        %v2226 = vsel %vm1081, 0.0, %v2205
        %v2227 = vsel %vm1081, 0.0, %v2207
        %v2228 = vsel %vm1081, 0.0, %v2209
        %v2229 = vsel %vm1081, 0.0, %v2211
        %v2230 = vsel %vm1081, 0.0, %v2213
        %v2231 = vsel %vm1081, 0.0, %v2215
        %v2232 = vmul.f32 %v2224, %v1088
        %v2233 = vmul.f32 %v2225, %v1088
        %v2234 = vmul.f32 %v2226, %v1088
        %v2235 = vmul.f32 %v2227, %v1088
        %v2236 = vmul.f32 %v2228, %v1088
        %v2237 = vmul.f32 %v2229, %v1088
        %v2238 = vmul.f32 %v2230, %v1088
        %v2239 = vmul.f32 %v2231, %v1088
        %2240 = vrot.lane.b32.xlu0 %v2184, 8
        %v2241 = vpop.permute.xlu0 %2240
        %2242 = vrot.lane.b32.xlu0 %v2185, 8
        %v2243 = vpop.permute.xlu0 %2242
        %2244 = vrot.lane.b32.xlu0 %v2186, 8
        %v2245 = vpop.permute.xlu0 %2244
        %2246 = vrot.lane.b32.xlu0 %v2187, 8
        %v2247 = vpop.permute.xlu0 %2246
        %2248 = vrot.lane.b32.xlu0 %v2188, 8
        %v2249 = vpop.permute.xlu0 %2248
        %2250 = vrot.lane.b32.xlu0 %v2189, 8
        %v2251 = vpop.permute.xlu0 %2250
        %2252 = vrot.lane.b32.xlu0 %v2190, 8
        %v2253 = vpop.permute.xlu0 %2252
        %2254 = vrot.lane.b32.xlu0 %v2191, 8
        %v2255 = vpop.permute.xlu0 %2254
        %v2264 = vsel %vm1106, 0.0, %v2241
        %v2265 = vsel %vm1106, 0.0, %v2243
        %v2266 = vsel %vm1106, 0.0, %v2245
        %v2267 = vsel %vm1106, 0.0, %v2247
        %v2268 = vsel %vm1106, 0.0, %v2249
        %v2269 = vsel %vm1106, 0.0, %v2251
        %v2270 = vsel %vm1106, 0.0, %v2253
        %v2271 = vsel %vm1106, 0.0, %v2255
        %v2272 = vmul.f32 %v2264, %v1114
        %v2273 = vmul.f32 %v2265, %v1114
        %v2274 = vmul.f32 %v2266, %v1114
        %v2275 = vmul.f32 %v2267, %v1114
        %v2276 = vmul.f32 %v2268, %v1114
        %v2277 = vmul.f32 %v2269, %v1114
        %v2278 = vmul.f32 %v2270, %v1114
        %v2279 = vmul.f32 %v2271, %v1114
        %2280 = vrot.lane.b32.xlu0 %v2184, 7
        %v2281 = vpop.permute.xlu0 %2280
        %2282 = vrot.lane.b32.xlu0 %v2185, 7
        %v2283 = vpop.permute.xlu0 %2282
        %2284 = vrot.lane.b32.xlu0 %v2186, 7
        %v2285 = vpop.permute.xlu0 %2284
        %2286 = vrot.lane.b32.xlu0 %v2187, 7
        %v2287 = vpop.permute.xlu0 %2286
        %2288 = vrot.lane.b32.xlu0 %v2188, 7
        %v2289 = vpop.permute.xlu0 %2288
        %2290 = vrot.lane.b32.xlu0 %v2189, 7
        %v2291 = vpop.permute.xlu0 %2290
        %2292 = vrot.lane.b32.xlu0 %v2190, 7
        %v2293 = vpop.permute.xlu0 %2292
        %2294 = vrot.lane.b32.xlu0 %v2191, 7
        %v2295 = vpop.permute.xlu0 %2294
        %v2304 = vsel %vm1132, 0.0, %v2281
        %v2305 = vsel %vm1132, 0.0, %v2283
        %v2306 = vsel %vm1132, 0.0, %v2285
        %v2307 = vsel %vm1132, 0.0, %v2287
        %v2308 = vsel %vm1132, 0.0, %v2289
        %v2309 = vsel %vm1132, 0.0, %v2291
        %v2310 = vsel %vm1132, 0.0, %v2293
        %v2311 = vsel %vm1132, 0.0, %v2295
        %v2312 = vmul.f32 %v2304, %v1140
        %v2313 = vmul.f32 %v2305, %v1140
        %v2314 = vmul.f32 %v2306, %v1140
        %v2315 = vmul.f32 %v2307, %v1140
        %v2316 = vmul.f32 %v2308, %v1140
        %v2317 = vmul.f32 %v2309, %v1140
        %v2318 = vmul.f32 %v2310, %v1140
        %v2319 = vmul.f32 %v2311, %v1140
        %2320 = vrot.lane.b32.xlu0 %v2184, 1
        %v2321 = vpop.permute.xlu0 %2320
        %2322 = vrot.lane.b32.xlu0 %v2185, 1
        %v2323 = vpop.permute.xlu0 %2322
        %2324 = vrot.lane.b32.xlu0 %v2186, 1
        %v2325 = vpop.permute.xlu0 %2324
        %2326 = vrot.lane.b32.xlu0 %v2187, 1
        %v2327 = vpop.permute.xlu0 %2326
        %2328 = vrot.lane.b32.xlu0 %v2188, 1
        %v2329 = vpop.permute.xlu0 %2328
        %2330 = vrot.lane.b32.xlu0 %v2189, 1
        %v2331 = vpop.permute.xlu0 %2330
        %2332 = vrot.lane.b32.xlu0 %v2190, 1
        %v2333 = vpop.permute.xlu0 %2332
        %2334 = vrot.lane.b32.xlu0 %v2191, 1
        %v2335 = vpop.permute.xlu0 %2334
        %v2344 = vsel %vm706, 0.0, %v2321
        %v2345 = vsel %vm706, 0.0, %v2323
        %v2346 = vsel %vm706, 0.0, %v2325
        %v2347 = vsel %vm706, 0.0, %v2327
        %v2348 = vsel %vm706, 0.0, %v2329
        %v2349 = vsel %vm706, 0.0, %v2331
        %v2350 = vsel %vm706, 0.0, %v2333
        %v2351 = vsel %vm706, 0.0, %v2335
        %v2352 = vmul.f32 %v2344, %v1165
        %v2353 = vmul.f32 %v2345, %v1165
        %v2354 = vmul.f32 %v2346, %v1165
        %v2355 = vmul.f32 %v2347, %v1165
        %v2356 = vmul.f32 %v2348, %v1165
        %v2357 = vmul.f32 %v2349, %v1165
        %v2358 = vmul.f32 %v2350, %v1165
        %v2359 = vmul.f32 %v2351, %v1165
        %v2360 = vmul.f32 %v2184, %v1174
        %v2361 = vmul.f32 %v2185, %v1174
        %v2362 = vmul.f32 %v2186, %v1174
        %v2363 = vmul.f32 %v2187, %v1174
        %v2364 = vmul.f32 %v2188, %v1174
        %v2365 = vmul.f32 %v2189, %v1174
        %v2366 = vmul.f32 %v2190, %v1174
        %v2367 = vmul.f32 %v2191, %v1174
        %2368 = vrot.lane.b32.xlu0 %v2184, 127
        %v2369 = vpop.permute.xlu0 %2368
        %2370 = vrot.lane.b32.xlu0 %v2185, 127
        %v2371 = vpop.permute.xlu0 %2370
        %2372 = vrot.lane.b32.xlu0 %v2186, 127
        %v2373 = vpop.permute.xlu0 %2372
        %2374 = vrot.lane.b32.xlu0 %v2187, 127
        %v2375 = vpop.permute.xlu0 %2374
        %2376 = vrot.lane.b32.xlu0 %v2188, 127
        %v2377 = vpop.permute.xlu0 %2376
        %2378 = vrot.lane.b32.xlu0 %v2189, 127
        %v2379 = vpop.permute.xlu0 %2378
        %2380 = vrot.lane.b32.xlu0 %v2190, 127
        %v2381 = vpop.permute.xlu0 %2380
        %2382 = vrot.lane.b32.xlu0 %v2191, 127
        %v2383 = vpop.permute.xlu0 %2382
        %v2392 = vsel %vm1192, %v2369, 0.0
        %v2393 = vsel %vm1192, %v2371, 0.0
        %v2394 = vsel %vm1192, %v2373, 0.0
        %v2395 = vsel %vm1192, %v2375, 0.0
        %v2396 = vsel %vm1192, %v2377, 0.0
        %v2397 = vsel %vm1192, %v2379, 0.0
        %v2398 = vsel %vm1192, %v2381, 0.0
        %v2399 = vsel %vm1192, %v2383, 0.0
        %v2400 = vmul.f32 %v2392, %v1200
        %v2401 = vmul.f32 %v2393, %v1200
        %v2402 = vmul.f32 %v2394, %v1200
        %v2403 = vmul.f32 %v2395, %v1200
        %v2404 = vmul.f32 %v2396, %v1200
        %v2405 = vmul.f32 %v2397, %v1200
        %v2406 = vmul.f32 %v2398, %v1200
        %v2407 = vmul.f32 %v2399, %v1200
        %2408 = vrot.lane.b32.xlu0 %v2184, 121
        %v2409 = vpop.permute.xlu0 %2408
        %2410 = vrot.lane.b32.xlu0 %v2185, 121
        %v2411 = vpop.permute.xlu0 %2410
        %2412 = vrot.lane.b32.xlu0 %v2186, 121
        %v2413 = vpop.permute.xlu0 %2412
        %2414 = vrot.lane.b32.xlu0 %v2187, 121
        %v2415 = vpop.permute.xlu0 %2414
        %2416 = vrot.lane.b32.xlu0 %v2188, 121
        %v2417 = vpop.permute.xlu0 %2416
        %2418 = vrot.lane.b32.xlu0 %v2189, 121
        %v2419 = vpop.permute.xlu0 %2418
        %2420 = vrot.lane.b32.xlu0 %v2190, 121
        %v2421 = vpop.permute.xlu0 %2420
        %2422 = vrot.lane.b32.xlu0 %v2191, 121
        %v2423 = vpop.permute.xlu0 %2422
        %v2432 = vsel %vm1218, %v2409, 0.0
        %v2433 = vsel %vm1218, %v2411, 0.0
        %v2434 = vsel %vm1218, %v2413, 0.0
        %v2435 = vsel %vm1218, %v2415, 0.0
        %v2436 = vsel %vm1218, %v2417, 0.0
        %v2437 = vsel %vm1218, %v2419, 0.0
        %v2438 = vsel %vm1218, %v2421, 0.0
        %v2439 = vsel %vm1218, %v2423, 0.0
        %v2440 = vmul.f32 %v2432, %v1226
        %v2441 = vmul.f32 %v2433, %v1226
        %v2442 = vmul.f32 %v2434, %v1226
        %v2443 = vmul.f32 %v2435, %v1226
        %v2444 = vmul.f32 %v2436, %v1226
        %v2445 = vmul.f32 %v2437, %v1226
        %v2446 = vmul.f32 %v2438, %v1226
        %v2447 = vmul.f32 %v2439, %v1226
        %2448 = vrot.lane.b32.xlu0 %v2184, 120
        %v2449 = vpop.permute.xlu0 %2448
        %2450 = vrot.lane.b32.xlu0 %v2185, 120
        %v2451 = vpop.permute.xlu0 %2450
        %2452 = vrot.lane.b32.xlu0 %v2186, 120
        %v2453 = vpop.permute.xlu0 %2452
        %2454 = vrot.lane.b32.xlu0 %v2187, 120
        %v2455 = vpop.permute.xlu0 %2454
        %2456 = vrot.lane.b32.xlu0 %v2188, 120
        %v2457 = vpop.permute.xlu0 %2456
        %2458 = vrot.lane.b32.xlu0 %v2189, 120
        %v2459 = vpop.permute.xlu0 %2458
        %2460 = vrot.lane.b32.xlu0 %v2190, 120
        %v2461 = vpop.permute.xlu0 %2460
        %2462 = vrot.lane.b32.xlu0 %v2191, 120
        %v2463 = vpop.permute.xlu0 %2462
        %v2472 = vsel %vm1244, %v2449, 0.0
        %v2473 = vsel %vm1244, %v2451, 0.0
        %v2474 = vsel %vm1244, %v2453, 0.0
        %v2475 = vsel %vm1244, %v2455, 0.0
        %v2476 = vsel %vm1244, %v2457, 0.0
        %v2477 = vsel %vm1244, %v2459, 0.0
        %v2478 = vsel %vm1244, %v2461, 0.0
        %v2479 = vsel %vm1244, %v2463, 0.0
        %v2480 = vmul.f32 %v2472, %v1252
        %v2481 = vmul.f32 %v2473, %v1252
        %v2482 = vmul.f32 %v2474, %v1252
        %v2483 = vmul.f32 %v2475, %v1252
        %v2484 = vmul.f32 %v2476, %v1252
        %v2485 = vmul.f32 %v2477, %v1252
        %v2486 = vmul.f32 %v2478, %v1252
        %v2487 = vmul.f32 %v2479, %v1252
        %2488 = vrot.lane.b32.xlu0 %v2184, 119
        %v2489 = vpop.permute.xlu0 %2488
        %2490 = vrot.lane.b32.xlu0 %v2185, 119
        %v2491 = vpop.permute.xlu0 %2490
        %2492 = vrot.lane.b32.xlu0 %v2186, 119
        %v2493 = vpop.permute.xlu0 %2492
        %2494 = vrot.lane.b32.xlu0 %v2187, 119
        %v2495 = vpop.permute.xlu0 %2494
        %2496 = vrot.lane.b32.xlu0 %v2188, 119
        %v2497 = vpop.permute.xlu0 %2496
        %2498 = vrot.lane.b32.xlu0 %v2189, 119
        %v2499 = vpop.permute.xlu0 %2498
        %2500 = vrot.lane.b32.xlu0 %v2190, 119
        %v2501 = vpop.permute.xlu0 %2500
        %2502 = vrot.lane.b32.xlu0 %v2191, 119
        %v2503 = vpop.permute.xlu0 %2502
        %v2512 = vsel %vm1270, %v2489, 0.0
        %v2513 = vsel %vm1270, %v2491, 0.0
        %v2514 = vsel %vm1270, %v2493, 0.0
        %v2515 = vsel %vm1270, %v2495, 0.0
        %v2516 = vsel %vm1270, %v2497, 0.0
        %v2517 = vsel %vm1270, %v2499, 0.0
        %v2518 = vsel %vm1270, %v2501, 0.0
        %v2519 = vsel %vm1270, %v2503, 0.0
        %v2520 = vmul.f32 %v2512, %v1278
        %v2521 = vmul.f32 %v2513, %v1278
        %v2522 = vmul.f32 %v2514, %v1278
        %v2523 = vmul.f32 %v2515, %v1278
        %v2524 = vmul.f32 %v2516, %v1278
        %v2525 = vmul.f32 %v2517, %v1278
        %v2526 = vmul.f32 %v2518, %v1278
        %v2527 = vmul.f32 %v2519, %v1278
        %v2528 = vld [vmem:[%s13] sm:$0xff]
        %v2529 = vld [vmem:[%s13 + $0x8] sm:$0xff]
        %v2530 = vld [vmem:[%s13 + $0x10] sm:$0xff]
        %v2531 = vld [vmem:[%s13 + $0x18] sm:$0xff]
        %v2532 = vld [vmem:[%s13 + $0x20] sm:$0xff]
        %v2533 = vld [vmem:[%s13 + $0x28] sm:$0xff]
        %v2534 = vld [vmem:[%s13 + $0x30] sm:$0xff]
        %v2535 = vld [vmem:[%s13 + $0x38] sm:$0xff]
        %v2536 = vld [vmem:[%s13 + $0x40] sm:$0xff]
        %v2537 = vld [vmem:[%s13 + $0x48] sm:$0xff]
        %v2538 = vld [vmem:[%s13 + $0x50] sm:$0xff]
        %v2539 = vld [vmem:[%s13 + $0x58] sm:$0xff]
        %v2540 = vld [vmem:[%s13 + $0x60] sm:$0xff]
        %v2541 = vld [vmem:[%s13 + $0x68] sm:$0xff]
        %v2542 = vld [vmem:[%s13 + $0x70] sm:$0xff]
        %v2543 = vld [vmem:[%s13 + $0x78] sm:$0xff]
        %v2544 = vld [vmem:[%s13 + $0x80] sm:$0xff]
        %v2545 = vld [vmem:[%s13 + $0x88] sm:$0xff]
        %v2546 = vld [vmem:[%s13 + $0x90] sm:$0xff]
        %v2547 = vld [vmem:[%s13 + $0x98] sm:$0xff]
        %v2548 = vld [vmem:[%s13 + $0xa0] sm:$0xff]
        %v2549 = vld [vmem:[%s13 + $0xa8] sm:$0xff]
        %v2550 = vld [vmem:[%s13 + $0xb0] sm:$0xff]
        %v2551 = vld [vmem:[%s13 + $0xb8] sm:$0xff]
        %v2552 = vld [vmem:[%s13 + $0xc0] sm:$0xff]
        %v2553 = vld [vmem:[%s13 + $0xc8] sm:$0xff]
        %v2554 = vld [vmem:[%s13 + $0xd0] sm:$0xff]
        %v2555 = vld [vmem:[%s13 + $0xd8] sm:$0xff]
        %v2556 = vld [vmem:[%s13 + $0xe0] sm:$0xff]
        %v2557 = vld [vmem:[%s13 + $0xe8] sm:$0xff]
        %v2558 = vld [vmem:[%s13 + $0xf0] sm:$0xff]
        %v2559 = vld [vmem:[%s13 + $0xf8] sm:$0xff]
        %v2560 = vld [vmem:[%s13 + $0x100] sm:$0xff]
        %v2561 = vld [vmem:[%s13 + $0x108] sm:$0xff]
        %v2562 = vld [vmem:[%s13 + $0x110] sm:$0xff]
        %v2563 = vld [vmem:[%s13 + $0x118] sm:$0xff]
        %v2564 = vld [vmem:[%s13 + $0x120] sm:$0xff]
        %v2565 = vld [vmem:[%s13 + $0x128] sm:$0xff]
        %v2566 = vld [vmem:[%s13 + $0x130] sm:$0xff]
        %v2567 = vld [vmem:[%s13 + $0x138] sm:$0xff]
        %v2568 = vld [vmem:[%s14] sm:$0xff]
        %v2569 = vld [vmem:[%s14 + $0x8] sm:$0xff]
        %v2570 = vld [vmem:[%s14 + $0x10] sm:$0xff]
        %v2571 = vld [vmem:[%s14 + $0x18] sm:$0xff]
        %v2572 = vld [vmem:[%s14 + $0x20] sm:$0xff]
        %v2573 = vld [vmem:[%s14 + $0x28] sm:$0xff]
        %v2574 = vld [vmem:[%s14 + $0x30] sm:$0xff]
        %v2575 = vld [vmem:[%s14 + $0x38] sm:$0xff]
        %2577 = vset.pattern.permute.xlu0 0
        %2578 = vperm.xlu0 %2577, %v2568
        %v2579 = vpop.permute.xlu0 %2578
        %2582 = vset.pattern.permute.xlu0 0
        %2583 = vperm.xlu0 %2582, %v2569
        %v2584 = vpop.permute.xlu0 %2583
        %2587 = vset.pattern.permute.xlu0 0
        %2588 = vperm.xlu0 %2587, %v2570
        %v2589 = vpop.permute.xlu0 %2588
        %2592 = vset.pattern.permute.xlu0 0
        %2593 = vperm.xlu0 %2592, %v2571
        %v2594 = vpop.permute.xlu0 %2593
        %2597 = vset.pattern.permute.xlu0 0
        %2598 = vperm.xlu0 %2597, %v2572
        %v2599 = vpop.permute.xlu0 %2598
        %2602 = vset.pattern.permute.xlu0 0
        %2603 = vperm.xlu0 %2602, %v2573
        %v2604 = vpop.permute.xlu0 %2603
        %2607 = vset.pattern.permute.xlu0 0
        %2608 = vperm.xlu0 %2607, %v2574
        %v2609 = vpop.permute.xlu0 %2608
        %2612 = vset.pattern.permute.xlu0 0
        %2613 = vperm.xlu0 %2612, %v2575
        %v2614 = vpop.permute.xlu0 %2613
        %v2617 = vsel %vm673, %v2532, 0
        %v2620 = vsel %vm673, %v2537, 0
        %v2623 = vsel %vm673, %v2542, 0
        %v2626 = vsel %vm673, %v2547, 0
        %v2629 = vsel %vm673, %v2552, 0
        %v2632 = vsel %vm673, %v2557, 0
        %v2635 = vsel %vm673, %v2562, 0
        %v2638 = vsel %vm673, %v2567, 0
        %2640 = vmatpush.msra.mxu0 %v2279
        %2641 = vmatpush.msra.mxu0 %v2278
        %2642 = vmatpush.msra.mxu0 %v2277
        %2643 = vmatpush.msra.mxu0 %v2276
        %2644 = vmatpush.msra.mxu0 %v2275
        %2645 = vmatpush.msra.mxu0 %v2274
        %2646 = vmatpush.msra.mxu0 %v2273
        %2647 = vmatpush.msra.mxu0 %v2272
        %2648 = vmatpush.msra.mxu0 %v2239
        %2649 = vmatpush.msra.mxu0 %v2238
        %2650 = vmatpush.msra.mxu0 %v2237
        %2651 = vmatpush.msra.mxu0 %v2236
        %2652 = vmatpush.msra.mxu0 %v2235
        %2653 = vmatpush.msra.mxu0 %v2234
        %2654 = vmatpush.msra.mxu0 %v2233
        %2655 = vmatpush.msra.mxu0 %v2232
        %2656 = vmatmul.f32.gmra.mxu0 %v2528
        %v2657 = vpop.f32.mrf.mxu0
        %v2658 = vadd.f32 %v2579, %v2657
        %2659 = vmatmul.f32.gmra.mxu0 %v2533
        %v2660 = vpop.f32.mrf.mxu0
        %v2661 = vadd.f32 %v2584, %v2660
        %2662 = vmatmul.f32.gmra.mxu0 %v2538
        %v2663 = vpop.f32.mrf.mxu0
        %v2664 = vadd.f32 %v2589, %v2663
        %2665 = vmatmul.f32.gmra.mxu0 %v2543
        %v2666 = vpop.f32.mrf.mxu0
        %v2667 = vadd.f32 %v2594, %v2666
        %2668 = vmatmul.f32.gmra.mxu0 %v2548
        %v2669 = vpop.f32.mrf.mxu0
        %v2670 = vadd.f32 %v2599, %v2669
        %2671 = vmatmul.f32.gmra.mxu0 %v2553
        %v2672 = vpop.f32.mrf.mxu0
        %v2673 = vadd.f32 %v2604, %v2672
        %2674 = vmatmul.f32.gmra.mxu0 %v2558
        %v2675 = vpop.f32.mrf.mxu0
        %v2676 = vadd.f32 %v2609, %v2675
        %2677 = vmatmul.f32.gmra.mxu0 %v2563
        %v2678 = vpop.f32.mrf.mxu0
        %v2679 = vadd.f32 %v2614, %v2678
        %2680 = vdwg.mxu0
        %2681 = vmatpush.msra.mxu0 %v2359
        %2682 = vmatpush.msra.mxu0 %v2358
        %2683 = vmatpush.msra.mxu0 %v2357
        %2684 = vmatpush.msra.mxu0 %v2356
        %2685 = vmatpush.msra.mxu0 %v2355
        %2686 = vmatpush.msra.mxu0 %v2354
        %2687 = vmatpush.msra.mxu0 %v2353
        %2688 = vmatpush.msra.mxu0 %v2352
        %2689 = vmatpush.msra.mxu0 %v2319
        %2690 = vmatpush.msra.mxu0 %v2318
        %2691 = vmatpush.msra.mxu0 %v2317
        %2692 = vmatpush.msra.mxu0 %v2316
        %2693 = vmatpush.msra.mxu0 %v2315
        %2694 = vmatpush.msra.mxu0 %v2314
        %2695 = vmatpush.msra.mxu0 %v2313
        %2696 = vmatpush.msra.mxu0 %v2312
        %2697 = vmatmul.f32.gmra.mxu0 %v2529
        %v2698 = vpop.f32.mrf.mxu0
        %v2699 = vadd.f32 %v2658, %v2698
        %2700 = vmatmul.f32.gmra.mxu0 %v2534
        %v2701 = vpop.f32.mrf.mxu0
        %v2702 = vadd.f32 %v2661, %v2701
        %2703 = vmatmul.f32.gmra.mxu0 %v2539
        %v2704 = vpop.f32.mrf.mxu0
        %v2705 = vadd.f32 %v2664, %v2704
        %2706 = vmatmul.f32.gmra.mxu0 %v2544
        %v2707 = vpop.f32.mrf.mxu0
        %v2708 = vadd.f32 %v2667, %v2707
        %2709 = vmatmul.f32.gmra.mxu0 %v2549
        %v2710 = vpop.f32.mrf.mxu0
        %v2711 = vadd.f32 %v2670, %v2710
        %2712 = vmatmul.f32.gmra.mxu0 %v2554
        %v2713 = vpop.f32.mrf.mxu0
        %v2714 = vadd.f32 %v2673, %v2713
        %2715 = vmatmul.f32.gmra.mxu0 %v2559
        %v2716 = vpop.f32.mrf.mxu0
        %v2717 = vadd.f32 %v2676, %v2716
        %2718 = vmatmul.f32.gmra.mxu0 %v2564
        %v2719 = vpop.f32.mrf.mxu0
        %v2720 = vadd.f32 %v2679, %v2719
        %2721 = vdwg.mxu0
        %2722 = vmatpush.msra.mxu0 %v2407
        %2723 = vmatpush.msra.mxu0 %v2406
        %2724 = vmatpush.msra.mxu0 %v2405
        %2725 = vmatpush.msra.mxu0 %v2404
        %2726 = vmatpush.msra.mxu0 %v2403
        %2727 = vmatpush.msra.mxu0 %v2402
        %2728 = vmatpush.msra.mxu0 %v2401
        %2729 = vmatpush.msra.mxu0 %v2400
        %2730 = vmatpush.msra.mxu0 %v2367
        %2731 = vmatpush.msra.mxu0 %v2366
        %2732 = vmatpush.msra.mxu0 %v2365
        %2733 = vmatpush.msra.mxu0 %v2364
        %2734 = vmatpush.msra.mxu0 %v2363
        %2735 = vmatpush.msra.mxu0 %v2362
        %2736 = vmatpush.msra.mxu0 %v2361
        %2737 = vmatpush.msra.mxu0 %v2360
        %2738 = vmatmul.f32.gmra.mxu0 %v2530
        %v2739 = vpop.f32.mrf.mxu0
        %v2740 = vadd.f32 %v2699, %v2739
        %2741 = vmatmul.f32.gmra.mxu0 %v2535
        %v2742 = vpop.f32.mrf.mxu0
        %v2743 = vadd.f32 %v2702, %v2742
        %2744 = vmatmul.f32.gmra.mxu0 %v2540
        %v2745 = vpop.f32.mrf.mxu0
        %v2746 = vadd.f32 %v2705, %v2745
        %2747 = vmatmul.f32.gmra.mxu0 %v2545
        %v2748 = vpop.f32.mrf.mxu0
        %v2749 = vadd.f32 %v2708, %v2748
        %2750 = vmatmul.f32.gmra.mxu0 %v2550
        %v2751 = vpop.f32.mrf.mxu0
        %v2752 = vadd.f32 %v2711, %v2751
        %2753 = vmatmul.f32.gmra.mxu0 %v2555
        %v2754 = vpop.f32.mrf.mxu0
        %v2755 = vadd.f32 %v2714, %v2754
        %2756 = vmatmul.f32.gmra.mxu0 %v2560
        %v2757 = vpop.f32.mrf.mxu0
        %v2758 = vadd.f32 %v2717, %v2757
        %2759 = vmatmul.f32.gmra.mxu0 %v2565
        %v2760 = vpop.f32.mrf.mxu0
        %v2761 = vadd.f32 %v2720, %v2760
        %2762 = vdwg.mxu0
        %2763 = vmatpush.msra.mxu0 %v2487
        %2764 = vmatpush.msra.mxu0 %v2486
        %2765 = vmatpush.msra.mxu0 %v2485
        %2766 = vmatpush.msra.mxu0 %v2484
        %2767 = vmatpush.msra.mxu0 %v2483
        %2768 = vmatpush.msra.mxu0 %v2482
        %2769 = vmatpush.msra.mxu0 %v2481
        %2770 = vmatpush.msra.mxu0 %v2480
        %2771 = vmatpush.msra.mxu0 %v2447
        %2772 = vmatpush.msra.mxu0 %v2446
        %2773 = vmatpush.msra.mxu0 %v2445
        %2774 = vmatpush.msra.mxu0 %v2444
        %2775 = vmatpush.msra.mxu0 %v2443
        %2776 = vmatpush.msra.mxu0 %v2442
        %2777 = vmatpush.msra.mxu0 %v2441
        %2778 = vmatpush.msra.mxu0 %v2440
        %2779 = vmatmul.f32.gmra.mxu0 %v2531
        %v2780 = vpop.f32.mrf.mxu0
        %v2781 = vadd.f32 %v2740, %v2780
        %2782 = vmatmul.f32.gmra.mxu0 %v2536
        %v2783 = vpop.f32.mrf.mxu0
        %v2784 = vadd.f32 %v2743, %v2783
        %2785 = vmatmul.f32.gmra.mxu0 %v2541
        %v2786 = vpop.f32.mrf.mxu0
        %v2787 = vadd.f32 %v2746, %v2786
        %2788 = vmatmul.f32.gmra.mxu0 %v2546
        %v2789 = vpop.f32.mrf.mxu0
        %v2790 = vadd.f32 %v2749, %v2789
        %2791 = vmatmul.f32.gmra.mxu0 %v2551
        %v2792 = vpop.f32.mrf.mxu0
        %v2793 = vadd.f32 %v2752, %v2792
        %2794 = vmatmul.f32.gmra.mxu0 %v2556
        %v2795 = vpop.f32.mrf.mxu0
        %v2796 = vadd.f32 %v2755, %v2795
        %2797 = vmatmul.f32.gmra.mxu0 %v2561
        %v2798 = vpop.f32.mrf.mxu0
        %v2799 = vadd.f32 %v2758, %v2798
        %2800 = vmatmul.f32.gmra.mxu0 %v2566
        %v2801 = vpop.f32.mrf.mxu0
        %v2802 = vadd.f32 %v2761, %v2801
        %2803 = vdwg.mxu0
        %2804 = vmatpush.msra.mxu0 0.0
        %2805 = vmatpush.msra.mxu0 0.0
        %2806 = vmatpush.msra.mxu0 0.0
        %2807 = vmatpush.msra.mxu0 0.0
        %2808 = vmatpush.msra.mxu0 0.0
        %2809 = vmatpush.msra.mxu0 0.0
        %2810 = vmatpush.msra.mxu0 0.0
        %2811 = vmatpush.msra.mxu0 0.0
        %2812 = vmatpush.msra.mxu0 %v2527
        %2813 = vmatpush.msra.mxu0 %v2526
        %2814 = vmatpush.msra.mxu0 %v2525
        %2815 = vmatpush.msra.mxu0 %v2524
        %2816 = vmatpush.msra.mxu0 %v2523
        %2817 = vmatpush.msra.mxu0 %v2522
        %2818 = vmatpush.msra.mxu0 %v2521
        %2819 = vmatpush.msra.mxu0 %v2520
        %2820 = vmatmul.f32.gmra.mxu0 %v2617
        %v2821 = vpop.f32.mrf.mxu0
        %v2822 = vadd.f32 %v2781, %v2821
        %2823 = vmatmul.f32.gmra.mxu0 %v2620
        %v2824 = vpop.f32.mrf.mxu0
        %v2825 = vadd.f32 %v2784, %v2824
        %2826 = vmatmul.f32.gmra.mxu0 %v2623
        %v2827 = vpop.f32.mrf.mxu0
        %v2828 = vadd.f32 %v2787, %v2827
        %2829 = vmatmul.f32.gmra.mxu0 %v2626
        %v2830 = vpop.f32.mrf.mxu0
        %v2831 = vadd.f32 %v2790, %v2830
        %2832 = vmatmul.f32.gmra.mxu0 %v2629
        %v2833 = vpop.f32.mrf.mxu0
        %v2834 = vadd.f32 %v2793, %v2833
        %2835 = vmatmul.f32.gmra.mxu0 %v2632
        %v2836 = vpop.f32.mrf.mxu0
        %v2837 = vadd.f32 %v2796, %v2836
        %2838 = vmatmul.f32.gmra.mxu0 %v2635
        %v2839 = vpop.f32.mrf.mxu0
        %v2840 = vadd.f32 %v2799, %v2839
        %2841 = vmatmul.f32.gmra.mxu0 %v2638
        %v2842 = vpop.f32.mrf.mxu0
        %v2843 = vadd.f32 %v2802, %v2842
        %2844 = vdwg.mxu0
        %v2845 = vld [vmem:[%s15] sm:$0xff]
        %v2846 = vld [vmem:[%s15 + $0x8] sm:$0xff]
        %v2847 = vld [vmem:[%s15 + $0x10] sm:$0xff]
        %v2848 = vld [vmem:[%s15 + $0x18] sm:$0xff]
        %v2849 = vld [vmem:[%s15 + $0x20] sm:$0xff]
        %v2850 = vld [vmem:[%s15 + $0x28] sm:$0xff]
        %v2851 = vld [vmem:[%s15 + $0x30] sm:$0xff]
        %v2852 = vld [vmem:[%s15 + $0x38] sm:$0xff]
        %v2854 = vsel %vm711, %v2845, 0
        %v2857 = vsel %vm711, %v2846, 0
        %v2860 = vsel %vm711, %v2847, 0
        %v2863 = vsel %vm711, %v2848, 0
        %v2866 = vsel %vm711, %v2849, 0
        %v2869 = vsel %vm711, %v2850, 0
        %v2872 = vsel %vm711, %v2851, 0
        %v2875 = vsel %vm711, %v2852, 0
        %2877 = vmatpush.msra.mxu0 0.0
        %2878 = vmatpush.msra.mxu0 0.0
        %2879 = vmatpush.msra.mxu0 0.0
        %2880 = vmatpush.msra.mxu0 0.0
        %2881 = vmatpush.msra.mxu0 0.0
        %2882 = vmatpush.msra.mxu0 0.0
        %2883 = vmatpush.msra.mxu0 0.0
        %2884 = vmatpush.msra.mxu0 0.0
        %2885 = vmatpush.msra.mxu0 0.0
        %2886 = vmatpush.msra.mxu0 0.0
        %2887 = vmatpush.msra.mxu0 0.0
        %2888 = vmatpush.msra.mxu0 0.0
        %2889 = vmatpush.msra.mxu0 %v672
        %2890 = vmatpush.msra.mxu0 %v671
        %2891 = vmatpush.msra.mxu0 %v670
        %2892 = vmatpush.msra.mxu0 %v669
        %2893 = vmatmul.f32.gmra.mxu0 %v2854
        %v2894 = vpop.f32.mrf.mxu0
        %v2895 = vadd.f32 0.0, %v2894
        %2896 = vmatmul.f32.gmra.mxu0 %v2857
        %v2897 = vpop.f32.mrf.mxu0
        %v2898 = vadd.f32 0.0, %v2897
        %2899 = vmatmul.f32.gmra.mxu0 %v2860
        %v2900 = vpop.f32.mrf.mxu0
        %v2901 = vadd.f32 0.0, %v2900
        %2902 = vmatmul.f32.gmra.mxu0 %v2863
        %v2903 = vpop.f32.mrf.mxu0
        %v2904 = vadd.f32 0.0, %v2903
        %2905 = vmatmul.f32.gmra.mxu0 %v2866
        %v2906 = vpop.f32.mrf.mxu0
        %v2907 = vadd.f32 0.0, %v2906
        %2908 = vmatmul.f32.gmra.mxu0 %v2869
        %v2909 = vpop.f32.mrf.mxu0
        %v2910 = vadd.f32 0.0, %v2909
        %2911 = vmatmul.f32.gmra.mxu0 %v2872
        %v2912 = vpop.f32.mrf.mxu0
        %v2913 = vadd.f32 0.0, %v2912
        %2914 = vmatmul.f32.gmra.mxu0 %v2875
        %v2915 = vpop.f32.mrf.mxu0
        %v2916 = vadd.f32 0.0, %v2915
        %2917 = vdwg.mxu0
        %v2918 = vadd.f32 %v2822, %v2895
        %v2919 = vadd.f32 %v2825, %v2898
        %v2920 = vadd.f32 %v2828, %v2901
        %v2921 = vadd.f32 %v2831, %v2904
        %v2922 = vadd.f32 %v2834, %v2907
        %v2923 = vadd.f32 %v2837, %v2910
        %v2924 = vadd.f32 %v2840, %v2913
        %v2925 = vadd.f32 %v2843, %v2916
        %v2926 = vld [vmem:[%s16] sm:$0xff]
        %v2927 = vld [vmem:[%s16 + $0x8] sm:$0xff]
        %v2928 = vld [vmem:[%s16 + $0x10] sm:$0xff]
        %v2929 = vld [vmem:[%s16 + $0x18] sm:$0xff]
        %v2930 = vld [vmem:[%s16 + $0x20] sm:$0xff]
        %v2931 = vld [vmem:[%s16 + $0x28] sm:$0xff]
        %v2932 = vld [vmem:[%s16 + $0x30] sm:$0xff]
        %v2933 = vld [vmem:[%s16 + $0x38] sm:$0xff]
        %2935 = vset.pattern.permute.xlu0 0
        %2936 = vperm.xlu0 %2935, %v2926
        %v2937 = vpop.permute.xlu0 %2936
        %2940 = vset.pattern.permute.xlu0 0
        %2941 = vperm.xlu0 %2940, %v2927
        %v2942 = vpop.permute.xlu0 %2941
        %2945 = vset.pattern.permute.xlu0 0
        %2946 = vperm.xlu0 %2945, %v2928
        %v2947 = vpop.permute.xlu0 %2946
        %2950 = vset.pattern.permute.xlu0 0
        %2951 = vperm.xlu0 %2950, %v2929
        %v2952 = vpop.permute.xlu0 %2951
        %2955 = vset.pattern.permute.xlu0 0
        %2956 = vperm.xlu0 %2955, %v2930
        %v2957 = vpop.permute.xlu0 %2956
        %2960 = vset.pattern.permute.xlu0 0
        %2961 = vperm.xlu0 %2960, %v2931
        %v2962 = vpop.permute.xlu0 %2961
        %2965 = vset.pattern.permute.xlu0 0
        %2966 = vperm.xlu0 %2965, %v2932
        %v2967 = vpop.permute.xlu0 %2966
        %2970 = vset.pattern.permute.xlu0 0
        %2971 = vperm.xlu0 %2970, %v2933
        %v2972 = vpop.permute.xlu0 %2971
        %v2974 = vadd.f32 %v2918, %v2937
        %v2975 = vadd.f32 %v2919, %v2942
        %v2976 = vadd.f32 %v2920, %v2947
        %v2977 = vadd.f32 %v2921, %v2952
        %v2978 = vadd.f32 %v2922, %v2957
        %v2979 = vadd.f32 %v2923, %v2962
        %v2980 = vadd.f32 %v2924, %v2967
        %v2981 = vadd.f32 %v2925, %v2972
        %v2982 = vld [vmem:[%s17] sm:$0xff]
        %v2983 = vld [vmem:[%s17 + $0x8] sm:$0xff]
        %v2984 = vld [vmem:[%s17 + $0x10] sm:$0xff]
        %v2985 = vld [vmem:[%s17 + $0x18] sm:$0xff]
        %v2986 = vld [vmem:[%s17 + $0x20] sm:$0xff]
        %v2987 = vld [vmem:[%s17 + $0x28] sm:$0xff]
        %v2988 = vld [vmem:[%s17 + $0x30] sm:$0xff]
        %v2989 = vld [vmem:[%s17 + $0x38] sm:$0xff]
        %v2990 = vld [vmem:[%s17 + $0x40] sm:$0xff]
        %v2991 = vld [vmem:[%s17 + $0x48] sm:$0xff]
        %v2992 = vld [vmem:[%s17 + $0x50] sm:$0xff]
        %v2993 = vld [vmem:[%s17 + $0x58] sm:$0xff]
        %v2994 = vld [vmem:[%s17 + $0x60] sm:$0xff]
        %v2995 = vld [vmem:[%s17 + $0x68] sm:$0xff]
        %v2996 = vld [vmem:[%s17 + $0x70] sm:$0xff]
        %v2997 = vld [vmem:[%s17 + $0x78] sm:$0xff]
        %v2998 = vld [vmem:[%s17 + $0x80] sm:$0xff]
        %v2999 = vld [vmem:[%s17 + $0x88] sm:$0xff]
        %v3000 = vld [vmem:[%s17 + $0x90] sm:$0xff]
        %v3001 = vld [vmem:[%s17 + $0x98] sm:$0xff]
        %v3002 = vld [vmem:[%s17 + $0xa0] sm:$0xff]
        %v3003 = vld [vmem:[%s17 + $0xa8] sm:$0xff]
        %v3004 = vld [vmem:[%s17 + $0xb0] sm:$0xff]
        %v3005 = vld [vmem:[%s17 + $0xb8] sm:$0xff]
        %v3006 = vld [vmem:[%s18] sm:$0xff]
        %v3007 = vld [vmem:[%s18 + $0x8] sm:$0xff]
        %v3008 = vld [vmem:[%s18 + $0x10] sm:$0xff]
        %v3009 = vld [vmem:[%s18 + $0x18] sm:$0xff]
        %v3010 = vld [vmem:[%s18 + $0x20] sm:$0xff]
        %v3011 = vld [vmem:[%s18 + $0x28] sm:$0xff]
        %v3012 = vld [vmem:[%s18 + $0x30] sm:$0xff]
        %v3013 = vld [vmem:[%s18 + $0x38] sm:$0xff]
        %v3014 = vld [vmem:[%s18 + $0x40] sm:$0xff]
        %v3015 = vld [vmem:[%s18 + $0x48] sm:$0xff]
        %v3016 = vld [vmem:[%s18 + $0x50] sm:$0xff]
        %v3017 = vld [vmem:[%s18 + $0x58] sm:$0xff]
        %v3018 = vld [vmem:[%s18 + $0x60] sm:$0xff]
        %v3019 = vld [vmem:[%s18 + $0x68] sm:$0xff]
        %v3020 = vld [vmem:[%s18 + $0x70] sm:$0xff]
        %v3021 = vld [vmem:[%s18 + $0x78] sm:$0xff]
        %v3022 = vld [vmem:[%s18 + $0x80] sm:$0xff]
        %v3023 = vld [vmem:[%s18 + $0x88] sm:$0xff]
        %v3024 = vld [vmem:[%s18 + $0x90] sm:$0xff]
        %v3025 = vld [vmem:[%s18 + $0x98] sm:$0xff]
        %v3026 = vld [vmem:[%s18 + $0xa0] sm:$0xff]
        %v3027 = vld [vmem:[%s18 + $0xa8] sm:$0xff]
        %v3028 = vld [vmem:[%s18 + $0xb0] sm:$0xff]
        %v3029 = vld [vmem:[%s18 + $0xb8] sm:$0xff]
        %3031 = vset.pattern.permute.xlu0 0
        %3032 = vperm.xlu0 %3031, %v3006
        %v3033 = vpop.permute.xlu0 %3032
        %3036 = vset.pattern.permute.xlu0 0
        %3037 = vperm.xlu0 %3036, %v3007
        %v3038 = vpop.permute.xlu0 %3037
        %3041 = vset.pattern.permute.xlu0 0
        %3042 = vperm.xlu0 %3041, %v3008
        %v3043 = vpop.permute.xlu0 %3042
        %3046 = vset.pattern.permute.xlu0 0
        %3047 = vperm.xlu0 %3046, %v3009
        %v3048 = vpop.permute.xlu0 %3047
        %3051 = vset.pattern.permute.xlu0 0
        %3052 = vperm.xlu0 %3051, %v3010
        %v3053 = vpop.permute.xlu0 %3052
        %3056 = vset.pattern.permute.xlu0 0
        %3057 = vperm.xlu0 %3056, %v3011
        %v3058 = vpop.permute.xlu0 %3057
        %3061 = vset.pattern.permute.xlu0 0
        %3062 = vperm.xlu0 %3061, %v3012
        %v3063 = vpop.permute.xlu0 %3062
        %3066 = vset.pattern.permute.xlu0 0
        %3067 = vperm.xlu0 %3066, %v3013
        %v3068 = vpop.permute.xlu0 %3067
        %3071 = vset.pattern.permute.xlu0 0
        %3072 = vperm.xlu0 %3071, %v3014
        %v3073 = vpop.permute.xlu0 %3072
        %3076 = vset.pattern.permute.xlu0 0
        %3077 = vperm.xlu0 %3076, %v3015
        %v3078 = vpop.permute.xlu0 %3077
        %3081 = vset.pattern.permute.xlu0 0
        %3082 = vperm.xlu0 %3081, %v3016
        %v3083 = vpop.permute.xlu0 %3082
        %3086 = vset.pattern.permute.xlu0 0
        %3087 = vperm.xlu0 %3086, %v3017
        %v3088 = vpop.permute.xlu0 %3087
        %3091 = vset.pattern.permute.xlu0 0
        %3092 = vperm.xlu0 %3091, %v3018
        %v3093 = vpop.permute.xlu0 %3092
        %3096 = vset.pattern.permute.xlu0 0
        %3097 = vperm.xlu0 %3096, %v3019
        %v3098 = vpop.permute.xlu0 %3097
        %3101 = vset.pattern.permute.xlu0 0
        %3102 = vperm.xlu0 %3101, %v3020
        %v3103 = vpop.permute.xlu0 %3102
        %3106 = vset.pattern.permute.xlu0 0
        %3107 = vperm.xlu0 %3106, %v3021
        %v3108 = vpop.permute.xlu0 %3107
        %3111 = vset.pattern.permute.xlu0 0
        %3112 = vperm.xlu0 %3111, %v3022
        %v3113 = vpop.permute.xlu0 %3112
        %3116 = vset.pattern.permute.xlu0 0
        %3117 = vperm.xlu0 %3116, %v3023
        %v3118 = vpop.permute.xlu0 %3117
        %3121 = vset.pattern.permute.xlu0 0
        %3122 = vperm.xlu0 %3121, %v3024
        %v3123 = vpop.permute.xlu0 %3122
        %3126 = vset.pattern.permute.xlu0 0
        %3127 = vperm.xlu0 %3126, %v3025
        %v3128 = vpop.permute.xlu0 %3127
        %3131 = vset.pattern.permute.xlu0 0
        %3132 = vperm.xlu0 %3131, %v3026
        %v3133 = vpop.permute.xlu0 %3132
        %3136 = vset.pattern.permute.xlu0 0
        %3137 = vperm.xlu0 %3136, %v3027
        %v3138 = vpop.permute.xlu0 %3137
        %3141 = vset.pattern.permute.xlu0 0
        %3142 = vperm.xlu0 %3141, %v3028
        %v3143 = vpop.permute.xlu0 %3142
        %3146 = vset.pattern.permute.xlu0 0
        %3147 = vperm.xlu0 %3146, %v3029
        %v3148 = vpop.permute.xlu0 %3147
        %v3151 = vsel %vm673, %v2982, 0
        %v3154 = vsel %vm673, %v2983, 0
        %v3157 = vsel %vm673, %v2984, 0
        %v3160 = vsel %vm673, %v2985, 0
        %v3163 = vsel %vm673, %v2986, 0
        %v3166 = vsel %vm673, %v2987, 0
        %v3169 = vsel %vm673, %v2988, 0
        %v3172 = vsel %vm673, %v2989, 0
        %v3175 = vsel %vm673, %v2990, 0
        %v3178 = vsel %vm673, %v2991, 0
        %v3181 = vsel %vm673, %v2992, 0
        %v3184 = vsel %vm673, %v2993, 0
        %v3187 = vsel %vm673, %v2994, 0
        %v3190 = vsel %vm673, %v2995, 0
        %v3193 = vsel %vm673, %v2996, 0
        %v3196 = vsel %vm673, %v2997, 0
        %v3199 = vsel %vm673, %v2998, 0
        %v3202 = vsel %vm673, %v2999, 0
        %v3205 = vsel %vm673, %v3000, 0
        %v3208 = vsel %vm673, %v3001, 0
        %v3211 = vsel %vm673, %v3002, 0
        %v3214 = vsel %vm673, %v3003, 0
        %v3217 = vsel %vm673, %v3004, 0
        %v3220 = vsel %vm673, %v3005, 0
        %3222 = vmatpush.msra.mxu0 0.0
        %3223 = vmatpush.msra.mxu0 0.0
        %3224 = vmatpush.msra.mxu0 0.0
        %3225 = vmatpush.msra.mxu0 0.0
        %3226 = vmatpush.msra.mxu0 0.0
        %3227 = vmatpush.msra.mxu0 0.0
        %3228 = vmatpush.msra.mxu0 0.0
        %3229 = vmatpush.msra.mxu0 0.0
        %3230 = vmatpush.msra.mxu0 %v2981
        %3231 = vmatpush.msra.mxu0 %v2980
        %3232 = vmatpush.msra.mxu0 %v2979
        %3233 = vmatpush.msra.mxu0 %v2978
        %3234 = vmatpush.msra.mxu0 %v2977
        %3235 = vmatpush.msra.mxu0 %v2976
        %3236 = vmatpush.msra.mxu0 %v2975
        %3237 = vmatpush.msra.mxu0 %v2974
        %3238 = vmatmul.f32.gmra.mxu0 %v3151
        %v3239 = vpop.f32.mrf.mxu0
        %v3240 = vadd.f32 %v3033, %v3239
        %3241 = vmatmul.f32.gmra.mxu0 %v3154
        %v3242 = vpop.f32.mrf.mxu0
        %v3243 = vadd.f32 %v3038, %v3242
        %3244 = vmatmul.f32.gmra.mxu0 %v3157
        %v3245 = vpop.f32.mrf.mxu0
        %v3246 = vadd.f32 %v3043, %v3245
        %3247 = vmatmul.f32.gmra.mxu0 %v3160
        %v3248 = vpop.f32.mrf.mxu0
        %v3249 = vadd.f32 %v3048, %v3248
        %3250 = vmatmul.f32.gmra.mxu0 %v3163
        %v3251 = vpop.f32.mrf.mxu0
        %v3252 = vadd.f32 %v3053, %v3251
        %3253 = vmatmul.f32.gmra.mxu0 %v3166
        %v3254 = vpop.f32.mrf.mxu0
        %v3255 = vadd.f32 %v3058, %v3254
        %3256 = vmatmul.f32.gmra.mxu0 %v3169
        %v3257 = vpop.f32.mrf.mxu0
        %v3258 = vadd.f32 %v3063, %v3257
        %3259 = vmatmul.f32.gmra.mxu0 %v3172
        %v3260 = vpop.f32.mrf.mxu0
        %v3261 = vadd.f32 %v3068, %v3260
        %3262 = vmatmul.f32.gmra.mxu0 %v3175
        %v3263 = vpop.f32.mrf.mxu0
        %v3264 = vadd.f32 %v3073, %v3263
        %3265 = vmatmul.f32.gmra.mxu0 %v3178
        %v3266 = vpop.f32.mrf.mxu0
        %v3267 = vadd.f32 %v3078, %v3266
        %3268 = vmatmul.f32.gmra.mxu0 %v3181
        %v3269 = vpop.f32.mrf.mxu0
        %v3270 = vadd.f32 %v3083, %v3269
        %3271 = vmatmul.f32.gmra.mxu0 %v3184
        %v3272 = vpop.f32.mrf.mxu0
        %v3273 = vadd.f32 %v3088, %v3272
        %3274 = vmatmul.f32.gmra.mxu0 %v3187
        %v3275 = vpop.f32.mrf.mxu0
        %v3276 = vadd.f32 %v3093, %v3275
        %3277 = vmatmul.f32.gmra.mxu0 %v3190
        %v3278 = vpop.f32.mrf.mxu0
        %v3279 = vadd.f32 %v3098, %v3278
        %3280 = vmatmul.f32.gmra.mxu0 %v3193
        %v3281 = vpop.f32.mrf.mxu0
        %v3282 = vadd.f32 %v3103, %v3281
        %3283 = vmatmul.f32.gmra.mxu0 %v3196
        %v3284 = vpop.f32.mrf.mxu0
        %v3285 = vadd.f32 %v3108, %v3284
        %3286 = vmatmul.f32.gmra.mxu0 %v3199
        %v3287 = vpop.f32.mrf.mxu0
        %v3288 = vadd.f32 %v3113, %v3287
        %3289 = vmatmul.f32.gmra.mxu0 %v3202
        %v3290 = vpop.f32.mrf.mxu0
        %v3291 = vadd.f32 %v3118, %v3290
        %3292 = vmatmul.f32.gmra.mxu0 %v3205
        %v3293 = vpop.f32.mrf.mxu0
        %v3294 = vadd.f32 %v3123, %v3293
        %3295 = vmatmul.f32.gmra.mxu0 %v3208
        %v3296 = vpop.f32.mrf.mxu0
        %v3297 = vadd.f32 %v3128, %v3296
        %3298 = vmatmul.f32.gmra.mxu0 %v3211
        %v3299 = vpop.f32.mrf.mxu0
        %v3300 = vadd.f32 %v3133, %v3299
        %3301 = vmatmul.f32.gmra.mxu0 %v3214
        %v3302 = vpop.f32.mrf.mxu0
        %v3303 = vadd.f32 %v3138, %v3302
        %3304 = vmatmul.f32.gmra.mxu0 %v3217
        %v3305 = vpop.f32.mrf.mxu0
        %v3306 = vadd.f32 %v3143, %v3305
        %3307 = vmatmul.f32.gmra.mxu0 %v3220
        %v3308 = vpop.f32.mrf.mxu0
        %v3309 = vadd.f32 %v3148, %v3308
        %3310 = vdwg.mxu0
        %3311 = vxpose.xlu0.b32.start [1/16] %v3264, 128
        %3312 = vxpose.xlu0.b32.cont [2/16] %v3267, 128
        %3313 = vxpose.xlu0.b32.cont [3/16] %v3270, 128
        %3314 = vxpose.xlu0.b32.cont [4/16] %v3273, 128
        %3315 = vxpose.xlu0.b32.cont [5/16] %v3276, 128
        %3316 = vxpose.xlu0.b32.cont [6/16] %v3279, 128
        %3317 = vxpose.xlu0.b32.cont [7/16] %v3282, 128
        %3318 = vxpose.xlu0.b32.cont [8/16] %v3285, 128
        %3319 = vxpose.xlu0.b32.cont [9/16] 0.0, 128
        %3320 = vxpose.xlu0.b32.cont [10/16] 0.0, 128
        %3321 = vxpose.xlu0.b32.cont [11/16] 0.0, 128
        %3322 = vxpose.xlu0.b32.cont [12/16] 0.0, 128
        %3323 = vxpose.xlu0.b32.cont [13/16] 0.0, 128
        %3324 = vxpose.xlu0.b32.cont [14/16] 0.0, 128
        %3325 = vxpose.xlu0.b32.cont [15/16] 0.0, 128
        %3326 = vxpose.xlu0.b32.end [16/16] 0.0, 128
        %v3327 = vpop.trf.xlu0
        %v3328 = vpop.trf.xlu0
        %v3329 = vpop.trf.xlu0
        %v3330 = vpop.trf.xlu0
        %v3331 = vpop.trf.xlu0
        %v3332 = vpop.trf.xlu0
        %v3333 = vpop.trf.xlu0
        %v3334 = vpop.trf.xlu0
        %v3335 = vpop.trf.xlu0
        %v3336 = vpop.trf.xlu0
        %v3337 = vpop.trf.xlu0
        %v3338 = vpop.trf.xlu0
        %v3339 = vpop.trf.xlu0
        %v3340 = vpop.trf.xlu0
        %v3341 = vpop.trf.xlu0
        %v3342 = vpop.trf.xlu0
        %v3344 = vsel %vm673, %v3327, 0
        %v3347 = vsel %vm673, %v3328, 0
        %v3350 = vsel %vm673, %v3329, 0
        %v3353 = vsel %vm673, %v3330, 0
        %v3356 = vsel %vm673, %v3331, 0
        %v3359 = vsel %vm673, %v3332, 0
        %v3362 = vsel %vm673, %v3333, 0
        %v3365 = vsel %vm673, %v3334, 0
        %3367 = vmatpush.msra.mxu0 0.0
        %3368 = vmatpush.msra.mxu0 0.0
        %3369 = vmatpush.msra.mxu0 0.0
        %3370 = vmatpush.msra.mxu0 0.0
        %3371 = vmatpush.msra.mxu0 0.0
        %3372 = vmatpush.msra.mxu0 0.0
        %3373 = vmatpush.msra.mxu0 0.0
        %3374 = vmatpush.msra.mxu0 0.0
        %3375 = vmatpush.msra.mxu0 %v3261
        %3376 = vmatpush.msra.mxu0 %v3258
        %3377 = vmatpush.msra.mxu0 %v3255
        %3378 = vmatpush.msra.mxu0 %v3252
        %3379 = vmatpush.msra.mxu0 %v3249
        %3380 = vmatpush.msra.mxu0 %v3246
        %3381 = vmatpush.msra.mxu0 %v3243
        %3382 = vmatpush.msra.mxu0 %v3240
        %3383 = vmatmul.f32.gmra.mxu0 %v3344
        %v3384 = vpop.f32.mrf.mxu0
        %v3385 = vadd.f32 0.0, %v3384
        %3386 = vmatmul.f32.gmra.mxu0 %v3347
        %v3387 = vpop.f32.mrf.mxu0
        %v3388 = vadd.f32 0.0, %v3387
        %3389 = vmatmul.f32.gmra.mxu0 %v3350
        %v3390 = vpop.f32.mrf.mxu0
        %v3391 = vadd.f32 0.0, %v3390
        %3392 = vmatmul.f32.gmra.mxu0 %v3353
        %v3393 = vpop.f32.mrf.mxu0
        %v3394 = vadd.f32 0.0, %v3393
        %3395 = vmatmul.f32.gmra.mxu0 %v3356
        %v3396 = vpop.f32.mrf.mxu0
        %v3397 = vadd.f32 0.0, %v3396
        %3398 = vmatmul.f32.gmra.mxu0 %v3359
        %v3399 = vpop.f32.mrf.mxu0
        %v3400 = vadd.f32 0.0, %v3399
        %3401 = vmatmul.f32.gmra.mxu0 %v3362
        %v3402 = vpop.f32.mrf.mxu0
        %v3403 = vadd.f32 0.0, %v3402
        %3404 = vmatmul.f32.gmra.mxu0 %v3365
        %v3405 = vpop.f32.mrf.mxu0
        %v3406 = vadd.f32 0.0, %v3405
        %3407 = vdwg.mxu0
        %v3408 = vsub.f32 %v3385, %v3385
        %v3409 = vsub.f32 %v3388, %v3388
        %v3410 = vsub.f32 %v3391, %v3391
        %v3411 = vsub.f32 %v3394, %v3394
        %v3412 = vsub.f32 %v3397, %v3397
        %v3413 = vsub.f32 %v3400, %v3400
        %v3414 = vsub.f32 %v3403, %v3403
        %v3415 = vsub.f32 %v3406, %v3406
        %v3416 = vmul.f32 %v3408, 1.442695
        %v3417 = vpow.pop %v3416
        %v3418 = vmul.f32 %v3409, 1.442695
        %v3419 = vpow.pop %v3418
        %v3420 = vmul.f32 %v3410, 1.442695
        %v3421 = vpow.pop %v3420
        %v3422 = vmul.f32 %v3411, 1.442695
        %v3423 = vpow.pop %v3422
        %v3424 = vmul.f32 %v3412, 1.442695
        %v3425 = vpow.pop %v3424
        %v3426 = vmul.f32 %v3413, 1.442695
        %v3427 = vpow.pop %v3426
        %v3428 = vmul.f32 %v3414, 1.442695
        %v3429 = vpow.pop %v3428
        %v3430 = vmul.f32 %v3415, 1.442695
        %v3431 = vpow.pop %v3430
        %v3432 = vrcp.pop %v3417
        %v3433 = vrcp.pop %v3419
        %v3434 = vrcp.pop %v3421
        %v3435 = vrcp.pop %v3423
        %v3436 = vrcp.pop %v3425
        %v3437 = vrcp.pop %v3427
        %v3438 = vrcp.pop %v3429
        %v3439 = vrcp.pop %v3431
        %v3440 = vmul.f32 %v3417, %v3432
        %v3441 = vmul.f32 %v3419, %v3433
        %v3442 = vmul.f32 %v3421, %v3434
        %v3443 = vmul.f32 %v3423, %v3435
        %v3444 = vmul.f32 %v3425, %v3436
        %v3445 = vmul.f32 %v3427, %v3437
        %v3446 = vmul.f32 %v3429, %v3438
        %v3447 = vmul.f32 %v3431, %v3439
        %v3449 = vsel %vm673, %v3288, 0
        %v3452 = vsel %vm673, %v3291, 0
        %v3455 = vsel %vm673, %v3294, 0
        %v3458 = vsel %vm673, %v3297, 0
        %v3461 = vsel %vm673, %v3300, 0
        %v3464 = vsel %vm673, %v3303, 0
        %v3467 = vsel %vm673, %v3306, 0
        %v3470 = vsel %vm673, %v3309, 0
        %3472 = vmatpush.msra.mxu0 0.0
        %3473 = vmatpush.msra.mxu0 0.0
        %3474 = vmatpush.msra.mxu0 0.0
        %3475 = vmatpush.msra.mxu0 0.0
        %3476 = vmatpush.msra.mxu0 0.0
        %3477 = vmatpush.msra.mxu0 0.0
        %3478 = vmatpush.msra.mxu0 0.0
        %3479 = vmatpush.msra.mxu0 0.0
        %3480 = vmatpush.msra.mxu0 %v3447
        %3481 = vmatpush.msra.mxu0 %v3446
        %3482 = vmatpush.msra.mxu0 %v3445
        %3483 = vmatpush.msra.mxu0 %v3444
        %3484 = vmatpush.msra.mxu0 %v3443
        %3485 = vmatpush.msra.mxu0 %v3442
        %3486 = vmatpush.msra.mxu0 %v3441
        %3487 = vmatpush.msra.mxu0 %v3440
        %3488 = vmatmul.f32.gmra.mxu0 %v3449
        %v3489 = vpop.f32.mrf.mxu0
        %v3490 = vadd.f32 0.0, %v3489
        %3491 = vmatmul.f32.gmra.mxu0 %v3452
        %v3492 = vpop.f32.mrf.mxu0
        %v3493 = vadd.f32 0.0, %v3492
        %3494 = vmatmul.f32.gmra.mxu0 %v3455
        %v3495 = vpop.f32.mrf.mxu0
        %v3496 = vadd.f32 0.0, %v3495
        %3497 = vmatmul.f32.gmra.mxu0 %v3458
        %v3498 = vpop.f32.mrf.mxu0
        %v3499 = vadd.f32 0.0, %v3498
        %3500 = vmatmul.f32.gmra.mxu0 %v3461
        %v3501 = vpop.f32.mrf.mxu0
        %v3502 = vadd.f32 0.0, %v3501
        %3503 = vmatmul.f32.gmra.mxu0 %v3464
        %v3504 = vpop.f32.mrf.mxu0
        %v3505 = vadd.f32 0.0, %v3504
        %3506 = vmatmul.f32.gmra.mxu0 %v3467
        %v3507 = vpop.f32.mrf.mxu0
        %v3508 = vadd.f32 0.0, %v3507
        %3509 = vmatmul.f32.gmra.mxu0 %v3470
        %v3510 = vpop.f32.mrf.mxu0
        %v3511 = vadd.f32 0.0, %v3510
        %3512 = vdwg.mxu0
        %v3513 = vld [vmem:[%s19] sm:$0xff]
        %v3514 = vld [vmem:[%s19 + $0x8] sm:$0xff]
        %v3515 = vld [vmem:[%s19 + $0x10] sm:$0xff]
        %v3516 = vld [vmem:[%s19 + $0x18] sm:$0xff]
        %v3517 = vld [vmem:[%s19 + $0x20] sm:$0xff]
        %v3518 = vld [vmem:[%s19 + $0x28] sm:$0xff]
        %v3519 = vld [vmem:[%s19 + $0x30] sm:$0xff]
        %v3520 = vld [vmem:[%s19 + $0x38] sm:$0xff]
        %v3521 = vld [vmem:[%s20] sm:$0xff]
        %v3522 = vld [vmem:[%s20 + $0x8] sm:$0xff]
        %v3523 = vld [vmem:[%s20 + $0x10] sm:$0xff]
        %v3524 = vld [vmem:[%s20 + $0x18] sm:$0xff]
        %v3525 = vld [vmem:[%s20 + $0x20] sm:$0xff]
        %v3526 = vld [vmem:[%s20 + $0x28] sm:$0xff]
        %v3527 = vld [vmem:[%s20 + $0x30] sm:$0xff]
        %v3528 = vld [vmem:[%s20 + $0x38] sm:$0xff]
        %3530 = vset.pattern.permute.xlu0 0
        %3531 = vperm.xlu0 %3530, %v3521
        %v3532 = vpop.permute.xlu0 %3531
        %3535 = vset.pattern.permute.xlu0 0
        %3536 = vperm.xlu0 %3535, %v3522
        %v3537 = vpop.permute.xlu0 %3536
        %3540 = vset.pattern.permute.xlu0 0
        %3541 = vperm.xlu0 %3540, %v3523
        %v3542 = vpop.permute.xlu0 %3541
        %3545 = vset.pattern.permute.xlu0 0
        %3546 = vperm.xlu0 %3545, %v3524
        %v3547 = vpop.permute.xlu0 %3546
        %3550 = vset.pattern.permute.xlu0 0
        %3551 = vperm.xlu0 %3550, %v3525
        %v3552 = vpop.permute.xlu0 %3551
        %3555 = vset.pattern.permute.xlu0 0
        %3556 = vperm.xlu0 %3555, %v3526
        %v3557 = vpop.permute.xlu0 %3556
        %3560 = vset.pattern.permute.xlu0 0
        %3561 = vperm.xlu0 %3560, %v3527
        %v3562 = vpop.permute.xlu0 %3561
        %3565 = vset.pattern.permute.xlu0 0
        %3566 = vperm.xlu0 %3565, %v3528
        %v3567 = vpop.permute.xlu0 %3566
        %v3570 = vsel %vm673, %v3513, 0
        %v3573 = vsel %vm673, %v3514, 0
        %v3576 = vsel %vm673, %v3515, 0
        %v3579 = vsel %vm673, %v3516, 0
        %v3582 = vsel %vm673, %v3517, 0
        %v3585 = vsel %vm673, %v3518, 0
        %v3588 = vsel %vm673, %v3519, 0
        %v3591 = vsel %vm673, %v3520, 0
        %3593 = vmatpush.msra.mxu0 0.0
        %3594 = vmatpush.msra.mxu0 0.0
        %3595 = vmatpush.msra.mxu0 0.0
        %3596 = vmatpush.msra.mxu0 0.0
        %3597 = vmatpush.msra.mxu0 0.0
        %3598 = vmatpush.msra.mxu0 0.0
        %3599 = vmatpush.msra.mxu0 0.0
        %3600 = vmatpush.msra.mxu0 0.0
        %3601 = vmatpush.msra.mxu0 %v3511
        %3602 = vmatpush.msra.mxu0 %v3508
        %3603 = vmatpush.msra.mxu0 %v3505
        %3604 = vmatpush.msra.mxu0 %v3502
        %3605 = vmatpush.msra.mxu0 %v3499
        %3606 = vmatpush.msra.mxu0 %v3496
        %3607 = vmatpush.msra.mxu0 %v3493
        %3608 = vmatpush.msra.mxu0 %v3490
        %3609 = vmatmul.f32.gmra.mxu0 %v3570
        %v3610 = vpop.f32.mrf.mxu0
        %v3611 = vadd.f32 %v3532, %v3610
        %3612 = vmatmul.f32.gmra.mxu0 %v3573
        %v3613 = vpop.f32.mrf.mxu0
        %v3614 = vadd.f32 %v3537, %v3613
        %3615 = vmatmul.f32.gmra.mxu0 %v3576
        %v3616 = vpop.f32.mrf.mxu0
        %v3617 = vadd.f32 %v3542, %v3616
        %3618 = vmatmul.f32.gmra.mxu0 %v3579
        %v3619 = vpop.f32.mrf.mxu0
        %v3620 = vadd.f32 %v3547, %v3619
        %3621 = vmatmul.f32.gmra.mxu0 %v3582
        %v3622 = vpop.f32.mrf.mxu0
        %v3623 = vadd.f32 %v3552, %v3622
        %3624 = vmatmul.f32.gmra.mxu0 %v3585
        %v3625 = vpop.f32.mrf.mxu0
        %v3626 = vadd.f32 %v3557, %v3625
        %3627 = vmatmul.f32.gmra.mxu0 %v3588
        %v3628 = vpop.f32.mrf.mxu0
        %v3629 = vadd.f32 %v3562, %v3628
        %3630 = vmatmul.f32.gmra.mxu0 %v3591
        %v3631 = vpop.f32.mrf.mxu0
        %v3632 = vadd.f32 %v3567, %v3631
        %3633 = vdwg.mxu0
        %v3634 = vadd.f32 %v3611, %v2974
        %v3635 = vadd.f32 %v3614, %v2975
        %v3636 = vadd.f32 %v3617, %v2976
        %v3637 = vadd.f32 %v3620, %v2977
        %v3638 = vadd.f32 %v3623, %v2978
        %v3639 = vadd.f32 %v3626, %v2979
        %v3640 = vadd.f32 %v3629, %v2980
        %v3641 = vadd.f32 %v3632, %v2981
        %3642 = vst.msk [vmem:[%s660] sm:$0xff] %vm673, %v3634
        %3643 = vst.msk [vmem:[%s660 + $0x8] sm:$0xff] %vm673, %v3635
        %3644 = vst.msk [vmem:[%s660 + $0x10] sm:$0xff] %vm673, %v3636
        %3645 = vst.msk [vmem:[%s660 + $0x18] sm:$0xff] %vm673, %v3637
        %3646 = vst.msk [vmem:[%s660 + $0x20] sm:$0xff] %vm673, %v3638
        %3647 = vst.msk [vmem:[%s660 + $0x28] sm:$0xff] %vm673, %v3639
        %3648 = vst.msk [vmem:[%s660 + $0x30] sm:$0xff] %vm673, %v3640
        %3649 = vst.msk [vmem:[%s660 + $0x38] sm:$0xff] %vm673, %v3641
        %s3650 = sand.u32 %s494, 1
        %s3651 = scalar_lea.sflag [#allocation3], %s3650
        %s3652 = sand.u32 %s494, 1
        %s3653 = smul.addr %s3652, 64
        %s3654 = scalar_lea.vmem [#allocation2], %s3653
        // Predicated region
        $region105: #{tpu_custom_call.1} parent=103 // pred_check
          %p3655 = pneg %p504
        $region106: #{tpu_custom_call.1} parent=103 // pred_check_branch
          %3657 = sbr.rel (%p3655) target = $region108
        $region107: #{tpu_custom_call.1} parent=103 // pred_region
          %3659 = vsyncadd %s3651, 0
          %s3660 = smul.addr %s35, 8
          %s3661 = smul.addr %s3660, 8
          %s3662 = scalar_lea.hbm %s21, %s3661
          %s3663 = sshll.u32 %s3654, 4
          %s3664 = int_to_ptr.vmem [resolvable:$true] %s3663
          %s3665 = sshll.u32 %s3662, 4
          %s3666 = int_to_ptr.hbm [resolvable:$true] %s3665
          %3671 = dma.vmem_to_hbm [thread:$0]  %s3664, 1024, %s3666, %s3651, 128, 128, 8
        $region108: #{tpu_custom_call.1} parent=103 // pred_fallthru
          _
      $region104: #{tpu_custom_call.1} parent=5 // pred_fallthru
        _
      %p3672 = scmp.le.s32.totalorder 2, %s30
      // Predicated region
      $region109: #{tpu_custom_call.1} parent=5 // pred_check
        %p3673 = pneg %p3672
      $region110: #{tpu_custom_call.1} parent=5 // pred_check_branch
        %3675 = sbr.rel (%p3673) target = $region112
      $region111: #{tpu_custom_call.1} parent=5 // pred_region
        %s3676 = ssub.s32 %s30, 2
        // Predicated region
        $region113: #{tpu_custom_call.1} parent=111 // pred_check
          %p3677 = pneg %p510
        $region114: #{tpu_custom_call.1} parent=111 // pred_check_branch
          %3679 = sbr.rel (%p3677) target = $region116
        $region115: #{tpu_custom_call.1} parent=111 // pred_region
          %s3680 = sand.u32 %s495, 1
          %s3681 = scalar_lea.sflag [#allocation3], %s3680
          %s3682 = sand.u32 %s495, 1
          %s3683 = smul.addr %s3682, 64
          %s3684 = scalar_lea.vmem [#allocation2], %s3683
          %3686 = dma.done %s3681, 1024
        $region116: #{tpu_custom_call.1} parent=111 // pred_fallthru
          _
      $region112: #{tpu_custom_call.1} parent=5 // pred_fallthru
        _
    $region6: #{tpu_custom_call.1} parent=1 // loop_footer
      %s34 = sadd.s32 1, %s30
    $region7: #{tpu_custom_call.1} parent=1 // loop_footer_branch
      %29 = sbr.rel target = $region3
    $region8: #{tpu_custom_call.1} parent=1 // loop_exit
      _
    %3687 = vsyncpa [#allocation3], 1
    %s3688 = scalar_lea.sflag [#allocation3], 1
    %3689 = vsyncpa %s3688, 1

</llo_original>
